<compile_context>
chip_gen: v7x
topology: tpu7x:2x2x1
jax: 0.10.0
libtpu: 0.0.40
codegen_flags: <defaults>
</compile_context>

<pallas_src>
import functools
import math

import jax
import jax.numpy as jnp
from jax.experimental import pallas as pl
from jax.experimental.pallas import tpu as pltpu

INF = 1e10
LN_EPS = 1e-6


# ----------------------------------------------------------- fused kernel ---

def _decoder_stack_kernel(
    x_ref, enc_ref,
    wqkv_s_ref, wo_s_ref, g1_ref, b1_ref,
    wq_c_ref, wkv_c_ref, wo_c_ref, g2_ref, b2_ref,
    w1_ref, fb1_ref, w2_ref, fb2_ref, g3_ref, b3_ref,
    o_ref,
    x_carry,
    *, n_heads, masked_bias):
  """One (batch, layer) grid step of the fused decoder stack.

  grid = (B, L); the residual stream x lives in `x_carry` (VMEM) across the
  layer axis, so the whole stack runs inside a single pallas_call.
  """
  l = pl.program_id(1)
  n_layers = pl.num_programs(1)

  @pl.when(l == 0)
  def _():
    x_carry[...] = x_ref[0]

  x = x_carry[...]                       # (T, D) f32 residual stream
  enc = enc_ref[0, 0]                    # (S, D) f32 encoder memory, layer l
  T, D = x.shape
  H = n_heads

  # ---- helpers -------------------------------------------------------------
  def heads_proj(src_f32, w_bf16):
    # src: (N, D) f32, w: (G, D, dh) bf16  ->  (G, N, dh) f32 accumulation.
    # Head axis is the LEADING batch dim of a batched MXU matmul, so there is
    # no lane slicing or relayout anywhere.
    g = w_bf16.shape[0]
    src_b = jnp.broadcast_to(src_f32.astype(jnp.bfloat16)[None],
                             (g,) + src_f32.shape)
    return jnp.einsum('gnd,gde->gne', src_b, w_bf16,
                      preferred_element_type=jnp.float32)

  def attend(q, k, v, mask):
    # q: (H, T, dh), k/v: (H, Lk, dh); softmax in f32.
    s = jnp.einsum('hte,hle->htl',
                   q.astype(jnp.bfloat16), k.astype(jnp.bfloat16),
                   preferred_element_type=jnp.float32)            # (H, T, Lk)
    if mask is not None:
      # reference subtracts the +INF mask BEFORE scaling; scale is folded
      # into wq and into `masked_bias`, so just subtract here.
      s = s - mask[None]
    s = s - jnp.max(s, axis=-1, keepdims=True)
    e = jnp.exp(s)
    p = e * pl.reciprocal(jnp.sum(e, axis=-1, keepdims=True), approx=False)
    return jnp.einsum('htl,hle->hte',
                      p.astype(jnp.bfloat16), v.astype(jnp.bfloat16),
                      preferred_element_type=jnp.float32)          # (H, T, dh)

  def out_proj(o_heads, wo_bf16):
    # concat(heads) @ Wo  ==  sum_h  o_h @ Wo[h*dh:(h+1)*dh, :]
    ob = jnp.einsum('hte,hed->htd',
                    o_heads.astype(jnp.bfloat16), wo_bf16,
                    preferred_element_type=jnp.float32)            # (H, T, D)
    return jnp.sum(ob, axis=0)                                     # (T, D)

  def layer_norm(z, g, b):
    # torch-style hand-rolled LN: (x - mean) / (std_unbiased + eps) * g + b
    mean = jnp.mean(z, axis=-1, keepdims=True)
    d = z - mean
    var = jnp.sum(d * d, axis=-1, keepdims=True) * (1.0 / float(D - 1))
    inv = pl.reciprocal(jnp.sqrt(var) + LN_EPS, approx=False)
    return g * d * inv + b

  # Causal mask built in-kernel (couple of free VPU ops), pre-divided by the
  # attention scale (scale folded into wq / mask constant).
  row = jax.lax.broadcasted_iota(jnp.int32, (T, T), 0)
  col = jax.lax.broadcasted_iota(jnp.int32, (T, T), 1)
  causal = jnp.where(col > row, jnp.float32(masked_bias), jnp.float32(0.0))

  # ---- causal self-attention + residual LayerNorm ---------------------------
  qkv = heads_proj(x, wqkv_s_ref[0])                    # (3H, T, dh)
  sa = out_proj(attend(qkv[:H], qkv[H:2 * H], qkv[2 * H:], causal),
                wo_s_ref[0])
  x = layer_norm(x + sa, g1_ref[0], b1_ref[0])

  # ---- cross-attention over encoder memory + residual LayerNorm -------------
  qc = heads_proj(x, wq_c_ref[0])                       # (H, T, dh)
  kv = heads_proj(enc, wkv_c_ref[0])                    # (2H, S, dh)
  ca = out_proj(attend(qc, kv[:H], kv[H:], None), wo_c_ref[0])
  x = layer_norm(x + ca, g2_ref[0], b2_ref[0])

  # ---- feedforward + residual LayerNorm --------------------------------------
  h = jnp.dot(x.astype(jnp.bfloat16), w1_ref[0],
              preferred_element_type=jnp.float32) + fb1_ref[0]
  h = jnp.maximum(h, 0.0)
  ff = jnp.dot(h.astype(jnp.bfloat16), w2_ref[0],
               preferred_element_type=jnp.float32) + fb2_ref[0]
  x = layer_norm(x + ff, g3_ref[0], b3_ref[0])

  x_carry[...] = x

  @pl.when(l == n_layers - 1)
  def _():
    o_ref[0] = x


def _wspec(arr):
  """Full-array block along all but the leading (layer) axis."""
  n_minor = arr.ndim - 1
  return pl.BlockSpec((1,) + arr.shape[1:],
                      lambda b, l, _n=n_minor: (l,) + (0,) * _n)


def decoder_stack(params, x, enc, *, d_model, n_heads):
  """x: (B, T, D) f32, enc: (L, B, S, D) f32 -> (B, T, D) f32. ONE pallas_call."""
  B, T, D = x.shape
  L = enc.shape[0]
  S = enc.shape[2]
  d_hidden = params["w1"].shape[2]

  weight_names = ("wqkv_s", "wo_s", "ln1_g", "ln1_b",
                  "wq_c", "wkv_c", "wo_c", "ln2_g", "ln2_b",
                  "w1", "b1", "w2", "b2", "ln3_g", "ln3_b")
  weights = [params[n] for n in weight_names]

  # Advisory cost estimate so XLA schedules around the custom call sensibly.
  flops_layer = (2 * T * D * 3 * D + 4 * T * T * D + 2 * T * D * D   # self-attn
                 + 2 * T * D * D + 2 * S * D * 2 * D + 4 * T * S * D
                 + 2 * T * D * D                                      # cross-attn
                 + 4 * T * D * d_hidden)                              # feedforward
  bytes_accessed = (x.size * 4 + enc.size * 4 + B * T * D * 4
                    + B * sum(w.size * w.dtype.itemsize for w in weights))
  cost = pl.CostEstimate(flops=int(B * L * flops_layer),
                         transcendentals=int(B * L * n_heads * T * (T + S)),
                         bytes_accessed=int(bytes_accessed))

  kern = functools.partial(
      _decoder_stack_kernel,
      n_heads=n_heads,
      masked_bias=INF / math.sqrt(d_model),  # (scores - INF*triu)/sqrt(d_model)
  )
  return pl.pallas_call(
      kern,
      grid=(B, L),
      in_specs=[pl.BlockSpec((1, T, D), lambda b, l: (b, 0, 0)),        # x
                pl.BlockSpec((1, 1, S, D), lambda b, l: (l, b, 0, 0))]  # enc
               + [_wspec(w) for w in weights],
      out_specs=pl.BlockSpec((1, T, D), lambda b, l: (b, 0, 0)),
      out_shape=jax.ShapeDtypeStruct((B, T, D), jnp.float32),
      scratch_shapes=[pltpu.VMEM((T, D), jnp.float32)],   # residual-stream carry
      compiler_params=pltpu.CompilerParams(
          dimension_semantics=("parallel", "arbitrary"),
          vmem_limit_bytes=32 * 1024 * 1024),
      cost_estimate=cost,
  )(x, enc, *weights)


# ------------------------------------------------------------------- glue ---

def positional_encodings(T, D):
  pos = jnp.arange(T, dtype=jnp.float32)[:, None]             # (T, 1)
  ch = jnp.arange(D)
  even = (ch % 2) == 0
  exponent = jnp.where(even, ch, ch - 1).astype(jnp.float32) / float(D)
  arg = pos / (10000.0 ** exponent)[None, :]
  return jnp.where(even[None, :], jnp.sin(arg), jnp.cos(arg))


@functools.partial(jax.jit, static_argnames=("d_model", "n_heads"))
def decoder_forward(params, tokens, encodings, *, d_model, n_heads):
  embed_w = params["out_w"] * math.sqrt(d_model)        # tied output weight
  x = jnp.take(embed_w, tokens, axis=0)                 # F.embedding -> (B,T,D)
  T = x.shape[1]
  x = x + params["pos_enc"][:T][None]
  # dropout: identity (eval)
  enc = jnp.stack(encodings, axis=0)                    # (L, B, S, D)
  return decoder_stack(params, x, enc, d_model=d_model, n_heads=n_heads)


# ------------------------------------------------------------------- init ---

def init_params(key, d_model, d_hidden, vocab_size, n_layers):
  """Params in PyTorch layout (out_features, in_features)."""
  def nrm(k, shape, scale=0.05):
    return scale * jax.random.normal(k, shape, dtype=jnp.float32)

  keys = jax.random.split(key, n_layers + 1)
  layers = []
  for li in range(n_layers):
    ks = jax.random.split(keys[li], 12)
    layers.append(dict(
        selfattn=dict(wq=nrm(ks[0], (d_model, d_model)),
                      wk=nrm(ks[1], (d_model, d_model)),
                      wv=nrm(ks[2], (d_model, d_model)),
                      wo=nrm(ks[3], (d_model, d_model))),
        ln1_g=jnp.ones((d_model,), jnp.float32), ln1_b=jnp.zeros((d_model,), jnp.float32),
        attn=dict(wq=nrm(ks[4], (d_model, d_model)),
                  wk=nrm(ks[5], (d_model, d_model)),
                  wv=nrm(ks[6], (d_model, d_model)),
                  wo=nrm(ks[7], (d_model, d_model))),
        ln2_g=jnp.ones((d_model,), jnp.float32), ln2_b=jnp.zeros((d_model,), jnp.float32),
        w1=nrm(ks[8], (d_hidden, d_model)), b1=nrm(ks[9], (d_hidden,)),
        w2=nrm(ks[10], (d_model, d_hidden)), b2=nrm(ks[11], (d_model,)),
        ln3_g=jnp.ones((d_model,), jnp.float32), ln3_b=jnp.zeros((d_model,), jnp.float32),
    ))
  out_w = nrm(keys[-1], (vocab_size, d_model))
  return dict(layers=layers, out_w=out_w)


def _split_in_heads(w_t, n_heads):
  # w_t: (Din, Dout) = already (in, out). torch's chunk(n_heads, -1) on the
  # activation == contiguous Dout column blocks per head -> (H, Din, dh).
  din, dout = w_t.shape
  dh = dout // n_heads
  return jnp.transpose(w_t.reshape(din, n_heads, dh), (1, 0, 2))


def _split_out_heads(wo_t, n_heads):
  # wo_t: (Din = concat-head dim, Dout) -> per-head row blocks (H, dh, Dout).
  din, dout = wo_t.shape
  dh = din // n_heads
  return wo_t.reshape(n_heads, dh, dout)


def prepare_params(raw, d_model, n_heads, max_len):
  """One-time conversion to the fused-stack layout: per-head (H, Din, dh)
  projection weights (Q pre-scaled by 1/sqrt(d_model)), Q/K/V stacked on the
  head axis, bf16 matmul operands, everything stacked over layers with a
  leading L axis that the layer grid axis indexes."""
  inv_scale = 1.0 / math.sqrt(d_model)
  acc = {k: [] for k in ("wqkv_s", "wo_s", "ln1_g", "ln1_b",
                         "wq_c", "wkv_c", "wo_c", "ln2_g", "ln2_b",
                         "w1", "b1", "w2", "b2", "ln3_g", "ln3_b")}
  for lp in raw["layers"]:
    sa, ca = lp["selfattn"], lp["attn"]
    acc["wqkv_s"].append(jnp.concatenate(
        [_split_in_heads(sa["wq"].T, n_heads) * inv_scale,
         _split_in_heads(sa["wk"].T, n_heads),
         _split_in_heads(sa["wv"].T, n_heads)], axis=0).astype(jnp.bfloat16))
    acc["wo_s"].append(_split_out_heads(sa["wo"].T, n_heads).astype(jnp.bfloat16))
    acc["ln1_g"].append(lp["ln1_g"][None, :]); acc["ln1_b"].append(lp["ln1_b"][None, :])
    acc["wq_c"].append((_split_in_heads(ca["wq"].T, n_heads) * inv_scale
                        ).astype(jnp.bfloat16))
    acc["wkv_c"].append(jnp.concatenate(
        [_split_in_heads(ca["wk"].T, n_heads),
         _split_in_heads(ca["wv"].T, n_heads)], axis=0).astype(jnp.bfloat16))
    acc["wo_c"].append(_split_out_heads(ca["wo"].T, n_heads).astype(jnp.bfloat16))
    acc["ln2_g"].append(lp["ln2_g"][None, :]); acc["ln2_b"].append(lp["ln2_b"][None, :])
    acc["w1"].append(lp["w1"].T.astype(jnp.bfloat16)); acc["b1"].append(lp["b1"][None, :])
    acc["w2"].append(lp["w2"].T.astype(jnp.bfloat16)); acc["b2"].append(lp["b2"][None, :])
    acc["ln3_g"].append(lp["ln3_g"][None, :]); acc["ln3_b"].append(lp["ln3_b"][None, :])

  stacked = {k: jnp.stack(v, axis=0) for k, v in acc.items()}
  stacked["out_w"] = raw["out_w"]
  stacked["pos_enc"] = positional_encodings(max_len, d_model)
  return stacked


# ------------------------------------------------------------------- main ---

if __name__ == "__main__":
  B, T, S = 2, 8, 12
  d_model, d_hidden, n_heads, n_layers, vocab_size = 32, 64, 4, 2, 16

  key = jax.random.PRNGKey(0)
  kp, kt, ke = jax.random.split(key, 3)
  raw_params = init_params(kp, d_model, d_hidden, vocab_size, n_layers)
  params = prepare_params(raw_params, d_model, n_heads, max_len=T)
  tokens = jax.random.randint(kt, (B, T), 0, vocab_size, dtype=jnp.int32)
  enc_keys = jax.random.split(ke, n_layers)
  encodings = [0.1 * jax.random.normal(enc_keys[i], (B, S, d_model), dtype=jnp.float32)
               for i in range(n_layers)]

  out = decoder_forward(params, tokens, encodings, d_model=d_model, n_heads=n_heads)
  out = jax.block_until_ready(out)
  assert out.shape == (B, T, d_model)
  assert bool(jnp.all(jnp.isfinite(out)))
  print("KERNEL_OK")
</pallas_src>

<mosaic_0001>
module attributes {stable_mosaic.version = 11 : i64} {
  func.func @_decoder_stack_kernel(%arg0: i32, %arg1: i32, %arg2: memref<1x8x32xf32, #tpu.memory_space<vmem>>, %arg3: memref<1x1x12x32xf32, #tpu.memory_space<vmem>>, %arg4: memref<1x12x32x8xbf16, #tpu.memory_space<vmem>>, %arg5: memref<1x4x8x32xbf16, #tpu.memory_space<vmem>>, %arg6: memref<1x1x32xf32, #tpu.memory_space<vmem>>, %arg7: memref<1x1x32xf32, #tpu.memory_space<vmem>>, %arg8: memref<1x4x32x8xbf16, #tpu.memory_space<vmem>>, %arg9: memref<1x8x32x8xbf16, #tpu.memory_space<vmem>>, %arg10: memref<1x4x8x32xbf16, #tpu.memory_space<vmem>>, %arg11: memref<1x1x32xf32, #tpu.memory_space<vmem>>, %arg12: memref<1x1x32xf32, #tpu.memory_space<vmem>>, %arg13: memref<1x32x64xbf16, #tpu.memory_space<vmem>>, %arg14: memref<1x1x64xf32, #tpu.memory_space<vmem>>, %arg15: memref<1x64x32xbf16, #tpu.memory_space<vmem>>, %arg16: memref<1x1x32xf32, #tpu.memory_space<vmem>>, %arg17: memref<1x1x32xf32, #tpu.memory_space<vmem>>, %arg18: memref<1x1x32xf32, #tpu.memory_space<vmem>>, %arg19: memref<1x8x32xf32, #tpu.memory_space<vmem>>, %arg20: memref<8x32xf32, #tpu.memory_space<vmem>>) attributes {dimension_semantics = [#tpu.dimension_semantics<parallel>, #tpu.dimension_semantics<arbitrary>], iteration_bounds = array<i64: 2, 2>, scalar_prefetch = 0 : i64, scratch_operands = 1 : i64, tpu.core_type = #tpu.core_type<tc>, window_params = [{transform_indices = @transform_0, window_bounds = array<i64: 1, 8, 32>}, {transform_indices = @transform_1, window_bounds = array<i64: 1, 1, 12, 32>}, {transform_indices = @transform_2, window_bounds = array<i64: 1, 12, 32, 8>}, {transform_indices = @transform_3, window_bounds = array<i64: 1, 4, 8, 32>}, {transform_indices = @transform_4, window_bounds = array<i64: 1, 1, 32>}, {transform_indices = @transform_5, window_bounds = array<i64: 1, 1, 32>}, {transform_indices = @transform_6, window_bounds = array<i64: 1, 4, 32, 8>}, {transform_indices = @transform_7, window_bounds = array<i64: 1, 8, 32, 8>}, {transform_indices = @transform_8, window_bounds = array<i64: 1, 4, 8, 32>}, {transform_indices = @transform_9, window_bounds = array<i64: 1, 1, 32>}, {transform_indices = @transform_10, window_bounds = array<i64: 1, 1, 32>}, {transform_indices = @transform_11, window_bounds = array<i64: 1, 32, 64>}, {transform_indices = @transform_12, window_bounds = array<i64: 1, 1, 64>}, {transform_indices = @transform_13, window_bounds = array<i64: 1, 64, 32>}, {transform_indices = @transform_14, window_bounds = array<i64: 1, 1, 32>}, {transform_indices = @transform_15, window_bounds = array<i64: 1, 1, 32>}, {transform_indices = @transform_16, window_bounds = array<i64: 1, 1, 32>}, {transform_indices = @transform_17, window_bounds = array<i64: 1, 8, 32>}]} {
    %c0_i32 = arith.constant 0 : i32
    %0 = arith.cmpi eq, %arg1, %c0_i32 : i32
    %1 = arith.extui %0 : i1 to i32
    %c0_i32_0 = arith.constant 0 : i32
    %2 = arith.cmpi ne, %1, %c0_i32_0 : i32
    scf.if %2 {
      %c0_93 = arith.constant 0 : index
      %c0_94 = arith.constant 0 : index
      %c0_95 = arith.constant 0 : index
      %183 = vector.load %arg2[%c0_93, %c0_94, %c0_95] : memref<1x8x32xf32, #tpu.memory_space<vmem>>, vector<1x8x32xf32>
      %184 = vector.shape_cast %183 : vector<1x8x32xf32> to vector<8x32xf32>
      %c0_96 = arith.constant 0 : index
      %c0_97 = arith.constant 0 : index
      %185 = vector.load %arg20[%c0_96, %c0_97] : memref<8x32xf32, #tpu.memory_space<vmem>>, vector<8x32xf32>
      tpu.vector_store %arg20[%c0_96, %c0_97], %184 {strides = array<i32>} : memref<8x32xf32, #tpu.memory_space<vmem>>, vector<8x32xf32>,
    } else {
    }
    %c0 = arith.constant 0 : index
    %c0_1 = arith.constant 0 : index
    %3 = vector.load %arg20[%c0, %c0_1] : memref<8x32xf32, #tpu.memory_space<vmem>>, vector<8x32xf32>
    %c0_2 = arith.constant 0 : index
    %c0_3 = arith.constant 0 : index
    %c0_4 = arith.constant 0 : index
    %c0_5 = arith.constant 0 : index
    %4 = vector.load %arg3[%c0_2, %c0_3, %c0_4, %c0_5] : memref<1x1x12x32xf32, #tpu.memory_space<vmem>>, vector<1x1x12x32xf32>
    %5 = vector.shape_cast %4 : vector<1x1x12x32xf32> to vector<12x32xf32>
    %6 = tpu.iota {dimensions = array<i32: 0>} : vector<8x8xi32>
    %7 = tpu.iota {dimensions = array<i32: 1>} : vector<8x8xi32>
    %8 = arith.cmpi sgt, %7, %6 : vector<8x8xi32>
    %cst = arith.constant 1.76776691E+9 : f32
    %cst_6 = arith.constant 0.000000e+00 : f32
    %9 = vector.broadcast %cst : f32 to vector<8x8xf32>
    %10 = vector.broadcast %cst_6 : f32 to vector<8x8xf32>
    %11 = arith.select %8, %9, %10 : vector<8x8xi1>, vector<8x8xf32>
    %c0_7 = arith.constant 0 : index
    %c0_8 = arith.constant 0 : index
    %c0_9 = arith.constant 0 : index
    %c0_10 = arith.constant 0 : index
    %12 = vector.load %arg4[%c0_7, %c0_8, %c0_9, %c0_10] : memref<1x12x32x8xbf16, #tpu.memory_space<vmem>>, vector<1x12x32x8xbf16>
    %13 = vector.shape_cast %12 : vector<1x12x32x8xbf16> to vector<12x32x8xbf16>
    %14 = arith.truncf %3 : vector<8x32xf32> to vector<8x32xbf16>
    %15 = vector.shape_cast %14 : vector<8x32xbf16> to vector<1x8x32xbf16>
    %16 = vector.shape_cast %15 : vector<1x8x32xbf16> to vector<1x8x32xbf16>
    %17 = vector.broadcast %16 : vector<1x8x32xbf16> to vector<12x8x32xbf16>
    "tpu.trace_start"() <{level = 10 : i32, message = "gnd,gde->gne"}> : () -> ()
    %cst_11 = arith.constant dense<0.000000e+00> : vector<12x8x8xf32>
    %18 = tpu.matmul %17, %13, %cst_11 {dimension_numbers = #tpu.dot_dimension_numbers<[2], [1], [1], [2], [0, 0, 0, 1, 1, 2], [0], [0]>} : vector<12x8x32xbf16>, vector<12x32x8xbf16>, vector<12x8x8xf32> -> vector<12x8x8xf32>
    "tpu.trace_stop"() : () -> ()
    %19 = vector.extract_strided_slice %18 {offsets = [0, 0, 0], sizes = [4, 8, 8], strides = [1, 1, 1]} : vector<12x8x8xf32> to vector<4x8x8xf32>
    %20 = vector.extract_strided_slice %18 {offsets = [4, 0, 0], sizes = [4, 8, 8], strides = [1, 1, 1]} : vector<12x8x8xf32> to vector<4x8x8xf32>
    %21 = vector.extract_strided_slice %18 {offsets = [8, 0, 0], sizes = [4, 8, 8], strides = [1, 1, 1]} : vector<12x8x8xf32> to vector<4x8x8xf32>
    %22 = arith.truncf %19 : vector<4x8x8xf32> to vector<4x8x8xbf16>
    %23 = arith.truncf %20 : vector<4x8x8xf32> to vector<4x8x8xbf16>
    "tpu.trace_start"() <{level = 10 : i32, message = "hte,hle->htl"}> : () -> ()
    %cst_12 = arith.constant dense<0.000000e+00> : vector<4x8x8xf32>
    %24 = tpu.matmul %22, %23, %cst_12 {dimension_numbers = #tpu.dot_dimension_numbers<[2], [2], [1], [1], [0, 0, 0, 1, 1, 1], [0], [0]>} : vector<4x8x8xbf16>, vector<4x8x8xbf16>, vector<4x8x8xf32> -> vector<4x8x8xf32>
    "tpu.trace_stop"() : () -> ()
    %25 = vector.shape_cast %11 : vector<8x8xf32> to vector<1x8x8xf32>
    %26 = vector.broadcast %25 : vector<1x8x8xf32> to vector<4x8x8xf32>
    %27 = arith.subf %24, %26 : vector<4x8x8xf32>
    %cst_13 = arith.constant dense<0xFF800000> : vector<4x8xf32>
    %28 = vector.multi_reduction <maximumf>, %27, %cst_13 [2] : vector<4x8x8xf32> to vector<4x8xf32>
    %29 = vector.shape_cast %28 : vector<4x8xf32> to vector<4x8x1xf32>
    %30 = vector.broadcast %29 : vector<4x8x1xf32> to vector<4x8x8xf32>
    %31 = arith.subf %27, %30 : vector<4x8x8xf32>
    %32 = math.exp %31 : vector<4x8x8xf32>
    %cst_14 = arith.constant dense<0.000000e+00> : vector<4x8xf32>
    %33 = vector.multi_reduction <add>, %32, %cst_14 [2] : vector<4x8x8xf32> to vector<4x8xf32>
    %34 = vector.shape_cast %33 : vector<4x8xf32> to vector<4x8x1xf32>
    %35 = tpu.reciprocal %34 : vector<4x8x1xf32> -> vector<4x8x1xf32>
    %36 = vector.broadcast %35 : vector<4x8x1xf32> to vector<4x8x8xf32>
    %37 = arith.mulf %32, %36 : vector<4x8x8xf32>
    %38 = arith.truncf %37 : vector<4x8x8xf32> to vector<4x8x8xbf16>
    %39 = arith.truncf %21 : vector<4x8x8xf32> to vector<4x8x8xbf16>
    "tpu.trace_start"() <{level = 10 : i32, message = "htl,hle->hte"}> : () -> ()
    %cst_15 = arith.constant dense<0.000000e+00> : vector<4x8x8xf32>
    %40 = tpu.matmul %38, %39, %cst_15 {dimension_numbers = #tpu.dot_dimension_numbers<[2], [1], [1], [2], [0, 0, 0, 1, 1, 2], [0], [0]>} : vector<4x8x8xbf16>, vector<4x8x8xbf16>, vector<4x8x8xf32> -> vector<4x8x8xf32>
    "tpu.trace_stop"() : () -> ()
    %c0_16 = arith.constant 0 : index
    %c0_17 = arith.constant 0 : index
    %c0_18 = arith.constant 0 : index
    %c0_19 = arith.constant 0 : index
    %41 = vector.load %arg5[%c0_16, %c0_17, %c0_18, %c0_19] : memref<1x4x8x32xbf16, #tpu.memory_space<vmem>>, vector<1x4x8x32xbf16>
    %42 = vector.shape_cast %41 : vector<1x4x8x32xbf16> to vector<4x8x32xbf16>
    %43 = arith.truncf %40 : vector<4x8x8xf32> to vector<4x8x8xbf16>
    "tpu.trace_start"() <{level = 10 : i32, message = "hte,hed->htd"}> : () -> ()
    %cst_20 = arith.constant dense<0.000000e+00> : vector<4x8x32xf32>
    %44 = tpu.matmul %43, %42, %cst_20 {dimension_numbers = #tpu.dot_dimension_numbers<[2], [1], [1], [2], [0, 0, 0, 1, 1, 2], [0], [0]>} : vector<4x8x8xbf16>, vector<4x8x32xbf16>, vector<4x8x32xf32> -> vector<4x8x32xf32>
    "tpu.trace_stop"() : () -> ()
    %cst_21 = arith.constant dense<0.000000e+00> : vector<8x32xf32>
    %45 = vector.multi_reduction <add>, %44, %cst_21 [0] : vector<4x8x32xf32> to vector<8x32xf32>
    %46 = arith.addf %3, %45 : vector<8x32xf32>
    %c0_22 = arith.constant 0 : index
    %c0_23 = arith.constant 0 : index
    %c0_24 = arith.constant 0 : index
    %47 = vector.load %arg6[%c0_22, %c0_23, %c0_24] : memref<1x1x32xf32, #tpu.memory_space<vmem>>, vector<1x1x32xf32>
    %48 = vector.shape_cast %47 : vector<1x1x32xf32> to vector<1x32xf32>
    %c0_25 = arith.constant 0 : index
    %c0_26 = arith.constant 0 : index
    %c0_27 = arith.constant 0 : index
    %49 = vector.load %arg7[%c0_25, %c0_26, %c0_27] : memref<1x1x32xf32, #tpu.memory_space<vmem>>, vector<1x1x32xf32>
    %50 = vector.shape_cast %49 : vector<1x1x32xf32> to vector<1x32xf32>
    %cst_28 = arith.constant dense<0.000000e+00> : vector<8xf32>
    %51 = vector.multi_reduction <add>, %46, %cst_28 [1] : vector<8x32xf32> to vector<8xf32>
    %52 = vector.shape_cast %51 : vector<8xf32> to vector<8x1xf32>
    %cst_29 = arith.constant 3.200000e+01 : f32
    %53 = vector.broadcast %cst_29 : f32 to vector<8x1xf32>
    %54 = arith.divf %52, %53 : vector<8x1xf32>
    %55 = vector.broadcast %54 : vector<8x1xf32> to vector<8x32xf32>
    %56 = arith.subf %46, %55 : vector<8x32xf32>
    %57 = arith.mulf %56, %56 : vector<8x32xf32>
    %cst_30 = arith.constant dense<0.000000e+00> : vector<8xf32>
    %58 = vector.multi_reduction <add>, %57, %cst_30 [1] : vector<8x32xf32> to vector<8xf32>
    %59 = vector.shape_cast %58 : vector<8xf32> to vector<8x1xf32>
    %cst_31 = arith.constant 0.0322580636 : f32
    %60 = vector.broadcast %cst_31 : f32 to vector<8x1xf32>
    %61 = arith.mulf %59, %60 : vector<8x1xf32>
    %62 = math.sqrt %61 : vector<8x1xf32>
    %cst_32 = arith.constant 9.99999997E-7 : f32
    %63 = vector.broadcast %cst_32 : f32 to vector<8x1xf32>
    %64 = arith.addf %62, %63 : vector<8x1xf32>
    %65 = tpu.reciprocal %64 : vector<8x1xf32> -> vector<8x1xf32>
    %66 = vector.broadcast %48 : vector<1x32xf32> to vector<8x32xf32>
    %67 = arith.mulf %66, %56 : vector<8x32xf32>
    %68 = vector.broadcast %65 : vector<8x1xf32> to vector<8x32xf32>
    %69 = arith.mulf %67, %68 : vector<8x32xf32>
    %70 = vector.broadcast %50 : vector<1x32xf32> to vector<8x32xf32>
    %71 = arith.addf %69, %70 : vector<8x32xf32>
    %c0_33 = arith.constant 0 : index
    %c0_34 = arith.constant 0 : index
    %c0_35 = arith.constant 0 : index
    %c0_36 = arith.constant 0 : index
    %72 = vector.load %arg8[%c0_33, %c0_34, %c0_35, %c0_36] : memref<1x4x32x8xbf16, #tpu.memory_space<vmem>>, vector<1x4x32x8xbf16>
    %73 = vector.shape_cast %72 : vector<1x4x32x8xbf16> to vector<4x32x8xbf16>
    %74 = arith.truncf %71 : vector<8x32xf32> to vector<8x32xbf16>
    %75 = vector.shape_cast %74 : vector<8x32xbf16> to vector<1x8x32xbf16>
    %76 = vector.shape_cast %75 : vector<1x8x32xbf16> to vector<1x8x32xbf16>
    %77 = vector.broadcast %76 : vector<1x8x32xbf16> to vector<4x8x32xbf16>
    "tpu.trace_start"() <{level = 10 : i32, message = "gnd,gde->gne"}> : () -> ()
    %cst_37 = arith.constant dense<0.000000e+00> : vector<4x8x8xf32>
    %78 = tpu.matmul %77, %73, %cst_37 {dimension_numbers = #tpu.dot_dimension_numbers<[2], [1], [1], [2], [0, 0, 0, 1, 1, 2], [0], [0]>} : vector<4x8x32xbf16>, vector<4x32x8xbf16>, vector<4x8x8xf32> -> vector<4x8x8xf32>
    "tpu.trace_stop"() : () -> ()
    %c0_38 = arith.constant 0 : index
    %c0_39 = arith.constant 0 : index
    %c0_40 = arith.constant 0 : index
    %c0_41 = arith.constant 0 : index
    %79 = vector.load %arg9[%c0_38, %c0_39, %c0_40, %c0_41] : memref<1x8x32x8xbf16, #tpu.memory_space<vmem>>, vector<1x8x32x8xbf16>
    %80 = vector.shape_cast %79 : vector<1x8x32x8xbf16> to vector<8x32x8xbf16>
    %81 = arith.truncf %5 : vector<12x32xf32> to vector<12x32xbf16>
    %82 = vector.shape_cast %81 : vector<12x32xbf16> to vector<1x12x32xbf16>
    %83 = vector.shape_cast %82 : vector<1x12x32xbf16> to vector<1x12x32xbf16>
    %84 = vector.broadcast %83 : vector<1x12x32xbf16> to vector<8x12x32xbf16>
    "tpu.trace_start"() <{level = 10 : i32, message = "gnd,gde->gne"}> : () -> ()
    %cst_42 = arith.constant dense<0.000000e+00> : vector<8x12x8xf32>
    %85 = tpu.matmul %84, %80, %cst_42 {dimension_numbers = #tpu.dot_dimension_numbers<[2], [1], [1], [2], [0, 0, 0, 1, 1, 2], [0], [0]>} : vector<8x12x32xbf16>, vector<8x32x8xbf16>, vector<8x12x8xf32> -> vector<8x12x8xf32>
    "tpu.trace_stop"() : () -> ()
    %86 = vector.extract_strided_slice %85 {offsets = [0, 0, 0], sizes = [4, 12, 8], strides = [1, 1, 1]} : vector<8x12x8xf32> to vector<4x12x8xf32>
    %87 = vector.extract_strided_slice %85 {offsets = [4, 0, 0], sizes = [4, 12, 8], strides = [1, 1, 1]} : vector<8x12x8xf32> to vector<4x12x8xf32>
    %88 = arith.truncf %78 : vector<4x8x8xf32> to vector<4x8x8xbf16>
    %89 = arith.truncf %86 : vector<4x12x8xf32> to vector<4x12x8xbf16>
    "tpu.trace_start"() <{level = 10 : i32, message = "hte,hle->htl"}> : () -> ()
    %cst_43 = arith.constant dense<0.000000e+00> : vector<4x8x12xf32>
    %90 = tpu.matmul %88, %89, %cst_43 {dimension_numbers = #tpu.dot_dimension_numbers<[2], [2], [1], [1], [0, 0, 0, 1, 1, 1], [0], [0]>} : vector<4x8x8xbf16>, vector<4x12x8xbf16>, vector<4x8x12xf32> -> vector<4x8x12xf32>
    "tpu.trace_stop"() : () -> ()
    %cst_44 = arith.constant dense<0xFF800000> : vector<4x8xf32>
    %91 = vector.multi_reduction <maximumf>, %90, %cst_44 [2] : vector<4x8x12xf32> to vector<4x8xf32>
    %92 = vector.shape_cast %91 : vector<4x8xf32> to vector<4x8x1xf32>
    %93 = vector.broadcast %92 : vector<4x8x1xf32> to vector<4x8x12xf32>
    %94 = arith.subf %90, %93 : vector<4x8x12xf32>
    %95 = math.exp %94 : vector<4x8x12xf32>
    %cst_45 = arith.constant dense<0.000000e+00> : vector<4x8xf32>
    %96 = vector.multi_reduction <add>, %95, %cst_45 [2] : vector<4x8x12xf32> to vector<4x8xf32>
    %97 = vector.shape_cast %96 : vector<4x8xf32> to vector<4x8x1xf32>
    %98 = tpu.reciprocal %97 : vector<4x8x1xf32> -> vector<4x8x1xf32>
    %99 = vector.broadcast %98 : vector<4x8x1xf32> to vector<4x8x12xf32>
    %100 = arith.mulf %95, %99 : vector<4x8x12xf32>
    %101 = arith.truncf %100 : vector<4x8x12xf32> to vector<4x8x12xbf16>
    %102 = arith.truncf %87 : vector<4x12x8xf32> to vector<4x12x8xbf16>
    "tpu.trace_start"() <{level = 10 : i32, message = "htl,hle->hte"}> : () -> ()
    %cst_46 = arith.constant dense<0.000000e+00> : vector<4x8x8xf32>
    %103 = tpu.matmul %101, %102, %cst_46 {dimension_numbers = #tpu.dot_dimension_numbers<[2], [1], [1], [2], [0, 0, 0, 1, 1, 2], [0], [0]>} : vector<4x8x12xbf16>, vector<4x12x8xbf16>, vector<4x8x8xf32> -> vector<4x8x8xf32>
    "tpu.trace_stop"() : () -> ()
    %c0_47 = arith.constant 0 : index
    %c0_48 = arith.constant 0 : index
    %c0_49 = arith.constant 0 : index
    %c0_50 = arith.constant 0 : index
    %104 = vector.load %arg10[%c0_47, %c0_48, %c0_49, %c0_50] : memref<1x4x8x32xbf16, #tpu.memory_space<vmem>>, vector<1x4x8x32xbf16>
    %105 = vector.shape_cast %104 : vector<1x4x8x32xbf16> to vector<4x8x32xbf16>
    %106 = arith.truncf %103 : vector<4x8x8xf32> to vector<4x8x8xbf16>
    "tpu.trace_start"() <{level = 10 : i32, message = "hte,hed->htd"}> : () -> ()
    %cst_51 = arith.constant dense<0.000000e+00> : vector<4x8x32xf32>
    %107 = tpu.matmul %106, %105, %cst_51 {dimension_numbers = #tpu.dot_dimension_numbers<[2], [1], [1], [2], [0, 0, 0, 1, 1, 2], [0], [0]>} : vector<4x8x8xbf16>, vector<4x8x32xbf16>, vector<4x8x32xf32> -> vector<4x8x32xf32>
    "tpu.trace_stop"() : () -> ()
    %cst_52 = arith.constant dense<0.000000e+00> : vector<8x32xf32>
    %108 = vector.multi_reduction <add>, %107, %cst_52 [0] : vector<4x8x32xf32> to vector<8x32xf32>
    %109 = arith.addf %71, %108 : vector<8x32xf32>
    %c0_53 = arith.constant 0 : index
    %c0_54 = arith.constant 0 : index
    %c0_55 = arith.constant 0 : index
    %110 = vector.load %arg11[%c0_53, %c0_54, %c0_55] : memref<1x1x32xf32, #tpu.memory_space<vmem>>, vector<1x1x32xf32>
    %111 = vector.shape_cast %110 : vector<1x1x32xf32> to vector<1x32xf32>
    %c0_56 = arith.constant 0 : index
    %c0_57 = arith.constant 0 : index
    %c0_58 = arith.constant 0 : index
    %112 = vector.load %arg12[%c0_56, %c0_57, %c0_58] : memref<1x1x32xf32, #tpu.memory_space<vmem>>, vector<1x1x32xf32>
    %113 = vector.shape_cast %112 : vector<1x1x32xf32> to vector<1x32xf32>
    %cst_59 = arith.constant dense<0.000000e+00> : vector<8xf32>
    %114 = vector.multi_reduction <add>, %109, %cst_59 [1] : vector<8x32xf32> to vector<8xf32>
    %115 = vector.shape_cast %114 : vector<8xf32> to vector<8x1xf32>
    %cst_60 = arith.constant 3.200000e+01 : f32
    %116 = vector.broadcast %cst_60 : f32 to vector<8x1xf32>
    %117 = arith.divf %115, %116 : vector<8x1xf32>
    %118 = vector.broadcast %117 : vector<8x1xf32> to vector<8x32xf32>
    %119 = arith.subf %109, %118 : vector<8x32xf32>
    %120 = arith.mulf %119, %119 : vector<8x32xf32>
    %cst_61 = arith.constant dense<0.000000e+00> : vector<8xf32>
    %121 = vector.multi_reduction <add>, %120, %cst_61 [1] : vector<8x32xf32> to vector<8xf32>
    %122 = vector.shape_cast %121 : vector<8xf32> to vector<8x1xf32>
    %cst_62 = arith.constant 0.0322580636 : f32
    %123 = vector.broadcast %cst_62 : f32 to vector<8x1xf32>
    %124 = arith.mulf %122, %123 : vector<8x1xf32>
    %125 = math.sqrt %124 : vector<8x1xf32>
    %cst_63 = arith.constant 9.99999997E-7 : f32
    %126 = vector.broadcast %cst_63 : f32 to vector<8x1xf32>
    %127 = arith.addf %125, %126 : vector<8x1xf32>
    %128 = tpu.reciprocal %127 : vector<8x1xf32> -> vector<8x1xf32>
    %129 = vector.broadcast %111 : vector<1x32xf32> to vector<8x32xf32>
    %130 = arith.mulf %129, %119 : vector<8x32xf32>
    %131 = vector.broadcast %128 : vector<8x1xf32> to vector<8x32xf32>
    %132 = arith.mulf %130, %131 : vector<8x32xf32>
    %133 = vector.broadcast %113 : vector<1x32xf32> to vector<8x32xf32>
    %134 = arith.addf %132, %133 : vector<8x32xf32>
    %135 = arith.truncf %134 : vector<8x32xf32> to vector<8x32xbf16>
    %c0_64 = arith.constant 0 : index
    %c0_65 = arith.constant 0 : index
    %c0_66 = arith.constant 0 : index
    %136 = vector.load %arg13[%c0_64, %c0_65, %c0_66] : memref<1x32x64xbf16, #tpu.memory_space<vmem>>, vector<1x32x64xbf16>
    %137 = vector.shape_cast %136 : vector<1x32x64xbf16> to vector<32x64xbf16>
    %cst_67 = arith.constant dense<0.000000e+00> : vector<8x64xf32>
    %138 = tpu.matmul %135, %137, %cst_67 {dimension_numbers = #tpu.dot_dimension_numbers<[1], [0], [0], [1], [0, 0, 1, 1], [], []>} : vector<8x32xbf16>, vector<32x64xbf16>, vector<8x64xf32> -> vector<8x64xf32>
    %c0_68 = arith.constant 0 : index
    %c0_69 = arith.constant 0 : index
    %c0_70 = arith.constant 0 : index
    %139 = vector.load %arg14[%c0_68, %c0_69, %c0_70] : memref<1x1x64xf32, #tpu.memory_space<vmem>>, vector<1x1x64xf32>
    %140 = vector.shape_cast %139 : vector<1x1x64xf32> to vector<1x64xf32>
    %141 = vector.broadcast %140 : vector<1x64xf32> to vector<8x64xf32>
    %142 = arith.addf %138, %141 : vector<8x64xf32>
    %cst_71 = arith.constant 0.000000e+00 : f32
    %143 = vector.broadcast %cst_71 : f32 to vector<8x64xf32>
    %144 = arith.maximumf %142, %143 : vector<8x64xf32>
    %145 = arith.truncf %144 : vector<8x64xf32> to vector<8x64xbf16>
    %c0_72 = arith.constant 0 : index
    %c0_73 = arith.constant 0 : index
    %c0_74 = arith.constant 0 : index
    %146 = vector.load %arg15[%c0_72, %c0_73, %c0_74] : memref<1x64x32xbf16, #tpu.memory_space<vmem>>, vector<1x64x32xbf16>
    %147 = vector.shape_cast %146 : vector<1x64x32xbf16> to vector<64x32xbf16>
    %cst_75 = arith.constant dense<0.000000e+00> : vector<8x32xf32>
    %148 = tpu.matmul %145, %147, %cst_75 {dimension_numbers = #tpu.dot_dimension_numbers<[1], [0], [0], [1], [0, 0, 1, 1], [], []>} : vector<8x64xbf16>, vector<64x32xbf16>, vector<8x32xf32> -> vector<8x32xf32>
    %c0_76 = arith.constant 0 : index
    %c0_77 = arith.constant 0 : index
    %c0_78 = arith.constant 0 : index
    %149 = vector.load %arg16[%c0_76, %c0_77, %c0_78] : memref<1x1x32xf32, #tpu.memory_space<vmem>>, vector<1x1x32xf32>
    %150 = vector.shape_cast %149 : vector<1x1x32xf32> to vector<1x32xf32>
    %151 = vector.broadcast %150 : vector<1x32xf32> to vector<8x32xf32>
    %152 = arith.addf %148, %151 : vector<8x32xf32>
    %153 = arith.addf %134, %152 : vector<8x32xf32>
    %c0_79 = arith.constant 0 : index
    %c0_80 = arith.constant 0 : index
    %c0_81 = arith.constant 0 : index
    %154 = vector.load %arg17[%c0_79, %c0_80, %c0_81] : memref<1x1x32xf32, #tpu.memory_space<vmem>>, vector<1x1x32xf32>
    %155 = vector.shape_cast %154 : vector<1x1x32xf32> to vector<1x32xf32>
    %c0_82 = arith.constant 0 : index
    %c0_83 = arith.constant 0 : index
    %c0_84 = arith.constant 0 : index
    %156 = vector.load %arg18[%c0_82, %c0_83, %c0_84] : memref<1x1x32xf32, #tpu.memory_space<vmem>>, vector<1x1x32xf32>
    %157 = vector.shape_cast %156 : vector<1x1x32xf32> to vector<1x32xf32>
    %cst_85 = arith.constant dense<0.000000e+00> : vector<8xf32>
    %158 = vector.multi_reduction <add>, %153, %cst_85 [1] : vector<8x32xf32> to vector<8xf32>
    %159 = vector.shape_cast %158 : vector<8xf32> to vector<8x1xf32>
    %cst_86 = arith.constant 3.200000e+01 : f32
    %160 = vector.broadcast %cst_86 : f32 to vector<8x1xf32>
    %161 = arith.divf %159, %160 : vector<8x1xf32>
    %162 = vector.broadcast %161 : vector<8x1xf32> to vector<8x32xf32>
    %163 = arith.subf %153, %162 : vector<8x32xf32>
    %164 = arith.mulf %163, %163 : vector<8x32xf32>
    %cst_87 = arith.constant dense<0.000000e+00> : vector<8xf32>
    %165 = vector.multi_reduction <add>, %164, %cst_87 [1] : vector<8x32xf32> to vector<8xf32>
    %166 = vector.shape_cast %165 : vector<8xf32> to vector<8x1xf32>
    %cst_88 = arith.constant 0.0322580636 : f32
    %167 = vector.broadcast %cst_88 : f32 to vector<8x1xf32>
    %168 = arith.mulf %166, %167 : vector<8x1xf32>
    %169 = math.sqrt %168 : vector<8x1xf32>
    %cst_89 = arith.constant 9.99999997E-7 : f32
    %170 = vector.broadcast %cst_89 : f32 to vector<8x1xf32>
    %171 = arith.addf %169, %170 : vector<8x1xf32>
    %172 = tpu.reciprocal %171 : vector<8x1xf32> -> vector<8x1xf32>
    %173 = vector.broadcast %155 : vector<1x32xf32> to vector<8x32xf32>
    %174 = arith.mulf %173, %163 : vector<8x32xf32>
    %175 = vector.broadcast %172 : vector<8x1xf32> to vector<8x32xf32>
    %176 = arith.mulf %174, %175 : vector<8x32xf32>
    %177 = vector.broadcast %157 : vector<1x32xf32> to vector<8x32xf32>
    %178 = arith.addf %176, %177 : vector<8x32xf32>
    %c0_90 = arith.constant 0 : index
    %c0_91 = arith.constant 0 : index
    %179 = vector.load %arg20[%c0_90, %c0_91] : memref<8x32xf32, #tpu.memory_space<vmem>>, vector<8x32xf32>
    tpu.vector_store %arg20[%c0_90, %c0_91], %178 {strides = array<i32>} : memref<8x32xf32, #tpu.memory_space<vmem>>, vector<8x32xf32>,
    %c1_i32 = arith.constant 1 : i32
    %180 = arith.cmpi eq, %arg1, %c1_i32 : i32
    %181 = arith.extui %180 : i1 to i32
    %c0_i32_92 = arith.constant 0 : i32
    %182 = arith.cmpi ne, %181, %c0_i32_92 : i32
    scf.if %182 {
      %c0_93 = arith.constant 0 : index
      %c0_94 = arith.constant 0 : index
      %c0_95 = arith.constant 0 : index
      %183 = vector.load %arg19[%c0_93, %c0_94, %c0_95] : memref<1x8x32xf32, #tpu.memory_space<vmem>>, vector<1x8x32xf32>
      %184 = vector.shape_cast %183 : vector<1x8x32xf32> to vector<8x32xf32>
      %185 = vector.shape_cast %178 : vector<8x32xf32> to vector<1x8x32xf32>
      tpu.vector_store %arg19[%c0_93, %c0_94, %c0_95], %185 {strides = array<i32>} : memref<1x8x32xf32, #tpu.memory_space<vmem>>, vector<1x8x32xf32>,
    } else {
    }
    return
  }
  func.func @transform_0(%arg0: i32, %arg1: i32) -> (i32, i32, i32) {
    %c0_i32 = arith.constant 0 : i32
    %c0_i32_0 = arith.constant 0 : i32
    %c0_i32_1 = arith.constant 0 : i32
    return %arg0, %c0_i32, %c0_i32_0 : i32, i32, i32
  }
  func.func @transform_1(%arg0: i32, %arg1: i32) -> (i32, i32, i32, i32) {
    %c0_i32 = arith.constant 0 : i32
    %c0_i32_0 = arith.constant 0 : i32
    %c0_i32_1 = arith.constant 0 : i32
    return %arg1, %arg0, %c0_i32, %c0_i32_0 : i32, i32, i32, i32
  }
  func.func @transform_2(%arg0: i32, %arg1: i32) -> (i32, i32, i32, i32) {
    %c0_i32 = arith.constant 0 : i32
    %c0_i32_0 = arith.constant 0 : i32
    %c0_i32_1 = arith.constant 0 : i32
    %c0_i32_2 = arith.constant 0 : i32
    return %arg1, %c0_i32, %c0_i32_0, %c0_i32_1 : i32, i32, i32, i32
  }
  func.func @transform_3(%arg0: i32, %arg1: i32) -> (i32, i32, i32, i32) {
    %c0_i32 = arith.constant 0 : i32
    %c0_i32_0 = arith.constant 0 : i32
    %c0_i32_1 = arith.constant 0 : i32
    %c0_i32_2 = arith.constant 0 : i32
    return %arg1, %c0_i32, %c0_i32_0, %c0_i32_1 : i32, i32, i32, i32
  }
  func.func @transform_4(%arg0: i32, %arg1: i32) -> (i32, i32, i32) {
    %c0_i32 = arith.constant 0 : i32
    %c0_i32_0 = arith.constant 0 : i32
    %c0_i32_1 = arith.constant 0 : i32
    return %arg1, %c0_i32, %c0_i32_0 : i32, i32, i32
  }
  func.func @transform_5(%arg0: i32, %arg1: i32) -> (i32, i32, i32) {
    %c0_i32 = arith.constant 0 : i32
    %c0_i32_0 = arith.constant 0 : i32
    %c0_i32_1 = arith.constant 0 : i32
    return %arg1, %c0_i32, %c0_i32_0 : i32, i32, i32
  }
  func.func @transform_6(%arg0: i32, %arg1: i32) -> (i32, i32, i32, i32) {
    %c0_i32 = arith.constant 0 : i32
    %c0_i32_0 = arith.constant 0 : i32
    %c0_i32_1 = arith.constant 0 : i32
    %c0_i32_2 = arith.constant 0 : i32
    return %arg1, %c0_i32, %c0_i32_0, %c0_i32_1 : i32, i32, i32, i32
  }
  func.func @transform_7(%arg0: i32, %arg1: i32) -> (i32, i32, i32, i32) {
    %c0_i32 = arith.constant 0 : i32
    %c0_i32_0 = arith.constant 0 : i32
    %c0_i32_1 = arith.constant 0 : i32
    %c0_i32_2 = arith.constant 0 : i32
    return %arg1, %c0_i32, %c0_i32_0, %c0_i32_1 : i32, i32, i32, i32
  }
  func.func @transform_8(%arg0: i32, %arg1: i32) -> (i32, i32, i32, i32) {
    %c0_i32 = arith.constant 0 : i32
    %c0_i32_0 = arith.constant 0 : i32
    %c0_i32_1 = arith.constant 0 : i32
    %c0_i32_2 = arith.constant 0 : i32
    return %arg1, %c0_i32, %c0_i32_0, %c0_i32_1 : i32, i32, i32, i32
  }
  func.func @transform_9(%arg0: i32, %arg1: i32) -> (i32, i32, i32) {
    %c0_i32 = arith.constant 0 : i32
    %c0_i32_0 = arith.constant 0 : i32
    %c0_i32_1 = arith.constant 0 : i32
    return %arg1, %c0_i32, %c0_i32_0 : i32, i32, i32
  }
  func.func @transform_10(%arg0: i32, %arg1: i32) -> (i32, i32, i32) {
    %c0_i32 = arith.constant 0 : i32
    %c0_i32_0 = arith.constant 0 : i32
    %c0_i32_1 = arith.constant 0 : i32
    return %arg1, %c0_i32, %c0_i32_0 : i32, i32, i32
  }
  func.func @transform_11(%arg0: i32, %arg1: i32) -> (i32, i32, i32) {
    %c0_i32 = arith.constant 0 : i32
    %c0_i32_0 = arith.constant 0 : i32
    %c0_i32_1 = arith.constant 0 : i32
    return %arg1, %c0_i32, %c0_i32_0 : i32, i32, i32
  }
  func.func @transform_12(%arg0: i32, %arg1: i32) -> (i32, i32, i32) {
    %c0_i32 = arith.constant 0 : i32
    %c0_i32_0 = arith.constant 0 : i32
    %c0_i32_1 = arith.constant 0 : i32
    return %arg1, %c0_i32, %c0_i32_0 : i32, i32, i32
  }
  func.func @transform_13(%arg0: i32, %arg1: i32) -> (i32, i32, i32) {
    %c0_i32 = arith.constant 0 : i32
    %c0_i32_0 = arith.constant 0 : i32
    %c0_i32_1 = arith.constant 0 : i32
    return %arg1, %c0_i32, %c0_i32_0 : i32, i32, i32
  }
  func.func @transform_14(%arg0: i32, %arg1: i32) -> (i32, i32, i32) {
    %c0_i32 = arith.constant 0 : i32
    %c0_i32_0 = arith.constant 0 : i32
    %c0_i32_1 = arith.constant 0 : i32
    return %arg1, %c0_i32, %c0_i32_0 : i32, i32, i32
  }
  func.func @transform_15(%arg0: i32, %arg1: i32) -> (i32, i32, i32) {
    %c0_i32 = arith.constant 0 : i32
    %c0_i32_0 = arith.constant 0 : i32
    %c0_i32_1 = arith.constant 0 : i32
    return %arg1, %c0_i32, %c0_i32_0 : i32, i32, i32
  }
  func.func @transform_16(%arg0: i32, %arg1: i32) -> (i32, i32, i32) {
    %c0_i32 = arith.constant 0 : i32
    %c0_i32_0 = arith.constant 0 : i32
    %c0_i32_1 = arith.constant 0 : i32
    return %arg1, %c0_i32, %c0_i32_0 : i32, i32, i32
  }
  func.func @transform_17(%arg0: i32, %arg1: i32) -> (i32, i32, i32) {
    %c0_i32 = arith.constant 0 : i32
    %c0_i32_0 = arith.constant 0 : i32
    %c0_i32_1 = arith.constant 0 : i32
    return %arg0, %c0_i32, %c0_i32_0 : i32, i32, i32
  }
}

</mosaic_0001>

<llo_original>
// kernel: decoder_forward.1
$region0: #{decoder_forward.1}
  #allocation0 [shape = 'u32[]', space=smem, size = 0x4, offset = 0x4, fixed_abs, tag = 'smem constant byte address 0x4 - core index']
  #allocation1 [shape = 'u32[144,128]{1,0:T(1,128)}', space=vmem, size = 0x12000, scoped, tag = 'internal scratch']
  #allocation2 [shape = 'f32[8,32]{1,0:T(8,128)}', space=vmem, size = 0x1000, scoped, tag = 'scratch operand']
  %s0 = inlined_call_operand.vmem [shape: f32[2,8,32], index: 0, kind: input, shape index: {}]
  %s1 = inlined_call_operand.vmem [shape: f32[2,2,12,32], index: 1, kind: input, shape index: {}]
  %s2 = inlined_call_operand.vmem [shape: bf16[2,12,32,8], index: 2, kind: input, shape index: {}]
  %s3 = inlined_call_operand.vmem [shape: bf16[2,4,8,32], index: 3, kind: input, shape index: {}]
  %s4 = inlined_call_operand.vmem [shape: f32[2,1,32], index: 4, kind: input, shape index: {}]
  %s5 = inlined_call_operand.vmem [shape: f32[2,1,32], index: 5, kind: input, shape index: {}]
  %s6 = inlined_call_operand.vmem [shape: bf16[2,4,32,8], index: 6, kind: input, shape index: {}]
  %s7 = inlined_call_operand.vmem [shape: bf16[2,8,32,8], index: 7, kind: input, shape index: {}]
  %s8 = inlined_call_operand.vmem [shape: bf16[2,4,8,32], index: 8, kind: input, shape index: {}]
  %s9 = inlined_call_operand.vmem [shape: f32[2,1,32], index: 9, kind: input, shape index: {}]
  %s10 = inlined_call_operand.vmem [shape: f32[2,1,32], index: 10, kind: input, shape index: {}]
  %s11 = inlined_call_operand.vmem [shape: bf16[2,32,64], index: 11, kind: input, shape index: {}]
  %s12 = inlined_call_operand.vmem [shape: f32[2,1,64], index: 12, kind: input, shape index: {}]
  %s13 = inlined_call_operand.vmem [shape: bf16[2,64,32], index: 13, kind: input, shape index: {}]
  %s14 = inlined_call_operand.vmem [shape: f32[2,1,32], index: 14, kind: input, shape index: {}]
  %s15 = inlined_call_operand.vmem [shape: f32[2,1,32], index: 15, kind: input, shape index: {}]
  %s16 = inlined_call_operand.vmem [shape: f32[2,1,32], index: 16, kind: input, shape index: {}]
  %s17 = inlined_call_operand.hbm [shape: f32[2,8,32], index: 17, kind: output, shape index: {}]
  %s18 = sld [smem:[#allocation0]]
  $region109: #{decoder_forward.1} parent=0
    _
  %s20 = ssub.s32 1, %s18
  %s21 = scalar_select 0, %s20, %s18
  $region1: #{decoder_forward.1} parent=0
    #allocation3 [shape = 'u8[8192]{0}', space=vmem, size = 0x2000, scoped, tag = 'output window, operand 0']
    #allocation4 [shape = 's32[2]{0}', space=sflag, size = 0x8, scoped, tag = 'scoped memory for decoder_forward.1']
    %22 = vsyncpa [#allocation4], 0
    %s23 = scalar_lea.sflag [#allocation4], 1
    %24 = vsyncpa %s23, 0
    loop: start=0, step=1, limit=6
    $region2: #{decoder_forward.1} parent=1 // loop_pre_header
      _
    $region3: #{decoder_forward.1} parent=1 // loop_header
      %s26 = sphi 0, %s30
      %p27 = scmp.ge.s32.totalorder %s26, 6
      %s33 = sphi 0, %s45
      %s34 = sphi 0, %s41
      %s35 = sphi 0, %s33
      %s36 = sphi 0, %s34
      %s37 = sphi 0, %s35
      %s38 = sphi 0, %s36
      %s48 = sphi 0, %s50
      %s51 = sphi 0, %s48
      %s52 = sphi 0, %s51
      %s68 = sphi 0, %s52
      %s76 = sphi 0, %s78
      %s79 = sphi 0, %s76
      %s80 = sphi 0, %s79
      %s96 = sphi 0, %s80
      %s102 = sphi 0, %s104
      %s105 = sphi 0, %s102
      %s106 = sphi 0, %s105
      %s122 = sphi 0, %s106
      %s128 = sphi 0, %s130
      %s131 = sphi 0, %s128
      %s132 = sphi 0, %s131
      %s148 = sphi 0, %s132
      %s154 = sphi 0, %s156
      %s157 = sphi 0, %s154
      %s158 = sphi 0, %s157
      %s174 = sphi 0, %s158
      %s180 = sphi 0, %s182
      %s183 = sphi 0, %s180
      %s184 = sphi 0, %s183
      %s200 = sphi 0, %s184
      %s206 = sphi 0, %s208
      %s209 = sphi 0, %s206
      %s210 = sphi 0, %s209
      %s226 = sphi 0, %s210
      %s232 = sphi 0, %s234
      %s235 = sphi 0, %s232
      %s236 = sphi 0, %s235
      %s252 = sphi 0, %s236
      %s258 = sphi 0, %s260
      %s261 = sphi 0, %s258
      %s262 = sphi 0, %s261
      %s278 = sphi 0, %s262
      %s284 = sphi 0, %s286
      %s287 = sphi 0, %s284
      %s288 = sphi 0, %s287
      %s304 = sphi 0, %s288
      %s310 = sphi 0, %s312
      %s313 = sphi 0, %s310
      %s314 = sphi 0, %s313
      %s330 = sphi 0, %s314
      %s336 = sphi 0, %s338
      %s339 = sphi 0, %s336
      %s340 = sphi 0, %s339
      %s356 = sphi 0, %s340
      %s362 = sphi 0, %s364
      %s365 = sphi 0, %s362
      %s366 = sphi 0, %s365
      %s382 = sphi 0, %s366
      %s388 = sphi 0, %s390
      %s391 = sphi 0, %s388
      %s392 = sphi 0, %s391
      %s408 = sphi 0, %s392
      %s414 = sphi 0, %s416
      %s417 = sphi 0, %s414
      %s418 = sphi 0, %s417
      %s434 = sphi 0, %s418
      %s440 = sphi 0, %s442
      %s443 = sphi 0, %s440
      %s444 = sphi 0, %s443
      %s460 = sphi 0, %s444
      %s466 = sphi 0, %s468
      %s469 = sphi 0, %s466
      %s470 = sphi 0, %s469
      %s486 = sphi 0, %s470
      %s492 = sphi 0, %s494
      %s495 = sphi 0, %s492
      %s496 = sphi 0, %s495
      %s512 = sphi 0, %s496
    $region4: #{decoder_forward.1} parent=1 // loop_header_branch
      %29 = sbr.rel (%p27) target = $region8
    $region5: #{decoder_forward.1} parent=1 // loop_body
      %s31 = ssub.s32 %s26, 1
      %s32 = ssub.s32 %s26, 2
      %s39 = sadd.s32 1, %s34
      %p40 = scmp.ge.s32.totalorder %s39, 2
      %s41 = scalar_select %p40, 0, %s39
      %s42 = sadd.s32 1, %s33
      %s43 = scalar_select %p40, %s42, %s33
      %p44 = scmp.ge.s32.totalorder %s43, 2
      %s45 = scalar_select %p44, 0, %s43
      %s46 = ssub.s32 %s33, %s45
      %p47 = scmp.eq.s32.totalorder %s46, 0
      %s49 = sadd.s32 %s48, 1
      %s50 = scalar_select %p47, %s48, %s49
      %p53 = pneg %p47
      %p54 = scmp.eq.s32.totalorder %s26, 3
      %p55 = por %p53, %p54
      %p56 = scmp.ne.s32.totalorder %s48, %s51
      %p57 = scmp.eq.s32.totalorder %s26, 0
      %p58 = por %p56, %p57
      %p59 = scmp.ne.s32.totalorder %s48, %s51
      %p60 = scmp.eq.s32.totalorder %s31, 3
      %p61 = por %p59, %p60
      %p62 = scmp.ne.s32.totalorder %s51, %s52
      %p63 = scmp.eq.s32.totalorder %s31, 0
      %p64 = por %p62, %p63
      %p65 = scmp.ne.s32.totalorder %s51, %s52
      %p66 = scmp.eq.s32.totalorder %s32, 3
      %p67 = por %p65, %p66
      %p69 = scmp.ne.s32.totalorder %s52, %s68
      %p70 = scmp.eq.s32.totalorder %s32, 0
      %p71 = por %p69, %p70
      %s72 = ssub.s32 %s34, %s41
      %s73 = ssub.s32 %s33, %s45
      %s74 = sor.u32 %s72, %s73
      %p75 = scmp.eq.s32.totalorder %s74, 0
      %s77 = sadd.s32 %s76, 1
      %s78 = scalar_select %p75, %s76, %s77
      %p81 = pneg %p75
      %p82 = scmp.eq.s32.totalorder %s26, 3
      %p83 = por %p81, %p82
      %p84 = scmp.ne.s32.totalorder %s76, %s79
      %p85 = scmp.eq.s32.totalorder %s26, 0
      %p86 = por %p84, %p85
      %p87 = scmp.ne.s32.totalorder %s76, %s79
      %p88 = scmp.eq.s32.totalorder %s31, 3
      %p89 = por %p87, %p88
      %p90 = scmp.ne.s32.totalorder %s79, %s80
      %p91 = scmp.eq.s32.totalorder %s31, 0
      %p92 = por %p90, %p91
      %p93 = scmp.ne.s32.totalorder %s79, %s80
      %p94 = scmp.eq.s32.totalorder %s32, 3
      %p95 = por %p93, %p94
      %p97 = scmp.ne.s32.totalorder %s80, %s96
      %p98 = scmp.eq.s32.totalorder %s32, 0
      %p99 = por %p97, %p98
      %s100 = ssub.s32 %s34, %s41
      %p101 = scmp.eq.s32.totalorder %s100, 0
      %s103 = sadd.s32 %s102, 1
      %s104 = scalar_select %p101, %s102, %s103
      %p107 = pneg %p101
      %p108 = scmp.eq.s32.totalorder %s26, 3
      %p109 = por %p107, %p108
      %p110 = scmp.ne.s32.totalorder %s102, %s105
      %p111 = scmp.eq.s32.totalorder %s26, 0
      %p112 = por %p110, %p111
      %p113 = scmp.ne.s32.totalorder %s102, %s105
      %p114 = scmp.eq.s32.totalorder %s31, 3
      %p115 = por %p113, %p114
      %p116 = scmp.ne.s32.totalorder %s105, %s106
      %p117 = scmp.eq.s32.totalorder %s31, 0
      %p118 = por %p116, %p117
      %p119 = scmp.ne.s32.totalorder %s105, %s106
      %p120 = scmp.eq.s32.totalorder %s32, 3
      %p121 = por %p119, %p120
      %p123 = scmp.ne.s32.totalorder %s106, %s122
      %p124 = scmp.eq.s32.totalorder %s32, 0
      %p125 = por %p123, %p124
      %s126 = ssub.s32 %s34, %s41
      %p127 = scmp.eq.s32.totalorder %s126, 0
      %s129 = sadd.s32 %s128, 1
      %s130 = scalar_select %p127, %s128, %s129
      %p133 = pneg %p127
      %p134 = scmp.eq.s32.totalorder %s26, 3
      %p135 = por %p133, %p134
      %p136 = scmp.ne.s32.totalorder %s128, %s131
      %p137 = scmp.eq.s32.totalorder %s26, 0
      %p138 = por %p136, %p137
      %p139 = scmp.ne.s32.totalorder %s128, %s131
      %p140 = scmp.eq.s32.totalorder %s31, 3
      %p141 = por %p139, %p140
      %p142 = scmp.ne.s32.totalorder %s131, %s132
      %p143 = scmp.eq.s32.totalorder %s31, 0
      %p144 = por %p142, %p143
      %p145 = scmp.ne.s32.totalorder %s131, %s132
      %p146 = scmp.eq.s32.totalorder %s32, 3
      %p147 = por %p145, %p146
      %p149 = scmp.ne.s32.totalorder %s132, %s148
      %p150 = scmp.eq.s32.totalorder %s32, 0
      %p151 = por %p149, %p150
      %s152 = ssub.s32 %s34, %s41
      %p153 = scmp.eq.s32.totalorder %s152, 0
      %s155 = sadd.s32 %s154, 1
      %s156 = scalar_select %p153, %s154, %s155
      %p159 = pneg %p153
      %p160 = scmp.eq.s32.totalorder %s26, 3
      %p161 = por %p159, %p160
      %p162 = scmp.ne.s32.totalorder %s154, %s157
      %p163 = scmp.eq.s32.totalorder %s26, 0
      %p164 = por %p162, %p163
      %p165 = scmp.ne.s32.totalorder %s154, %s157
      %p166 = scmp.eq.s32.totalorder %s31, 3
      %p167 = por %p165, %p166
      %p168 = scmp.ne.s32.totalorder %s157, %s158
      %p169 = scmp.eq.s32.totalorder %s31, 0
      %p170 = por %p168, %p169
      %p171 = scmp.ne.s32.totalorder %s157, %s158
      %p172 = scmp.eq.s32.totalorder %s32, 3
      %p173 = por %p171, %p172
      %p175 = scmp.ne.s32.totalorder %s158, %s174
      %p176 = scmp.eq.s32.totalorder %s32, 0
      %p177 = por %p175, %p176
      %s178 = ssub.s32 %s34, %s41
      %p179 = scmp.eq.s32.totalorder %s178, 0
      %s181 = sadd.s32 %s180, 1
      %s182 = scalar_select %p179, %s180, %s181
      %p185 = pneg %p179
      %p186 = scmp.eq.s32.totalorder %s26, 3
      %p187 = por %p185, %p186
      %p188 = scmp.ne.s32.totalorder %s180, %s183
      %p189 = scmp.eq.s32.totalorder %s26, 0
      %p190 = por %p188, %p189
      %p191 = scmp.ne.s32.totalorder %s180, %s183
      %p192 = scmp.eq.s32.totalorder %s31, 3
      %p193 = por %p191, %p192
      %p194 = scmp.ne.s32.totalorder %s183, %s184
      %p195 = scmp.eq.s32.totalorder %s31, 0
      %p196 = por %p194, %p195
      %p197 = scmp.ne.s32.totalorder %s183, %s184
      %p198 = scmp.eq.s32.totalorder %s32, 3
      %p199 = por %p197, %p198
      %p201 = scmp.ne.s32.totalorder %s184, %s200
      %p202 = scmp.eq.s32.totalorder %s32, 0
      %p203 = por %p201, %p202
      %s204 = ssub.s32 %s34, %s41
      %p205 = scmp.eq.s32.totalorder %s204, 0
      %s207 = sadd.s32 %s206, 1
      %s208 = scalar_select %p205, %s206, %s207
      %p211 = pneg %p205
      %p212 = scmp.eq.s32.totalorder %s26, 3
      %p213 = por %p211, %p212
      %p214 = scmp.ne.s32.totalorder %s206, %s209
      %p215 = scmp.eq.s32.totalorder %s26, 0
      %p216 = por %p214, %p215
      %p217 = scmp.ne.s32.totalorder %s206, %s209
      %p218 = scmp.eq.s32.totalorder %s31, 3
      %p219 = por %p217, %p218
      %p220 = scmp.ne.s32.totalorder %s209, %s210
      %p221 = scmp.eq.s32.totalorder %s31, 0
      %p222 = por %p220, %p221
      %p223 = scmp.ne.s32.totalorder %s209, %s210
      %p224 = scmp.eq.s32.totalorder %s32, 3
      %p225 = por %p223, %p224
      %p227 = scmp.ne.s32.totalorder %s210, %s226
      %p228 = scmp.eq.s32.totalorder %s32, 0
      %p229 = por %p227, %p228
      %s230 = ssub.s32 %s34, %s41
      %p231 = scmp.eq.s32.totalorder %s230, 0
      %s233 = sadd.s32 %s232, 1
      %s234 = scalar_select %p231, %s232, %s233
      %p237 = pneg %p231
      %p238 = scmp.eq.s32.totalorder %s26, 3
      %p239 = por %p237, %p238
      %p240 = scmp.ne.s32.totalorder %s232, %s235
      %p241 = scmp.eq.s32.totalorder %s26, 0
      %p242 = por %p240, %p241
      %p243 = scmp.ne.s32.totalorder %s232, %s235
      %p244 = scmp.eq.s32.totalorder %s31, 3
      %p245 = por %p243, %p244
      %p246 = scmp.ne.s32.totalorder %s235, %s236
      %p247 = scmp.eq.s32.totalorder %s31, 0
      %p248 = por %p246, %p247
      %p249 = scmp.ne.s32.totalorder %s235, %s236
      %p250 = scmp.eq.s32.totalorder %s32, 3
      %p251 = por %p249, %p250
      %p253 = scmp.ne.s32.totalorder %s236, %s252
      %p254 = scmp.eq.s32.totalorder %s32, 0
      %p255 = por %p253, %p254
      %s256 = ssub.s32 %s34, %s41
      %p257 = scmp.eq.s32.totalorder %s256, 0
      %s259 = sadd.s32 %s258, 1
      %s260 = scalar_select %p257, %s258, %s259
      %p263 = pneg %p257
      %p264 = scmp.eq.s32.totalorder %s26, 3
      %p265 = por %p263, %p264
      %p266 = scmp.ne.s32.totalorder %s258, %s261
      %p267 = scmp.eq.s32.totalorder %s26, 0
      %p268 = por %p266, %p267
      %p269 = scmp.ne.s32.totalorder %s258, %s261
      %p270 = scmp.eq.s32.totalorder %s31, 3
      %p271 = por %p269, %p270
      %p272 = scmp.ne.s32.totalorder %s261, %s262
      %p273 = scmp.eq.s32.totalorder %s31, 0
      %p274 = por %p272, %p273
      %p275 = scmp.ne.s32.totalorder %s261, %s262
      %p276 = scmp.eq.s32.totalorder %s32, 3
      %p277 = por %p275, %p276
      %p279 = scmp.ne.s32.totalorder %s262, %s278
      %p280 = scmp.eq.s32.totalorder %s32, 0
      %p281 = por %p279, %p280
      %s282 = ssub.s32 %s34, %s41
      %p283 = scmp.eq.s32.totalorder %s282, 0
      %s285 = sadd.s32 %s284, 1
      %s286 = scalar_select %p283, %s284, %s285
      %p289 = pneg %p283
      %p290 = scmp.eq.s32.totalorder %s26, 3
      %p291 = por %p289, %p290
      %p292 = scmp.ne.s32.totalorder %s284, %s287
      %p293 = scmp.eq.s32.totalorder %s26, 0
      %p294 = por %p292, %p293
      %p295 = scmp.ne.s32.totalorder %s284, %s287
      %p296 = scmp.eq.s32.totalorder %s31, 3
      %p297 = por %p295, %p296
      %p298 = scmp.ne.s32.totalorder %s287, %s288
      %p299 = scmp.eq.s32.totalorder %s31, 0
      %p300 = por %p298, %p299
      %p301 = scmp.ne.s32.totalorder %s287, %s288
      %p302 = scmp.eq.s32.totalorder %s32, 3
      %p303 = por %p301, %p302
      %p305 = scmp.ne.s32.totalorder %s288, %s304
      %p306 = scmp.eq.s32.totalorder %s32, 0
      %p307 = por %p305, %p306
      %s308 = ssub.s32 %s34, %s41
      %p309 = scmp.eq.s32.totalorder %s308, 0
      %s311 = sadd.s32 %s310, 1
      %s312 = scalar_select %p309, %s310, %s311
      %p315 = pneg %p309
      %p316 = scmp.eq.s32.totalorder %s26, 3
      %p317 = por %p315, %p316
      %p318 = scmp.ne.s32.totalorder %s310, %s313
      %p319 = scmp.eq.s32.totalorder %s26, 0
      %p320 = por %p318, %p319
      %p321 = scmp.ne.s32.totalorder %s310, %s313
      %p322 = scmp.eq.s32.totalorder %s31, 3
      %p323 = por %p321, %p322
      %p324 = scmp.ne.s32.totalorder %s313, %s314
      %p325 = scmp.eq.s32.totalorder %s31, 0
      %p326 = por %p324, %p325
      %p327 = scmp.ne.s32.totalorder %s313, %s314
      %p328 = scmp.eq.s32.totalorder %s32, 3
      %p329 = por %p327, %p328
      %p331 = scmp.ne.s32.totalorder %s314, %s330
      %p332 = scmp.eq.s32.totalorder %s32, 0
      %p333 = por %p331, %p332
      %s334 = ssub.s32 %s34, %s41
      %p335 = scmp.eq.s32.totalorder %s334, 0
      %s337 = sadd.s32 %s336, 1
      %s338 = scalar_select %p335, %s336, %s337
      %p341 = pneg %p335
      %p342 = scmp.eq.s32.totalorder %s26, 3
      %p343 = por %p341, %p342
      %p344 = scmp.ne.s32.totalorder %s336, %s339
      %p345 = scmp.eq.s32.totalorder %s26, 0
      %p346 = por %p344, %p345
      %p347 = scmp.ne.s32.totalorder %s336, %s339
      %p348 = scmp.eq.s32.totalorder %s31, 3
      %p349 = por %p347, %p348
      %p350 = scmp.ne.s32.totalorder %s339, %s340
      %p351 = scmp.eq.s32.totalorder %s31, 0
      %p352 = por %p350, %p351
      %p353 = scmp.ne.s32.totalorder %s339, %s340
      %p354 = scmp.eq.s32.totalorder %s32, 3
      %p355 = por %p353, %p354
      %p357 = scmp.ne.s32.totalorder %s340, %s356
      %p358 = scmp.eq.s32.totalorder %s32, 0
      %p359 = por %p357, %p358
      %s360 = ssub.s32 %s34, %s41
      %p361 = scmp.eq.s32.totalorder %s360, 0
      %s363 = sadd.s32 %s362, 1
      %s364 = scalar_select %p361, %s362, %s363
      %p367 = pneg %p361
      %p368 = scmp.eq.s32.totalorder %s26, 3
      %p369 = por %p367, %p368
      %p370 = scmp.ne.s32.totalorder %s362, %s365
      %p371 = scmp.eq.s32.totalorder %s26, 0
      %p372 = por %p370, %p371
      %p373 = scmp.ne.s32.totalorder %s362, %s365
      %p374 = scmp.eq.s32.totalorder %s31, 3
      %p375 = por %p373, %p374
      %p376 = scmp.ne.s32.totalorder %s365, %s366
      %p377 = scmp.eq.s32.totalorder %s31, 0
      %p378 = por %p376, %p377
      %p379 = scmp.ne.s32.totalorder %s365, %s366
      %p380 = scmp.eq.s32.totalorder %s32, 3
      %p381 = por %p379, %p380
      %p383 = scmp.ne.s32.totalorder %s366, %s382
      %p384 = scmp.eq.s32.totalorder %s32, 0
      %p385 = por %p383, %p384
      %s386 = ssub.s32 %s34, %s41
      %p387 = scmp.eq.s32.totalorder %s386, 0
      %s389 = sadd.s32 %s388, 1
      %s390 = scalar_select %p387, %s388, %s389
      %p393 = pneg %p387
      %p394 = scmp.eq.s32.totalorder %s26, 3
      %p395 = por %p393, %p394
      %p396 = scmp.ne.s32.totalorder %s388, %s391
      %p397 = scmp.eq.s32.totalorder %s26, 0
      %p398 = por %p396, %p397
      %p399 = scmp.ne.s32.totalorder %s388, %s391
      %p400 = scmp.eq.s32.totalorder %s31, 3
      %p401 = por %p399, %p400
      %p402 = scmp.ne.s32.totalorder %s391, %s392
      %p403 = scmp.eq.s32.totalorder %s31, 0
      %p404 = por %p402, %p403
      %p405 = scmp.ne.s32.totalorder %s391, %s392
      %p406 = scmp.eq.s32.totalorder %s32, 3
      %p407 = por %p405, %p406
      %p409 = scmp.ne.s32.totalorder %s392, %s408
      %p410 = scmp.eq.s32.totalorder %s32, 0
      %p411 = por %p409, %p410
      %s412 = ssub.s32 %s34, %s41
      %p413 = scmp.eq.s32.totalorder %s412, 0
      %s415 = sadd.s32 %s414, 1
      %s416 = scalar_select %p413, %s414, %s415
      %p419 = pneg %p413
      %p420 = scmp.eq.s32.totalorder %s26, 3
      %p421 = por %p419, %p420
      %p422 = scmp.ne.s32.totalorder %s414, %s417
      %p423 = scmp.eq.s32.totalorder %s26, 0
      %p424 = por %p422, %p423
      %p425 = scmp.ne.s32.totalorder %s414, %s417
      %p426 = scmp.eq.s32.totalorder %s31, 3
      %p427 = por %p425, %p426
      %p428 = scmp.ne.s32.totalorder %s417, %s418
      %p429 = scmp.eq.s32.totalorder %s31, 0
      %p430 = por %p428, %p429
      %p431 = scmp.ne.s32.totalorder %s417, %s418
      %p432 = scmp.eq.s32.totalorder %s32, 3
      %p433 = por %p431, %p432
      %p435 = scmp.ne.s32.totalorder %s418, %s434
      %p436 = scmp.eq.s32.totalorder %s32, 0
      %p437 = por %p435, %p436
      %s438 = ssub.s32 %s34, %s41
      %p439 = scmp.eq.s32.totalorder %s438, 0
      %s441 = sadd.s32 %s440, 1
      %s442 = scalar_select %p439, %s440, %s441
      %p445 = pneg %p439
      %p446 = scmp.eq.s32.totalorder %s26, 3
      %p447 = por %p445, %p446
      %p448 = scmp.ne.s32.totalorder %s440, %s443
      %p449 = scmp.eq.s32.totalorder %s26, 0
      %p450 = por %p448, %p449
      %p451 = scmp.ne.s32.totalorder %s440, %s443
      %p452 = scmp.eq.s32.totalorder %s31, 3
      %p453 = por %p451, %p452
      %p454 = scmp.ne.s32.totalorder %s443, %s444
      %p455 = scmp.eq.s32.totalorder %s31, 0
      %p456 = por %p454, %p455
      %p457 = scmp.ne.s32.totalorder %s443, %s444
      %p458 = scmp.eq.s32.totalorder %s32, 3
      %p459 = por %p457, %p458
      %p461 = scmp.ne.s32.totalorder %s444, %s460
      %p462 = scmp.eq.s32.totalorder %s32, 0
      %p463 = por %p461, %p462
      %s464 = ssub.s32 %s34, %s41
      %p465 = scmp.eq.s32.totalorder %s464, 0
      %s467 = sadd.s32 %s466, 1
      %s468 = scalar_select %p465, %s466, %s467
      %p471 = pneg %p465
      %p472 = scmp.eq.s32.totalorder %s26, 3
      %p473 = por %p471, %p472
      %p474 = scmp.ne.s32.totalorder %s466, %s469
      %p475 = scmp.eq.s32.totalorder %s26, 0
      %p476 = por %p474, %p475
      %p477 = scmp.ne.s32.totalorder %s466, %s469
      %p478 = scmp.eq.s32.totalorder %s31, 3
      %p479 = por %p477, %p478
      %p480 = scmp.ne.s32.totalorder %s469, %s470
      %p481 = scmp.eq.s32.totalorder %s31, 0
      %p482 = por %p480, %p481
      %p483 = scmp.ne.s32.totalorder %s469, %s470
      %p484 = scmp.eq.s32.totalorder %s32, 3
      %p485 = por %p483, %p484
      %p487 = scmp.ne.s32.totalorder %s470, %s486
      %p488 = scmp.eq.s32.totalorder %s32, 0
      %p489 = por %p487, %p488
      %s490 = ssub.s32 %s33, %s45
      %p491 = scmp.eq.s32.totalorder %s490, 0
      %s493 = sadd.s32 %s492, 1
      %s494 = scalar_select %p491, %s492, %s493
      %p497 = pneg %p491
      %p498 = scmp.eq.s32.totalorder %s26, 3
      %p499 = por %p497, %p498
      %p500 = scmp.ne.s32.totalorder %s492, %s495
      %p501 = scmp.eq.s32.totalorder %s26, 0
      %p502 = por %p500, %p501
      %p503 = scmp.ne.s32.totalorder %s492, %s495
      %p504 = scmp.eq.s32.totalorder %s31, 3
      %p505 = por %p503, %p504
      %p506 = scmp.ne.s32.totalorder %s495, %s496
      %p507 = scmp.eq.s32.totalorder %s31, 0
      %p508 = por %p506, %p507
      %p509 = scmp.ne.s32.totalorder %s495, %s496
      %p510 = scmp.eq.s32.totalorder %s32, 3
      %p511 = por %p509, %p510
      %p513 = scmp.ne.s32.totalorder %s496, %s512
      %p514 = scmp.eq.s32.totalorder %s32, 0
      %p515 = por %p513, %p514
      %p516 = scmp.le.s32.totalorder 1, %s26
      %p517 = scmp.lt.s32.totalorder %s26, 5
      %p518 = pnand %p516, %p517
      %p519 = pneg %p518
      // Predicated region
      $region9: #{decoder_forward.1} parent=5 // pred_check
        _
      $region10: #{decoder_forward.1} parent=5 // pred_check_branch
        %521 = sbr.rel (%p518) target = $region12
      $region11: #{decoder_forward.1} parent=5 // pred_region
        %s522 = ssub.s32 %s26, 1
      $region12: #{decoder_forward.1} parent=5 // pred_fallthru
        _
      %p523 = scmp.lt.s32.totalorder %s26, 4
      // Predicated region
      $region13: #{decoder_forward.1} parent=5 // pred_check
        %p524 = pneg %p523
      $region14: #{decoder_forward.1} parent=5 // pred_check_branch
        %526 = sbr.rel (%p524) target = $region16
      $region15: #{decoder_forward.1} parent=5 // pred_region
        // Predicated region
        $region17: #{decoder_forward.1} parent=15 // pred_check
          %p527 = pneg %p58
        $region18: #{decoder_forward.1} parent=15 // pred_check_branch
          %529 = sbr.rel (%p527) target = $region20
        $region19: #{decoder_forward.1} parent=15 // pred_region
          %p530 = scmp.lt.s32.totalorder %s33, 1
          %s531 = scalar_select %p530, %s33, 1
          %s532 = smul.addr %s531, 8
          %s533 = scalar_lea.vmem %s0, %s532
        $region20: #{decoder_forward.1} parent=15 // pred_fallthru
          _
        // Predicated region
        $region21: #{decoder_forward.1} parent=15 // pred_check
          %p534 = pneg %p86
        $region22: #{decoder_forward.1} parent=15 // pred_check_branch
          %536 = sbr.rel (%p534) target = $region24
        $region23: #{decoder_forward.1} parent=15 // pred_region
          %p537 = scmp.lt.s32.totalorder %s34, 1
          %s538 = scalar_select %p537, %s34, 1
          %p539 = scmp.lt.s32.totalorder %s33, 1
          %s540 = scalar_select %p539, %s33, 1
          %s541 = smul.addr %s540, 2
          %s542 = smul.addr %s538, 4
          %s543 = sadd.s32 %s541, %s542
          %s544 = smul.addr %s543, 8
          %s545 = scalar_lea.vmem %s1, %s544
        $region24: #{decoder_forward.1} parent=15 // pred_fallthru
          _
        // Predicated region
        $region25: #{decoder_forward.1} parent=15 // pred_check
          %p546 = pneg %p112
        $region26: #{decoder_forward.1} parent=15 // pred_check_branch
          %548 = sbr.rel (%p546) target = $region28
        $region27: #{decoder_forward.1} parent=15 // pred_region
          %p549 = scmp.lt.s32.totalorder %s34, 1
          %s550 = scalar_select %p549, %s34, 1
          %s551 = smul.addr %s550, 48
          %s552 = smul.addr %s551, 4
          %s553 = scalar_lea.vmem %s2, %s552
        $region28: #{decoder_forward.1} parent=15 // pred_fallthru
          _
        // Predicated region
        $region29: #{decoder_forward.1} parent=15 // pred_check
          %p554 = pneg %p138
        $region30: #{decoder_forward.1} parent=15 // pred_check_branch
          %556 = sbr.rel (%p554) target = $region32
        $region31: #{decoder_forward.1} parent=15 // pred_region
          %p557 = scmp.lt.s32.totalorder %s34, 1
          %s558 = scalar_select %p557, %s34, 1
          %s559 = smul.addr %s558, 4
          %s560 = smul.addr %s559, 4
          %s561 = scalar_lea.vmem %s3, %s560
        $region32: #{decoder_forward.1} parent=15 // pred_fallthru
          _
        // Predicated region
        $region33: #{decoder_forward.1} parent=15 // pred_check
          %p562 = pneg %p164
        $region34: #{decoder_forward.1} parent=15 // pred_check_branch
          %564 = sbr.rel (%p562) target = $region36
        $region35: #{decoder_forward.1} parent=15 // pred_region
          %p565 = scmp.lt.s32.totalorder %s34, 1
          %s566 = scalar_select %p565, %s34, 1
          %s567 = scalar_lea.vmem %s4, %s566
        $region36: #{decoder_forward.1} parent=15 // pred_fallthru
          _
        // Predicated region
        $region37: #{decoder_forward.1} parent=15 // pred_check
          %p568 = pneg %p190
        $region38: #{decoder_forward.1} parent=15 // pred_check_branch
          %570 = sbr.rel (%p568) target = $region40
        $region39: #{decoder_forward.1} parent=15 // pred_region
          %p571 = scmp.lt.s32.totalorder %s34, 1
          %s572 = scalar_select %p571, %s34, 1
          %s573 = scalar_lea.vmem %s5, %s572
        $region40: #{decoder_forward.1} parent=15 // pred_fallthru
          _
        // Predicated region
        $region41: #{decoder_forward.1} parent=15 // pred_check
          %p574 = pneg %p216
        $region42: #{decoder_forward.1} parent=15 // pred_check_branch
          %576 = sbr.rel (%p574) target = $region44
        $region43: #{decoder_forward.1} parent=15 // pred_region
          %p577 = scmp.lt.s32.totalorder %s34, 1
          %s578 = scalar_select %p577, %s34, 1
          %s579 = smul.addr %s578, 16
          %s580 = smul.addr %s579, 4
          %s581 = scalar_lea.vmem %s6, %s580
        $region44: #{decoder_forward.1} parent=15 // pred_fallthru
          _
        // Predicated region
        $region45: #{decoder_forward.1} parent=15 // pred_check
          %p582 = pneg %p242
        $region46: #{decoder_forward.1} parent=15 // pred_check_branch
          %584 = sbr.rel (%p582) target = $region48
        $region47: #{decoder_forward.1} parent=15 // pred_region
          %p585 = scmp.lt.s32.totalorder %s34, 1
          %s586 = scalar_select %p585, %s34, 1
          %s587 = smul.addr %s586, 32
          %s588 = smul.addr %s587, 4
          %s589 = scalar_lea.vmem %s7, %s588
        $region48: #{decoder_forward.1} parent=15 // pred_fallthru
          _
        // Predicated region
        $region49: #{decoder_forward.1} parent=15 // pred_check
          %p590 = pneg %p268
        $region50: #{decoder_forward.1} parent=15 // pred_check_branch
          %592 = sbr.rel (%p590) target = $region52
        $region51: #{decoder_forward.1} parent=15 // pred_region
          %p593 = scmp.lt.s32.totalorder %s34, 1
          %s594 = scalar_select %p593, %s34, 1
          %s595 = smul.addr %s594, 4
          %s596 = smul.addr %s595, 4
          %s597 = scalar_lea.vmem %s8, %s596
        $region52: #{decoder_forward.1} parent=15 // pred_fallthru
          _
        // Predicated region
        $region53: #{decoder_forward.1} parent=15 // pred_check
          %p598 = pneg %p294
        $region54: #{decoder_forward.1} parent=15 // pred_check_branch
          %600 = sbr.rel (%p598) target = $region56
        $region55: #{decoder_forward.1} parent=15 // pred_region
          %p601 = scmp.lt.s32.totalorder %s34, 1
          %s602 = scalar_select %p601, %s34, 1
          %s603 = scalar_lea.vmem %s9, %s602
        $region56: #{decoder_forward.1} parent=15 // pred_fallthru
          _
        // Predicated region
        $region57: #{decoder_forward.1} parent=15 // pred_check
          %p604 = pneg %p320
        $region58: #{decoder_forward.1} parent=15 // pred_check_branch
          %606 = sbr.rel (%p604) target = $region60
        $region59: #{decoder_forward.1} parent=15 // pred_region
          %p607 = scmp.lt.s32.totalorder %s34, 1
          %s608 = scalar_select %p607, %s34, 1
          %s609 = scalar_lea.vmem %s10, %s608
        $region60: #{decoder_forward.1} parent=15 // pred_fallthru
          _
        // Predicated region
        $region61: #{decoder_forward.1} parent=15 // pred_check
          %p610 = pneg %p346
        $region62: #{decoder_forward.1} parent=15 // pred_check_branch
          %612 = sbr.rel (%p610) target = $region64
        $region63: #{decoder_forward.1} parent=15 // pred_region
          %p613 = scmp.lt.s32.totalorder %s34, 1
          %s614 = scalar_select %p613, %s34, 1
          %s615 = smul.addr %s614, 4
          %s616 = smul.addr %s615, 4
          %s617 = scalar_lea.vmem %s11, %s616
        $region64: #{decoder_forward.1} parent=15 // pred_fallthru
          _
        // Predicated region
        $region65: #{decoder_forward.1} parent=15 // pred_check
          %p618 = pneg %p372
        $region66: #{decoder_forward.1} parent=15 // pred_check_branch
          %620 = sbr.rel (%p618) target = $region68
        $region67: #{decoder_forward.1} parent=15 // pred_region
          %p621 = scmp.lt.s32.totalorder %s34, 1
          %s622 = scalar_select %p621, %s34, 1
          %s623 = scalar_lea.vmem %s12, %s622
        $region68: #{decoder_forward.1} parent=15 // pred_fallthru
          _
        // Predicated region
        $region69: #{decoder_forward.1} parent=15 // pred_check
          %p624 = pneg %p398
        $region70: #{decoder_forward.1} parent=15 // pred_check_branch
          %626 = sbr.rel (%p624) target = $region72
        $region71: #{decoder_forward.1} parent=15 // pred_region
          %p627 = scmp.lt.s32.totalorder %s34, 1
          %s628 = scalar_select %p627, %s34, 1
          %s629 = smul.addr %s628, 8
          %s630 = smul.addr %s629, 4
          %s631 = scalar_lea.vmem %s13, %s630
        $region72: #{decoder_forward.1} parent=15 // pred_fallthru
          _
        // Predicated region
        $region73: #{decoder_forward.1} parent=15 // pred_check
          %p632 = pneg %p424
        $region74: #{decoder_forward.1} parent=15 // pred_check_branch
          %634 = sbr.rel (%p632) target = $region76
        $region75: #{decoder_forward.1} parent=15 // pred_region
          %p635 = scmp.lt.s32.totalorder %s34, 1
          %s636 = scalar_select %p635, %s34, 1
          %s637 = scalar_lea.vmem %s14, %s636
        $region76: #{decoder_forward.1} parent=15 // pred_fallthru
          _
        // Predicated region
        $region77: #{decoder_forward.1} parent=15 // pred_check
          %p638 = pneg %p450
        $region78: #{decoder_forward.1} parent=15 // pred_check_branch
          %640 = sbr.rel (%p638) target = $region80
        $region79: #{decoder_forward.1} parent=15 // pred_region
          %p641 = scmp.lt.s32.totalorder %s34, 1
          %s642 = scalar_select %p641, %s34, 1
          %s643 = scalar_lea.vmem %s15, %s642
        $region80: #{decoder_forward.1} parent=15 // pred_fallthru
          _
        // Predicated region
        $region81: #{decoder_forward.1} parent=15 // pred_check
          %p644 = pneg %p476
        $region82: #{decoder_forward.1} parent=15 // pred_check_branch
          %646 = sbr.rel (%p644) target = $region84
        $region83: #{decoder_forward.1} parent=15 // pred_region
          %p647 = scmp.lt.s32.totalorder %s34, 1
          %s648 = scalar_select %p647, %s34, 1
          %s649 = scalar_lea.vmem %s16, %s648
        $region84: #{decoder_forward.1} parent=15 // pred_fallthru
          _
      $region16: #{decoder_forward.1} parent=5 // pred_fallthru
        _
      %p650 = scmp.le.s32.totalorder 1, %s26
      %p651 = scmp.lt.s32.totalorder %s26, 5
      %p652 = pnand %p650, %p651
      %p653 = pneg %p652
      // Predicated region
      $region85: #{decoder_forward.1} parent=5 // pred_check
        _
      $region86: #{decoder_forward.1} parent=5 // pred_check_branch
        %655 = sbr.rel (%p652) target = $region88
      $region87: #{decoder_forward.1} parent=5 // pred_region
        %s656 = ssub.s32 %s26, 1
        %p657 = scmp.lt.s32.totalorder %s35, 1
        %s658 = scalar_select %p657, %s35, 1
        %s659 = smul.addr %s658, 8
        %s660 = scalar_lea.vmem %s0, %s659
        %p661 = pneg %p64
        %p662 = pneg %p61
        %p663 = scmp.lt.s32.totalorder %s36, 1
        %s664 = scalar_select %p663, %s36, 1
        %p665 = scmp.lt.s32.totalorder %s35, 1
        %s666 = scalar_select %p665, %s35, 1
        %s667 = smul.addr %s666, 2
        %s668 = smul.addr %s664, 4
        %s669 = sadd.s32 %s667, %s668
        %s670 = smul.addr %s669, 8
        %s671 = scalar_lea.vmem %s1, %s670
        %p672 = pneg %p92
        %p673 = pneg %p89
        %p674 = scmp.lt.s32.totalorder %s36, 1
        %s675 = scalar_select %p674, %s36, 1
        %s676 = smul.addr %s675, 48
        %s677 = smul.addr %s676, 4
        %s678 = scalar_lea.vmem %s2, %s677
        %p679 = pneg %p118
        %p680 = pneg %p115
        %p681 = scmp.lt.s32.totalorder %s36, 1
        %s682 = scalar_select %p681, %s36, 1
        %s683 = smul.addr %s682, 4
        %s684 = smul.addr %s683, 4
        %s685 = scalar_lea.vmem %s3, %s684
        %p686 = pneg %p144
        %p687 = pneg %p141
        %p688 = scmp.lt.s32.totalorder %s36, 1
        %s689 = scalar_select %p688, %s36, 1
        %s690 = scalar_lea.vmem %s4, %s689
        %p691 = pneg %p170
        %p692 = pneg %p167
        %p693 = scmp.lt.s32.totalorder %s36, 1
        %s694 = scalar_select %p693, %s36, 1
        %s695 = scalar_lea.vmem %s5, %s694
        %p696 = pneg %p196
        %p697 = pneg %p193
        %p698 = scmp.lt.s32.totalorder %s36, 1
        %s699 = scalar_select %p698, %s36, 1
        %s700 = smul.addr %s699, 16
        %s701 = smul.addr %s700, 4
        %s702 = scalar_lea.vmem %s6, %s701
        %p703 = pneg %p222
        %p704 = pneg %p219
        %p705 = scmp.lt.s32.totalorder %s36, 1
        %s706 = scalar_select %p705, %s36, 1
        %s707 = smul.addr %s706, 32
        %s708 = smul.addr %s707, 4
        %s709 = scalar_lea.vmem %s7, %s708
        %p710 = pneg %p248
        %p711 = pneg %p245
        %p712 = scmp.lt.s32.totalorder %s36, 1
        %s713 = scalar_select %p712, %s36, 1
        %s714 = smul.addr %s713, 4
        %s715 = smul.addr %s714, 4
        %s716 = scalar_lea.vmem %s8, %s715
        %p717 = pneg %p274
        %p718 = pneg %p271
        %p719 = scmp.lt.s32.totalorder %s36, 1
        %s720 = scalar_select %p719, %s36, 1
        %s721 = scalar_lea.vmem %s9, %s720
        %p722 = pneg %p300
        %p723 = pneg %p297
        %p724 = scmp.lt.s32.totalorder %s36, 1
        %s725 = scalar_select %p724, %s36, 1
        %s726 = scalar_lea.vmem %s10, %s725
        %p727 = pneg %p326
        %p728 = pneg %p323
        %p729 = scmp.lt.s32.totalorder %s36, 1
        %s730 = scalar_select %p729, %s36, 1
        %s731 = smul.addr %s730, 4
        %s732 = smul.addr %s731, 4
        %s733 = scalar_lea.vmem %s11, %s732
        %p734 = pneg %p352
        %p735 = pneg %p349
        %p736 = scmp.lt.s32.totalorder %s36, 1
        %s737 = scalar_select %p736, %s36, 1
        %s738 = scalar_lea.vmem %s12, %s737
        %p739 = pneg %p378
        %p740 = pneg %p375
        %p741 = scmp.lt.s32.totalorder %s36, 1
        %s742 = scalar_select %p741, %s36, 1
        %s743 = smul.addr %s742, 8
        %s744 = smul.addr %s743, 4
        %s745 = scalar_lea.vmem %s13, %s744
        %p746 = pneg %p404
        %p747 = pneg %p401
        %p748 = scmp.lt.s32.totalorder %s36, 1
        %s749 = scalar_select %p748, %s36, 1
        %s750 = scalar_lea.vmem %s14, %s749
        %p751 = pneg %p430
        %p752 = pneg %p427
        %p753 = scmp.lt.s32.totalorder %s36, 1
        %s754 = scalar_select %p753, %s36, 1
        %s755 = scalar_lea.vmem %s15, %s754
        %p756 = pneg %p456
        %p757 = pneg %p453
        %p758 = scmp.lt.s32.totalorder %s36, 1
        %s759 = scalar_select %p758, %s36, 1
        %s760 = scalar_lea.vmem %s16, %s759
        %p761 = pneg %p482
        %p762 = pneg %p479
        %p763 = pneg %p508
        %p764 = pneg %p505
        %s765 = sand.u32 %s495, 1
        %s766 = scalar_lea.sflag [#allocation4], %s765
        %s767 = sand.u32 %s495, 1
        %s768 = smul.addr %s767, 8
        %s769 = scalar_lea.vmem [#allocation3], %s768
        %p770 = scmp.lt.s32.totalorder %s35, 1
        %s771 = scalar_select %p770, %s35, 1
        %s772 = smul.addr %s771, 8
        %s773 = scalar_lea.vmem %s0, %s772
        %p774 = scmp.lt.s32.totalorder %s36, 1
        %s775 = scalar_select %p774, %s36, 1
        %p776 = scmp.lt.s32.totalorder %s35, 1
        %s777 = scalar_select %p776, %s35, 1
        %s778 = smul.addr %s777, 2
        %s779 = smul.addr %s775, 4
        %s780 = sadd.s32 %s778, %s779
        %s781 = smul.addr %s780, 8
        %s782 = scalar_lea.vmem %s1, %s781
        %p783 = scmp.lt.s32.totalorder %s36, 1
        %s784 = scalar_select %p783, %s36, 1
        %s785 = smul.addr %s784, 48
        %s786 = smul.addr %s785, 4
        %s787 = scalar_lea.vmem %s2, %s786
        %p788 = scmp.lt.s32.totalorder %s36, 1
        %s789 = scalar_select %p788, %s36, 1
        %s790 = smul.addr %s789, 4
        %s791 = smul.addr %s790, 4
        %s792 = scalar_lea.vmem %s3, %s791
        %p793 = scmp.lt.s32.totalorder %s36, 1
        %s794 = scalar_select %p793, %s36, 1
        %s795 = scalar_lea.vmem %s4, %s794
        %p796 = scmp.lt.s32.totalorder %s36, 1
        %s797 = scalar_select %p796, %s36, 1
        %s798 = scalar_lea.vmem %s5, %s797
        %p799 = scmp.lt.s32.totalorder %s36, 1
        %s800 = scalar_select %p799, %s36, 1
        %s801 = smul.addr %s800, 16
        %s802 = smul.addr %s801, 4
        %s803 = scalar_lea.vmem %s6, %s802
        %p804 = scmp.lt.s32.totalorder %s36, 1
        %s805 = scalar_select %p804, %s36, 1
        %s806 = smul.addr %s805, 32
        %s807 = smul.addr %s806, 4
        %s808 = scalar_lea.vmem %s7, %s807
        %p809 = scmp.lt.s32.totalorder %s36, 1
        %s810 = scalar_select %p809, %s36, 1
        %s811 = smul.addr %s810, 4
        %s812 = smul.addr %s811, 4
        %s813 = scalar_lea.vmem %s8, %s812
        %p814 = scmp.lt.s32.totalorder %s36, 1
        %s815 = scalar_select %p814, %s36, 1
        %s816 = scalar_lea.vmem %s9, %s815
        %p817 = scmp.lt.s32.totalorder %s36, 1
        %s818 = scalar_select %p817, %s36, 1
        %s819 = scalar_lea.vmem %s10, %s818
        %p820 = scmp.lt.s32.totalorder %s36, 1
        %s821 = scalar_select %p820, %s36, 1
        %s822 = smul.addr %s821, 4
        %s823 = smul.addr %s822, 4
        %s824 = scalar_lea.vmem %s11, %s823
        %p825 = scmp.lt.s32.totalorder %s36, 1
        %s826 = scalar_select %p825, %s36, 1
        %s827 = scalar_lea.vmem %s12, %s826
        %p828 = scmp.lt.s32.totalorder %s36, 1
        %s829 = scalar_select %p828, %s36, 1
        %s830 = smul.addr %s829, 8
        %s831 = smul.addr %s830, 4
        %s832 = scalar_lea.vmem %s13, %s831
        %p833 = scmp.lt.s32.totalorder %s36, 1
        %s834 = scalar_select %p833, %s36, 1
        %s835 = scalar_lea.vmem %s14, %s834
        %p836 = scmp.lt.s32.totalorder %s36, 1
        %s837 = scalar_select %p836, %s36, 1
        %s838 = scalar_lea.vmem %s15, %s837
        %p839 = scmp.lt.s32.totalorder %s36, 1
        %s840 = scalar_select %p839, %s36, 1
        %s841 = scalar_lea.vmem %s16, %s840
        %p843 = scmp.eq.s32.totalorder %s36, 0
        // Predicated region
        $region89: #{decoder_forward.1} parent=87 // pred_check
          %p844 = pneg %p843
        $region90: #{decoder_forward.1} parent=87 // pred_check_branch
          %846 = sbr.rel (%p844) target = $region92
        $region91: #{decoder_forward.1} parent=87 // pred_region
          %v847 = vld [vmem:[%s773] sm:$0xff]
          %vm848 = vcmask 261120
          %849 = vst.msk [vmem:[#allocation2] sm:$0xff] %vm848, %v847
        $region92: #{decoder_forward.1} parent=87 // pred_fallthru
          _
        %v850 = vld [vmem:[#allocation2] sm:$0xff]
        %v851 = vld [vmem:[%s782] sm:$0xff]
        %v852 = vld [vmem:[%s782 + $0x8] sm:$0xf]
        %v853 = vlaneseq
        %v854 = vshrl.u32 %v853, 7
        %v855 = vlaneseq
        %v856 = vand.u32 %v855, 127
        %vm857 = vcmp.gt.s32.totalorder %v856, %v854
        %v858 = vsel %vm857, 1.7677669e+09, 0.0
        %v859 = vld [vmem:[%s787] sm:$0xf]
        %v860 = vld [vmem:[%s787 + $0x4] sm:$0xf]
        %v861 = vld [vmem:[%s787 + $0x8] sm:$0xf]
        %v862 = vld [vmem:[%s787 + $0xc] sm:$0xf]
        %v863 = vld [vmem:[%s787 + $0x10] sm:$0xf]
        %v864 = vld [vmem:[%s787 + $0x14] sm:$0xf]
        %v865 = vld [vmem:[%s787 + $0x18] sm:$0xf]
        %v866 = vld [vmem:[%s787 + $0x1c] sm:$0xf]
        %v867 = vld [vmem:[%s787 + $0x20] sm:$0xf]
        %v868 = vld [vmem:[%s787 + $0x24] sm:$0xf]
        %v869 = vld [vmem:[%s787 + $0x28] sm:$0xf]
        %v870 = vld [vmem:[%s787 + $0x2c] sm:$0xf]
        %v871 = vld [vmem:[%s787 + $0x30] sm:$0xf]
        %v872 = vld [vmem:[%s787 + $0x34] sm:$0xf]
        %v873 = vld [vmem:[%s787 + $0x38] sm:$0xf]
        %v874 = vld [vmem:[%s787 + $0x3c] sm:$0xf]
        %v875 = vld [vmem:[%s787 + $0x40] sm:$0xf]
        %v876 = vld [vmem:[%s787 + $0x44] sm:$0xf]
        %v877 = vld [vmem:[%s787 + $0x48] sm:$0xf]
        %v878 = vld [vmem:[%s787 + $0x4c] sm:$0xf]
        %v879 = vld [vmem:[%s787 + $0x50] sm:$0xf]
        %v880 = vld [vmem:[%s787 + $0x54] sm:$0xf]
        %v881 = vld [vmem:[%s787 + $0x58] sm:$0xf]
        %v882 = vld [vmem:[%s787 + $0x5c] sm:$0xf]
        %v883 = vld [vmem:[%s787 + $0x60] sm:$0xf]
        %v884 = vld [vmem:[%s787 + $0x64] sm:$0xf]
        %v885 = vld [vmem:[%s787 + $0x68] sm:$0xf]
        %v886 = vld [vmem:[%s787 + $0x6c] sm:$0xf]
        %v887 = vld [vmem:[%s787 + $0x70] sm:$0xf]
        %v888 = vld [vmem:[%s787 + $0x74] sm:$0xf]
        %v889 = vld [vmem:[%s787 + $0x78] sm:$0xf]
        %v890 = vld [vmem:[%s787 + $0x7c] sm:$0xf]
        %v891 = vld [vmem:[%s787 + $0x80] sm:$0xf]
        %v892 = vld [vmem:[%s787 + $0x84] sm:$0xf]
        %v893 = vld [vmem:[%s787 + $0x88] sm:$0xf]
        %v894 = vld [vmem:[%s787 + $0x8c] sm:$0xf]
        %v895 = vld [vmem:[%s787 + $0x90] sm:$0xf]
        %v896 = vld [vmem:[%s787 + $0x94] sm:$0xf]
        %v897 = vld [vmem:[%s787 + $0x98] sm:$0xf]
        %v898 = vld [vmem:[%s787 + $0x9c] sm:$0xf]
        %v899 = vld [vmem:[%s787 + $0xa0] sm:$0xf]
        %v900 = vld [vmem:[%s787 + $0xa4] sm:$0xf]
        %v901 = vld [vmem:[%s787 + $0xa8] sm:$0xf]
        %v902 = vld [vmem:[%s787 + $0xac] sm:$0xf]
        %v903 = vld [vmem:[%s787 + $0xb0] sm:$0xf]
        %v904 = vld [vmem:[%s787 + $0xb4] sm:$0xf]
        %v905 = vld [vmem:[%s787 + $0xb8] sm:$0xf]
        %v906 = vld [vmem:[%s787 + $0xbc] sm:$0xf]
        %v907 = vpack.c.bf16 %v850, %v850
        %v912 = vunpack.c.l.b16 %v859
        %v913 = vunpack.c.l.b16 %v860
        %v914 = vunpack.c.l.b16 %v861
        %v915 = vunpack.c.l.b16 %v862
        %v916 = vpack.c.b16 %v913, %v912
        %v917 = vpack.c.b16 %v915, %v914
        %vm920 = vcmask 261120
        %v922 = vsel %vm920, %v907, 0
        %924 = vmatprep.subr.bf16.mxu0 0
        %925 = vmatpush1.bf16.msra.mxu0 %v916
        %926 = vmatprep.subr.bf16.mxu0 0
        %927 = vmatpush1.bf16.msra.mxu0 %v917
        %928 = vmatprep.subr.bf16.mxu0 0
        %929 = vmatpush1.bf16.msra.mxu0 0
        %930 = vmatprep.subr.bf16.mxu0 0
        %931 = vmatpush1.bf16.msra.mxu0 0
        %932 = vmatprep.subr.bf16.mxu0 0
        %933 = vmatpush1.bf16.msra.mxu0 0
        %934 = vmatprep.subr.bf16.mxu0 0
        %935 = vmatpush1.bf16.msra.mxu0 0
        %936 = vmatprep.subr.bf16.mxu0 0
        %937 = vmatpush1.bf16.msra.mxu0 0
        %938 = vmatprep.subr.bf16.mxu0 0
        %939 = vmatpush1.bf16.msra.mxu0 0
        %940 = vmatprep.subr.bf16.mxu0 0
        %941 = vmatpush1.bf16.msra.mxu0 0
        %942 = vmatprep.subr.bf16.mxu0 0
        %943 = vmatpush1.bf16.msra.mxu0 0
        %944 = vmatprep.subr.bf16.mxu0 0
        %945 = vmatpush1.bf16.msra.mxu0 0
        %946 = vmatprep.subr.bf16.mxu0 0
        %947 = vmatpush1.bf16.msra.mxu0 0
        %948 = vmatprep.subr.bf16.mxu0 0
        %949 = vmatpush1.bf16.msra.mxu0 0
        %950 = vmatprep.subr.bf16.mxu0 0
        %951 = vmatpush1.bf16.msra.mxu0 0
        %952 = vmatprep.subr.bf16.mxu0 0
        %953 = vmatpush1.bf16.msra.mxu0 0
        %954 = vmatprep.subr.bf16.mxu0 0
        %955 = vmatpush1.bf16.msra.mxu0 0
        %956 = vmatprep.mubr.bf16.mxu0 0
        %957 = vmatmul.mubr.bf16.gmra.mrb[0].mxu0 %v922
        %v958 = vpop.f32.mrb[0].mxu0
        %v959 = vadd.f32 0.0, %v958
        %v960 = vpop.f32.mrb[0].mxu0
        %v961 = vpop.f32.mrb[0].mxu0
        %v962 = vpop.f32.mrb[0].mxu0
        %963 = vdwg.mxu0
        %v968 = vunpack.c.l.b16 %v863
        %v969 = vunpack.c.l.b16 %v864
        %v970 = vunpack.c.l.b16 %v865
        %v971 = vunpack.c.l.b16 %v866
        %v972 = vpack.c.b16 %v969, %v968
        %v973 = vpack.c.b16 %v971, %v970
        %976 = vmatprep.subr.bf16.mxu0 0
        %977 = vmatpush1.bf16.msra.mxu0 %v972
        %978 = vmatprep.subr.bf16.mxu0 0
        %979 = vmatpush1.bf16.msra.mxu0 %v973
        %980 = vmatprep.subr.bf16.mxu0 0
        %981 = vmatpush1.bf16.msra.mxu0 0
        %982 = vmatprep.subr.bf16.mxu0 0
        %983 = vmatpush1.bf16.msra.mxu0 0
        %984 = vmatprep.subr.bf16.mxu0 0
        %985 = vmatpush1.bf16.msra.mxu0 0
        %986 = vmatprep.subr.bf16.mxu0 0
        %987 = vmatpush1.bf16.msra.mxu0 0
        %988 = vmatprep.subr.bf16.mxu0 0
        %989 = vmatpush1.bf16.msra.mxu0 0
        %990 = vmatprep.subr.bf16.mxu0 0
        %991 = vmatpush1.bf16.msra.mxu0 0
        %992 = vmatprep.subr.bf16.mxu0 0
        %993 = vmatpush1.bf16.msra.mxu0 0
        %994 = vmatprep.subr.bf16.mxu0 0
        %995 = vmatpush1.bf16.msra.mxu0 0
        %996 = vmatprep.subr.bf16.mxu0 0
        %997 = vmatpush1.bf16.msra.mxu0 0
        %998 = vmatprep.subr.bf16.mxu0 0
        %999 = vmatpush1.bf16.msra.mxu0 0
        %1000 = vmatprep.subr.bf16.mxu0 0
        %1001 = vmatpush1.bf16.msra.mxu0 0
        %1002 = vmatprep.subr.bf16.mxu0 0
        %1003 = vmatpush1.bf16.msra.mxu0 0
        %1004 = vmatprep.subr.bf16.mxu0 0
        %1005 = vmatpush1.bf16.msra.mxu0 0
        %1006 = vmatprep.subr.bf16.mxu0 0
        %1007 = vmatpush1.bf16.msra.mxu0 0
        %1008 = vmatprep.mubr.bf16.mxu0 0
        %1009 = vmatmul.mubr.bf16.gmra.mrb[0].mxu0 %v922
        %v1010 = vpop.f32.mrb[0].mxu0
        %v1011 = vadd.f32 0.0, %v1010
        %v1012 = vpop.f32.mrb[0].mxu0
        %v1013 = vpop.f32.mrb[0].mxu0
        %v1014 = vpop.f32.mrb[0].mxu0
        %1015 = vdwg.mxu0
        %v1020 = vunpack.c.l.b16 %v867
        %v1021 = vunpack.c.l.b16 %v868
        %v1022 = vunpack.c.l.b16 %v869
        %v1023 = vunpack.c.l.b16 %v870
        %v1024 = vpack.c.b16 %v1021, %v1020
        %v1025 = vpack.c.b16 %v1023, %v1022
        %1028 = vmatprep.subr.bf16.mxu0 0
        %1029 = vmatpush1.bf16.msra.mxu0 %v1024
        %1030 = vmatprep.subr.bf16.mxu0 0
        %1031 = vmatpush1.bf16.msra.mxu0 %v1025
        %1032 = vmatprep.subr.bf16.mxu0 0
        %1033 = vmatpush1.bf16.msra.mxu0 0
        %1034 = vmatprep.subr.bf16.mxu0 0
        %1035 = vmatpush1.bf16.msra.mxu0 0
        %1036 = vmatprep.subr.bf16.mxu0 0
        %1037 = vmatpush1.bf16.msra.mxu0 0
        %1038 = vmatprep.subr.bf16.mxu0 0
        %1039 = vmatpush1.bf16.msra.mxu0 0
        %1040 = vmatprep.subr.bf16.mxu0 0
        %1041 = vmatpush1.bf16.msra.mxu0 0
        %1042 = vmatprep.subr.bf16.mxu0 0
        %1043 = vmatpush1.bf16.msra.mxu0 0
        %1044 = vmatprep.subr.bf16.mxu0 0
        %1045 = vmatpush1.bf16.msra.mxu0 0
        %1046 = vmatprep.subr.bf16.mxu0 0
        %1047 = vmatpush1.bf16.msra.mxu0 0
        %1048 = vmatprep.subr.bf16.mxu0 0
        %1049 = vmatpush1.bf16.msra.mxu0 0
        %1050 = vmatprep.subr.bf16.mxu0 0
        %1051 = vmatpush1.bf16.msra.mxu0 0
        %1052 = vmatprep.subr.bf16.mxu0 0
        %1053 = vmatpush1.bf16.msra.mxu0 0
        %1054 = vmatprep.subr.bf16.mxu0 0
        %1055 = vmatpush1.bf16.msra.mxu0 0
        %1056 = vmatprep.subr.bf16.mxu0 0
        %1057 = vmatpush1.bf16.msra.mxu0 0
        %1058 = vmatprep.subr.bf16.mxu0 0
        %1059 = vmatpush1.bf16.msra.mxu0 0
        %1060 = vmatprep.mubr.bf16.mxu0 0
        %1061 = vmatmul.mubr.bf16.gmra.mrb[0].mxu0 %v922
        %v1062 = vpop.f32.mrb[0].mxu0
        %v1063 = vadd.f32 0.0, %v1062
        %v1064 = vpop.f32.mrb[0].mxu0
        %v1065 = vpop.f32.mrb[0].mxu0
        %v1066 = vpop.f32.mrb[0].mxu0
        %1067 = vdwg.mxu0
        %v1072 = vunpack.c.l.b16 %v871
        %v1073 = vunpack.c.l.b16 %v872
        %v1074 = vunpack.c.l.b16 %v873
        %v1075 = vunpack.c.l.b16 %v874
        %v1076 = vpack.c.b16 %v1073, %v1072
        %v1077 = vpack.c.b16 %v1075, %v1074
        %1080 = vmatprep.subr.bf16.mxu0 0
        %1081 = vmatpush1.bf16.msra.mxu0 %v1076
        %1082 = vmatprep.subr.bf16.mxu0 0
        %1083 = vmatpush1.bf16.msra.mxu0 %v1077
        %1084 = vmatprep.subr.bf16.mxu0 0
        %1085 = vmatpush1.bf16.msra.mxu0 0
        %1086 = vmatprep.subr.bf16.mxu0 0
        %1087 = vmatpush1.bf16.msra.mxu0 0
        %1088 = vmatprep.subr.bf16.mxu0 0
        %1089 = vmatpush1.bf16.msra.mxu0 0
        %1090 = vmatprep.subr.bf16.mxu0 0
        %1091 = vmatpush1.bf16.msra.mxu0 0
        %1092 = vmatprep.subr.bf16.mxu0 0
        %1093 = vmatpush1.bf16.msra.mxu0 0
        %1094 = vmatprep.subr.bf16.mxu0 0
        %1095 = vmatpush1.bf16.msra.mxu0 0
        %1096 = vmatprep.subr.bf16.mxu0 0
        %1097 = vmatpush1.bf16.msra.mxu0 0
        %1098 = vmatprep.subr.bf16.mxu0 0
        %1099 = vmatpush1.bf16.msra.mxu0 0
        %1100 = vmatprep.subr.bf16.mxu0 0
        %1101 = vmatpush1.bf16.msra.mxu0 0
        %1102 = vmatprep.subr.bf16.mxu0 0
        %1103 = vmatpush1.bf16.msra.mxu0 0
        %1104 = vmatprep.subr.bf16.mxu0 0
        %1105 = vmatpush1.bf16.msra.mxu0 0
        %1106 = vmatprep.subr.bf16.mxu0 0
        %1107 = vmatpush1.bf16.msra.mxu0 0
        %1108 = vmatprep.subr.bf16.mxu0 0
        %1109 = vmatpush1.bf16.msra.mxu0 0
        %1110 = vmatprep.subr.bf16.mxu0 0
        %1111 = vmatpush1.bf16.msra.mxu0 0
        %1112 = vmatprep.mubr.bf16.mxu0 0
        %1113 = vmatmul.mubr.bf16.gmra.mrb[0].mxu0 %v922
        %v1114 = vpop.f32.mrb[0].mxu0
        %v1115 = vadd.f32 0.0, %v1114
        %v1116 = vpop.f32.mrb[0].mxu0
        %v1117 = vpop.f32.mrb[0].mxu0
        %v1118 = vpop.f32.mrb[0].mxu0
        %1119 = vdwg.mxu0
        %v1124 = vunpack.c.l.b16 %v875
        %v1125 = vunpack.c.l.b16 %v876
        %v1126 = vunpack.c.l.b16 %v877
        %v1127 = vunpack.c.l.b16 %v878
        %v1128 = vpack.c.b16 %v1125, %v1124
        %v1129 = vpack.c.b16 %v1127, %v1126
        %1132 = vmatprep.subr.bf16.mxu0 0
        %1133 = vmatpush1.bf16.msra.mxu0 %v1128
        %1134 = vmatprep.subr.bf16.mxu0 0
        %1135 = vmatpush1.bf16.msra.mxu0 %v1129
        %1136 = vmatprep.subr.bf16.mxu0 0
        %1137 = vmatpush1.bf16.msra.mxu0 0
        %1138 = vmatprep.subr.bf16.mxu0 0
        %1139 = vmatpush1.bf16.msra.mxu0 0
        %1140 = vmatprep.subr.bf16.mxu0 0
        %1141 = vmatpush1.bf16.msra.mxu0 0
        %1142 = vmatprep.subr.bf16.mxu0 0
        %1143 = vmatpush1.bf16.msra.mxu0 0
        %1144 = vmatprep.subr.bf16.mxu0 0
        %1145 = vmatpush1.bf16.msra.mxu0 0
        %1146 = vmatprep.subr.bf16.mxu0 0
        %1147 = vmatpush1.bf16.msra.mxu0 0
        %1148 = vmatprep.subr.bf16.mxu0 0
        %1149 = vmatpush1.bf16.msra.mxu0 0
        %1150 = vmatprep.subr.bf16.mxu0 0
        %1151 = vmatpush1.bf16.msra.mxu0 0
        %1152 = vmatprep.subr.bf16.mxu0 0
        %1153 = vmatpush1.bf16.msra.mxu0 0
        %1154 = vmatprep.subr.bf16.mxu0 0
        %1155 = vmatpush1.bf16.msra.mxu0 0
        %1156 = vmatprep.subr.bf16.mxu0 0
        %1157 = vmatpush1.bf16.msra.mxu0 0
        %1158 = vmatprep.subr.bf16.mxu0 0
        %1159 = vmatpush1.bf16.msra.mxu0 0
        %1160 = vmatprep.subr.bf16.mxu0 0
        %1161 = vmatpush1.bf16.msra.mxu0 0
        %1162 = vmatprep.subr.bf16.mxu0 0
        %1163 = vmatpush1.bf16.msra.mxu0 0
        %1164 = vmatprep.mubr.bf16.mxu0 0
        %1165 = vmatmul.mubr.bf16.gmra.mrb[0].mxu0 %v922
        %v1166 = vpop.f32.mrb[0].mxu0
        %v1167 = vadd.f32 0.0, %v1166
        %v1168 = vpop.f32.mrb[0].mxu0
        %v1169 = vpop.f32.mrb[0].mxu0
        %v1170 = vpop.f32.mrb[0].mxu0
        %1171 = vdwg.mxu0
        %v1176 = vunpack.c.l.b16 %v879
        %v1177 = vunpack.c.l.b16 %v880
        %v1178 = vunpack.c.l.b16 %v881
        %v1179 = vunpack.c.l.b16 %v882
        %v1180 = vpack.c.b16 %v1177, %v1176
        %v1181 = vpack.c.b16 %v1179, %v1178
        %1184 = vmatprep.subr.bf16.mxu0 0
        %1185 = vmatpush1.bf16.msra.mxu0 %v1180
        %1186 = vmatprep.subr.bf16.mxu0 0
        %1187 = vmatpush1.bf16.msra.mxu0 %v1181
        %1188 = vmatprep.subr.bf16.mxu0 0
        %1189 = vmatpush1.bf16.msra.mxu0 0
        %1190 = vmatprep.subr.bf16.mxu0 0
        %1191 = vmatpush1.bf16.msra.mxu0 0
        %1192 = vmatprep.subr.bf16.mxu0 0
        %1193 = vmatpush1.bf16.msra.mxu0 0
        %1194 = vmatprep.subr.bf16.mxu0 0
        %1195 = vmatpush1.bf16.msra.mxu0 0
        %1196 = vmatprep.subr.bf16.mxu0 0
        %1197 = vmatpush1.bf16.msra.mxu0 0
        %1198 = vmatprep.subr.bf16.mxu0 0
        %1199 = vmatpush1.bf16.msra.mxu0 0
        %1200 = vmatprep.subr.bf16.mxu0 0
        %1201 = vmatpush1.bf16.msra.mxu0 0
        %1202 = vmatprep.subr.bf16.mxu0 0
        %1203 = vmatpush1.bf16.msra.mxu0 0
        %1204 = vmatprep.subr.bf16.mxu0 0
        %1205 = vmatpush1.bf16.msra.mxu0 0
        %1206 = vmatprep.subr.bf16.mxu0 0
        %1207 = vmatpush1.bf16.msra.mxu0 0
        %1208 = vmatprep.subr.bf16.mxu0 0
        %1209 = vmatpush1.bf16.msra.mxu0 0
        %1210 = vmatprep.subr.bf16.mxu0 0
        %1211 = vmatpush1.bf16.msra.mxu0 0
        %1212 = vmatprep.subr.bf16.mxu0 0
        %1213 = vmatpush1.bf16.msra.mxu0 0
        %1214 = vmatprep.subr.bf16.mxu0 0
        %1215 = vmatpush1.bf16.msra.mxu0 0
        %1216 = vmatprep.mubr.bf16.mxu0 0
        %1217 = vmatmul.mubr.bf16.gmra.mrb[0].mxu0 %v922
        %v1218 = vpop.f32.mrb[0].mxu0
        %v1219 = vadd.f32 0.0, %v1218
        %v1220 = vpop.f32.mrb[0].mxu0
        %v1221 = vpop.f32.mrb[0].mxu0
        %v1222 = vpop.f32.mrb[0].mxu0
        %1223 = vdwg.mxu0
        %v1228 = vunpack.c.l.b16 %v883
        %v1229 = vunpack.c.l.b16 %v884
        %v1230 = vunpack.c.l.b16 %v885
        %v1231 = vunpack.c.l.b16 %v886
        %v1232 = vpack.c.b16 %v1229, %v1228
        %v1233 = vpack.c.b16 %v1231, %v1230
        %1236 = vmatprep.subr.bf16.mxu0 0
        %1237 = vmatpush1.bf16.msra.mxu0 %v1232
        %1238 = vmatprep.subr.bf16.mxu0 0
        %1239 = vmatpush1.bf16.msra.mxu0 %v1233
        %1240 = vmatprep.subr.bf16.mxu0 0
        %1241 = vmatpush1.bf16.msra.mxu0 0
        %1242 = vmatprep.subr.bf16.mxu0 0
        %1243 = vmatpush1.bf16.msra.mxu0 0
        %1244 = vmatprep.subr.bf16.mxu0 0
        %1245 = vmatpush1.bf16.msra.mxu0 0
        %1246 = vmatprep.subr.bf16.mxu0 0
        %1247 = vmatpush1.bf16.msra.mxu0 0
        %1248 = vmatprep.subr.bf16.mxu0 0
        %1249 = vmatpush1.bf16.msra.mxu0 0
        %1250 = vmatprep.subr.bf16.mxu0 0
        %1251 = vmatpush1.bf16.msra.mxu0 0
        %1252 = vmatprep.subr.bf16.mxu0 0
        %1253 = vmatpush1.bf16.msra.mxu0 0
        %1254 = vmatprep.subr.bf16.mxu0 0
        %1255 = vmatpush1.bf16.msra.mxu0 0
        %1256 = vmatprep.subr.bf16.mxu0 0
        %1257 = vmatpush1.bf16.msra.mxu0 0
        %1258 = vmatprep.subr.bf16.mxu0 0
        %1259 = vmatpush1.bf16.msra.mxu0 0
        %1260 = vmatprep.subr.bf16.mxu0 0
        %1261 = vmatpush1.bf16.msra.mxu0 0
        %1262 = vmatprep.subr.bf16.mxu0 0
        %1263 = vmatpush1.bf16.msra.mxu0 0
        %1264 = vmatprep.subr.bf16.mxu0 0
        %1265 = vmatpush1.bf16.msra.mxu0 0
        %1266 = vmatprep.subr.bf16.mxu0 0
        %1267 = vmatpush1.bf16.msra.mxu0 0
        %1268 = vmatprep.mubr.bf16.mxu0 0
        %1269 = vmatmul.mubr.bf16.gmra.mrb[0].mxu0 %v922
        %v1270 = vpop.f32.mrb[0].mxu0
        %v1271 = vadd.f32 0.0, %v1270
        %v1272 = vpop.f32.mrb[0].mxu0
        %v1273 = vpop.f32.mrb[0].mxu0
        %v1274 = vpop.f32.mrb[0].mxu0
        %1275 = vdwg.mxu0
        %v1280 = vunpack.c.l.b16 %v887
        %v1281 = vunpack.c.l.b16 %v888
        %v1282 = vunpack.c.l.b16 %v889
        %v1283 = vunpack.c.l.b16 %v890
        %v1284 = vpack.c.b16 %v1281, %v1280
        %v1285 = vpack.c.b16 %v1283, %v1282
        %1288 = vmatprep.subr.bf16.mxu0 0
        %1289 = vmatpush1.bf16.msra.mxu0 %v1284
        %1290 = vmatprep.subr.bf16.mxu0 0
        %1291 = vmatpush1.bf16.msra.mxu0 %v1285
        %1292 = vmatprep.subr.bf16.mxu0 0
        %1293 = vmatpush1.bf16.msra.mxu0 0
        %1294 = vmatprep.subr.bf16.mxu0 0
        %1295 = vmatpush1.bf16.msra.mxu0 0
        %1296 = vmatprep.subr.bf16.mxu0 0
        %1297 = vmatpush1.bf16.msra.mxu0 0
        %1298 = vmatprep.subr.bf16.mxu0 0
        %1299 = vmatpush1.bf16.msra.mxu0 0
        %1300 = vmatprep.subr.bf16.mxu0 0
        %1301 = vmatpush1.bf16.msra.mxu0 0
        %1302 = vmatprep.subr.bf16.mxu0 0
        %1303 = vmatpush1.bf16.msra.mxu0 0
        %1304 = vmatprep.subr.bf16.mxu0 0
        %1305 = vmatpush1.bf16.msra.mxu0 0
        %1306 = vmatprep.subr.bf16.mxu0 0
        %1307 = vmatpush1.bf16.msra.mxu0 0
        %1308 = vmatprep.subr.bf16.mxu0 0
        %1309 = vmatpush1.bf16.msra.mxu0 0
        %1310 = vmatprep.subr.bf16.mxu0 0
        %1311 = vmatpush1.bf16.msra.mxu0 0
        %1312 = vmatprep.subr.bf16.mxu0 0
        %1313 = vmatpush1.bf16.msra.mxu0 0
        %1314 = vmatprep.subr.bf16.mxu0 0
        %1315 = vmatpush1.bf16.msra.mxu0 0
        %1316 = vmatprep.subr.bf16.mxu0 0
        %1317 = vmatpush1.bf16.msra.mxu0 0
        %1318 = vmatprep.subr.bf16.mxu0 0
        %1319 = vmatpush1.bf16.msra.mxu0 0
        %1320 = vmatprep.mubr.bf16.mxu0 0
        %1321 = vmatmul.mubr.bf16.gmra.mrb[0].mxu0 %v922
        %v1322 = vpop.f32.mrb[0].mxu0
        %v1323 = vadd.f32 0.0, %v1322
        %v1324 = vpop.f32.mrb[0].mxu0
        %v1325 = vpop.f32.mrb[0].mxu0
        %v1326 = vpop.f32.mrb[0].mxu0
        %1327 = vdwg.mxu0
        %v1332 = vunpack.c.l.b16 %v891
        %v1333 = vunpack.c.l.b16 %v892
        %v1334 = vunpack.c.l.b16 %v893
        %v1335 = vunpack.c.l.b16 %v894
        %v1336 = vpack.c.b16 %v1333, %v1332
        %v1337 = vpack.c.b16 %v1335, %v1334
        %1340 = vmatprep.subr.bf16.mxu0 0
        %1341 = vmatpush1.bf16.msra.mxu0 %v1336
        %1342 = vmatprep.subr.bf16.mxu0 0
        %1343 = vmatpush1.bf16.msra.mxu0 %v1337
        %1344 = vmatprep.subr.bf16.mxu0 0
        %1345 = vmatpush1.bf16.msra.mxu0 0
        %1346 = vmatprep.subr.bf16.mxu0 0
        %1347 = vmatpush1.bf16.msra.mxu0 0
        %1348 = vmatprep.subr.bf16.mxu0 0
        %1349 = vmatpush1.bf16.msra.mxu0 0
        %1350 = vmatprep.subr.bf16.mxu0 0
        %1351 = vmatpush1.bf16.msra.mxu0 0
        %1352 = vmatprep.subr.bf16.mxu0 0
        %1353 = vmatpush1.bf16.msra.mxu0 0
        %1354 = vmatprep.subr.bf16.mxu0 0
        %1355 = vmatpush1.bf16.msra.mxu0 0
        %1356 = vmatprep.subr.bf16.mxu0 0
        %1357 = vmatpush1.bf16.msra.mxu0 0
        %1358 = vmatprep.subr.bf16.mxu0 0
        %1359 = vmatpush1.bf16.msra.mxu0 0
        %1360 = vmatprep.subr.bf16.mxu0 0
        %1361 = vmatpush1.bf16.msra.mxu0 0
        %1362 = vmatprep.subr.bf16.mxu0 0
        %1363 = vmatpush1.bf16.msra.mxu0 0
        %1364 = vmatprep.subr.bf16.mxu0 0
        %1365 = vmatpush1.bf16.msra.mxu0 0
        %1366 = vmatprep.subr.bf16.mxu0 0
        %1367 = vmatpush1.bf16.msra.mxu0 0
        %1368 = vmatprep.subr.bf16.mxu0 0
        %1369 = vmatpush1.bf16.msra.mxu0 0
        %1370 = vmatprep.subr.bf16.mxu0 0
        %1371 = vmatpush1.bf16.msra.mxu0 0
        %1372 = vmatprep.mubr.bf16.mxu0 0
        %1373 = vmatmul.mubr.bf16.gmra.mrb[0].mxu0 %v922
        %v1374 = vpop.f32.mrb[0].mxu0
        %v1375 = vadd.f32 0.0, %v1374
        %v1376 = vpop.f32.mrb[0].mxu0
        %v1377 = vpop.f32.mrb[0].mxu0
        %v1378 = vpop.f32.mrb[0].mxu0
        %1379 = vdwg.mxu0
        %v1384 = vunpack.c.l.b16 %v895
        %v1385 = vunpack.c.l.b16 %v896
        %v1386 = vunpack.c.l.b16 %v897
        %v1387 = vunpack.c.l.b16 %v898
        %v1388 = vpack.c.b16 %v1385, %v1384
        %v1389 = vpack.c.b16 %v1387, %v1386
        %1392 = vmatprep.subr.bf16.mxu0 0
        %1393 = vmatpush1.bf16.msra.mxu0 %v1388
        %1394 = vmatprep.subr.bf16.mxu0 0
        %1395 = vmatpush1.bf16.msra.mxu0 %v1389
        %1396 = vmatprep.subr.bf16.mxu0 0
        %1397 = vmatpush1.bf16.msra.mxu0 0
        %1398 = vmatprep.subr.bf16.mxu0 0
        %1399 = vmatpush1.bf16.msra.mxu0 0
        %1400 = vmatprep.subr.bf16.mxu0 0
        %1401 = vmatpush1.bf16.msra.mxu0 0
        %1402 = vmatprep.subr.bf16.mxu0 0
        %1403 = vmatpush1.bf16.msra.mxu0 0
        %1404 = vmatprep.subr.bf16.mxu0 0
        %1405 = vmatpush1.bf16.msra.mxu0 0
        %1406 = vmatprep.subr.bf16.mxu0 0
        %1407 = vmatpush1.bf16.msra.mxu0 0
        %1408 = vmatprep.subr.bf16.mxu0 0
        %1409 = vmatpush1.bf16.msra.mxu0 0
        %1410 = vmatprep.subr.bf16.mxu0 0
        %1411 = vmatpush1.bf16.msra.mxu0 0
        %1412 = vmatprep.subr.bf16.mxu0 0
        %1413 = vmatpush1.bf16.msra.mxu0 0
        %1414 = vmatprep.subr.bf16.mxu0 0
        %1415 = vmatpush1.bf16.msra.mxu0 0
        %1416 = vmatprep.subr.bf16.mxu0 0
        %1417 = vmatpush1.bf16.msra.mxu0 0
        %1418 = vmatprep.subr.bf16.mxu0 0
        %1419 = vmatpush1.bf16.msra.mxu0 0
        %1420 = vmatprep.subr.bf16.mxu0 0
        %1421 = vmatpush1.bf16.msra.mxu0 0
        %1422 = vmatprep.subr.bf16.mxu0 0
        %1423 = vmatpush1.bf16.msra.mxu0 0
        %1424 = vmatprep.mubr.bf16.mxu0 0
        %1425 = vmatmul.mubr.bf16.gmra.mrb[0].mxu0 %v922
        %v1426 = vpop.f32.mrb[0].mxu0
        %v1427 = vadd.f32 0.0, %v1426
        %v1428 = vpop.f32.mrb[0].mxu0
        %v1429 = vpop.f32.mrb[0].mxu0
        %v1430 = vpop.f32.mrb[0].mxu0
        %1431 = vdwg.mxu0
        %v1436 = vunpack.c.l.b16 %v899
        %v1437 = vunpack.c.l.b16 %v900
        %v1438 = vunpack.c.l.b16 %v901
        %v1439 = vunpack.c.l.b16 %v902
        %v1440 = vpack.c.b16 %v1437, %v1436
        %v1441 = vpack.c.b16 %v1439, %v1438
        %1444 = vmatprep.subr.bf16.mxu0 0
        %1445 = vmatpush1.bf16.msra.mxu0 %v1440
        %1446 = vmatprep.subr.bf16.mxu0 0
        %1447 = vmatpush1.bf16.msra.mxu0 %v1441
        %1448 = vmatprep.subr.bf16.mxu0 0
        %1449 = vmatpush1.bf16.msra.mxu0 0
        %1450 = vmatprep.subr.bf16.mxu0 0
        %1451 = vmatpush1.bf16.msra.mxu0 0
        %1452 = vmatprep.subr.bf16.mxu0 0
        %1453 = vmatpush1.bf16.msra.mxu0 0
        %1454 = vmatprep.subr.bf16.mxu0 0
        %1455 = vmatpush1.bf16.msra.mxu0 0
        %1456 = vmatprep.subr.bf16.mxu0 0
        %1457 = vmatpush1.bf16.msra.mxu0 0
        %1458 = vmatprep.subr.bf16.mxu0 0
        %1459 = vmatpush1.bf16.msra.mxu0 0
        %1460 = vmatprep.subr.bf16.mxu0 0
        %1461 = vmatpush1.bf16.msra.mxu0 0
        %1462 = vmatprep.subr.bf16.mxu0 0
        %1463 = vmatpush1.bf16.msra.mxu0 0
        %1464 = vmatprep.subr.bf16.mxu0 0
        %1465 = vmatpush1.bf16.msra.mxu0 0
        %1466 = vmatprep.subr.bf16.mxu0 0
        %1467 = vmatpush1.bf16.msra.mxu0 0
        %1468 = vmatprep.subr.bf16.mxu0 0
        %1469 = vmatpush1.bf16.msra.mxu0 0
        %1470 = vmatprep.subr.bf16.mxu0 0
        %1471 = vmatpush1.bf16.msra.mxu0 0
        %1472 = vmatprep.subr.bf16.mxu0 0
        %1473 = vmatpush1.bf16.msra.mxu0 0
        %1474 = vmatprep.subr.bf16.mxu0 0
        %1475 = vmatpush1.bf16.msra.mxu0 0
        %1476 = vmatprep.mubr.bf16.mxu0 0
        %1477 = vmatmul.mubr.bf16.gmra.mrb[0].mxu0 %v922
        %v1478 = vpop.f32.mrb[0].mxu0
        %v1479 = vadd.f32 0.0, %v1478
        %v1480 = vpop.f32.mrb[0].mxu0
        %v1481 = vpop.f32.mrb[0].mxu0
        %v1482 = vpop.f32.mrb[0].mxu0
        %1483 = vdwg.mxu0
        %v1488 = vunpack.c.l.b16 %v903
        %v1489 = vunpack.c.l.b16 %v904
        %v1490 = vunpack.c.l.b16 %v905
        %v1491 = vunpack.c.l.b16 %v906
        %v1492 = vpack.c.b16 %v1489, %v1488
        %v1493 = vpack.c.b16 %v1491, %v1490
        %1496 = vmatprep.subr.bf16.mxu0 0
        %1497 = vmatpush1.bf16.msra.mxu0 %v1492
        %1498 = vmatprep.subr.bf16.mxu0 0
        %1499 = vmatpush1.bf16.msra.mxu0 %v1493
        %1500 = vmatprep.subr.bf16.mxu0 0
        %1501 = vmatpush1.bf16.msra.mxu0 0
        %1502 = vmatprep.subr.bf16.mxu0 0
        %1503 = vmatpush1.bf16.msra.mxu0 0
        %1504 = vmatprep.subr.bf16.mxu0 0
        %1505 = vmatpush1.bf16.msra.mxu0 0
        %1506 = vmatprep.subr.bf16.mxu0 0
        %1507 = vmatpush1.bf16.msra.mxu0 0
        %1508 = vmatprep.subr.bf16.mxu0 0
        %1509 = vmatpush1.bf16.msra.mxu0 0
        %1510 = vmatprep.subr.bf16.mxu0 0
        %1511 = vmatpush1.bf16.msra.mxu0 0
        %1512 = vmatprep.subr.bf16.mxu0 0
        %1513 = vmatpush1.bf16.msra.mxu0 0
        %1514 = vmatprep.subr.bf16.mxu0 0
        %1515 = vmatpush1.bf16.msra.mxu0 0
        %1516 = vmatprep.subr.bf16.mxu0 0
        %1517 = vmatpush1.bf16.msra.mxu0 0
        %1518 = vmatprep.subr.bf16.mxu0 0
        %1519 = vmatpush1.bf16.msra.mxu0 0
        %1520 = vmatprep.subr.bf16.mxu0 0
        %1521 = vmatpush1.bf16.msra.mxu0 0
        %1522 = vmatprep.subr.bf16.mxu0 0
        %1523 = vmatpush1.bf16.msra.mxu0 0
        %1524 = vmatprep.subr.bf16.mxu0 0
        %1525 = vmatpush1.bf16.msra.mxu0 0
        %1526 = vmatprep.subr.bf16.mxu0 0
        %1527 = vmatpush1.bf16.msra.mxu0 0
        %1528 = vmatprep.mubr.bf16.mxu0 0
        %1529 = vmatmul.mubr.bf16.gmra.mrb[0].mxu0 %v922
        %v1530 = vpop.f32.mrb[0].mxu0
        %v1531 = vadd.f32 0.0, %v1530
        %v1532 = vpop.f32.mrb[0].mxu0
        %v1533 = vpop.f32.mrb[0].mxu0
        %v1534 = vpop.f32.mrb[0].mxu0
        %1535 = vdwg.mxu0
        %v1536 = vpack.c.bf16 %v959, %v959
        %v1537 = vpack.c.bf16 %v1011, %v1011
        %v1538 = vpack.c.bf16 %v1063, %v1063
        %v1539 = vpack.c.bf16 %v1115, %v1115
        %v1540 = vpack.c.bf16 %v1167, %v1167
        %v1541 = vpack.c.bf16 %v1219, %v1219
        %v1542 = vpack.c.bf16 %v1271, %v1271
        %v1543 = vpack.c.bf16 %v1323, %v1323
        %vm1544 = vcmask 64512
        %v1546 = vsel %vm1544, %v1536, 0
        %v1549 = vsel %vm1544, %v1540, 0
        %1551 = vmatprep.subr.bf16.mxu0 0
        %1552 = vmatpush1.bf16.xpose.msra.mxu0 %v1549
        %1553 = vmatprep.subr.bf16.mxu0 0
        %1554 = vmatpush1.bf16.xpose.msra.mxu0 0
        %1555 = vmatprep.subr.bf16.mxu0 0
        %1556 = vmatpush1.bf16.xpose.msra.mxu0 0
        %1557 = vmatprep.subr.bf16.mxu0 0
        %1558 = vmatpush1.bf16.xpose.msra.mxu0 0
        %1559 = vmatprep.subr.bf16.mxu0 0
        %1560 = vmatpush1.bf16.xpose.msra.mxu0 0
        %1561 = vmatprep.subr.bf16.mxu0 0
        %1562 = vmatpush1.bf16.xpose.msra.mxu0 0
        %1563 = vmatprep.subr.bf16.mxu0 0
        %1564 = vmatpush1.bf16.xpose.msra.mxu0 0
        %1565 = vmatprep.subr.bf16.mxu0 0
        %1566 = vmatpush1.bf16.xpose.msra.mxu0 0
        %1567 = vmatprep.subr.bf16.mxu0 0
        %1568 = vmatpush1.bf16.xpose.msra.mxu0 0
        %1569 = vmatprep.subr.bf16.mxu0 0
        %1570 = vmatpush1.bf16.xpose.msra.mxu0 0
        %1571 = vmatprep.subr.bf16.mxu0 0
        %1572 = vmatpush1.bf16.xpose.msra.mxu0 0
        %1573 = vmatprep.subr.bf16.mxu0 0
        %1574 = vmatpush1.bf16.xpose.msra.mxu0 0
        %1575 = vmatprep.subr.bf16.mxu0 0
        %1576 = vmatpush1.bf16.xpose.msra.mxu0 0
        %1577 = vmatprep.subr.bf16.mxu0 0
        %1578 = vmatpush1.bf16.xpose.msra.mxu0 0
        %1579 = vmatprep.subr.bf16.mxu0 0
        %1580 = vmatpush1.bf16.xpose.msra.mxu0 0
        %1581 = vmatprep.subr.bf16.mxu0 0
        %1582 = vmatpush1.bf16.xpose.msra.mxu0 0
        %1583 = vmatprep.mubr.bf16.mxu0 0
        %1584 = vmatmul.mubr.bf16.gmra.mrb[0].mxu0 %v1546
        %v1585 = vpop.f32.mrb[0].mxu0
        %v1586 = vadd.f32 0.0, %v1585
        %v1587 = vpop.f32.mrb[0].mxu0
        %v1588 = vpop.f32.mrb[0].mxu0
        %v1589 = vpop.f32.mrb[0].mxu0
        %1590 = vdwg.mxu0
        %v1592 = vsel %vm1544, %v1537, 0
        %v1595 = vsel %vm1544, %v1541, 0
        %1597 = vmatprep.subr.bf16.mxu0 0
        %1598 = vmatpush1.bf16.xpose.msra.mxu0 %v1595
        %1599 = vmatprep.subr.bf16.mxu0 0
        %1600 = vmatpush1.bf16.xpose.msra.mxu0 0
        %1601 = vmatprep.subr.bf16.mxu0 0
        %1602 = vmatpush1.bf16.xpose.msra.mxu0 0
        %1603 = vmatprep.subr.bf16.mxu0 0
        %1604 = vmatpush1.bf16.xpose.msra.mxu0 0
        %1605 = vmatprep.subr.bf16.mxu0 0
        %1606 = vmatpush1.bf16.xpose.msra.mxu0 0
        %1607 = vmatprep.subr.bf16.mxu0 0
        %1608 = vmatpush1.bf16.xpose.msra.mxu0 0
        %1609 = vmatprep.subr.bf16.mxu0 0
        %1610 = vmatpush1.bf16.xpose.msra.mxu0 0
        %1611 = vmatprep.subr.bf16.mxu0 0
        %1612 = vmatpush1.bf16.xpose.msra.mxu0 0
        %1613 = vmatprep.subr.bf16.mxu0 0
        %1614 = vmatpush1.bf16.xpose.msra.mxu0 0
        %1615 = vmatprep.subr.bf16.mxu0 0
        %1616 = vmatpush1.bf16.xpose.msra.mxu0 0
        %1617 = vmatprep.subr.bf16.mxu0 0
        %1618 = vmatpush1.bf16.xpose.msra.mxu0 0
        %1619 = vmatprep.subr.bf16.mxu0 0
        %1620 = vmatpush1.bf16.xpose.msra.mxu0 0
        %1621 = vmatprep.subr.bf16.mxu0 0
        %1622 = vmatpush1.bf16.xpose.msra.mxu0 0
        %1623 = vmatprep.subr.bf16.mxu0 0
        %1624 = vmatpush1.bf16.xpose.msra.mxu0 0
        %1625 = vmatprep.subr.bf16.mxu0 0
        %1626 = vmatpush1.bf16.xpose.msra.mxu0 0
        %1627 = vmatprep.subr.bf16.mxu0 0
        %1628 = vmatpush1.bf16.xpose.msra.mxu0 0
        %1629 = vmatprep.mubr.bf16.mxu0 0
        %1630 = vmatmul.mubr.bf16.gmra.mrb[0].mxu0 %v1592
        %v1631 = vpop.f32.mrb[0].mxu0
        %v1632 = vadd.f32 0.0, %v1631
        %v1633 = vpop.f32.mrb[0].mxu0
        %v1634 = vpop.f32.mrb[0].mxu0
        %v1635 = vpop.f32.mrb[0].mxu0
        %1636 = vdwg.mxu0
        %v1638 = vsel %vm1544, %v1538, 0
        %v1641 = vsel %vm1544, %v1542, 0
        %1643 = vmatprep.subr.bf16.mxu0 0
        %1644 = vmatpush1.bf16.xpose.msra.mxu0 %v1641
        %1645 = vmatprep.subr.bf16.mxu0 0
        %1646 = vmatpush1.bf16.xpose.msra.mxu0 0
        %1647 = vmatprep.subr.bf16.mxu0 0
        %1648 = vmatpush1.bf16.xpose.msra.mxu0 0
        %1649 = vmatprep.subr.bf16.mxu0 0
        %1650 = vmatpush1.bf16.xpose.msra.mxu0 0
        %1651 = vmatprep.subr.bf16.mxu0 0
        %1652 = vmatpush1.bf16.xpose.msra.mxu0 0
        %1653 = vmatprep.subr.bf16.mxu0 0
        %1654 = vmatpush1.bf16.xpose.msra.mxu0 0
        %1655 = vmatprep.subr.bf16.mxu0 0
        %1656 = vmatpush1.bf16.xpose.msra.mxu0 0
        %1657 = vmatprep.subr.bf16.mxu0 0
        %1658 = vmatpush1.bf16.xpose.msra.mxu0 0
        %1659 = vmatprep.subr.bf16.mxu0 0
        %1660 = vmatpush1.bf16.xpose.msra.mxu0 0
        %1661 = vmatprep.subr.bf16.mxu0 0
        %1662 = vmatpush1.bf16.xpose.msra.mxu0 0
        %1663 = vmatprep.subr.bf16.mxu0 0
        %1664 = vmatpush1.bf16.xpose.msra.mxu0 0
        %1665 = vmatprep.subr.bf16.mxu0 0
        %1666 = vmatpush1.bf16.xpose.msra.mxu0 0
        %1667 = vmatprep.subr.bf16.mxu0 0
        %1668 = vmatpush1.bf16.xpose.msra.mxu0 0
        %1669 = vmatprep.subr.bf16.mxu0 0
        %1670 = vmatpush1.bf16.xpose.msra.mxu0 0
        %1671 = vmatprep.subr.bf16.mxu0 0
        %1672 = vmatpush1.bf16.xpose.msra.mxu0 0
        %1673 = vmatprep.subr.bf16.mxu0 0
        %1674 = vmatpush1.bf16.xpose.msra.mxu0 0
        %1675 = vmatprep.mubr.bf16.mxu0 0
        %1676 = vmatmul.mubr.bf16.gmra.mrb[0].mxu0 %v1638
        %v1677 = vpop.f32.mrb[0].mxu0
        %v1678 = vadd.f32 0.0, %v1677
        %v1679 = vpop.f32.mrb[0].mxu0
        %v1680 = vpop.f32.mrb[0].mxu0
        %v1681 = vpop.f32.mrb[0].mxu0
        %1682 = vdwg.mxu0
        %v1684 = vsel %vm1544, %v1539, 0
        %v1687 = vsel %vm1544, %v1543, 0
        %1689 = vmatprep.subr.bf16.mxu0 0
        %1690 = vmatpush1.bf16.xpose.msra.mxu0 %v1687
        %1691 = vmatprep.subr.bf16.mxu0 0
        %1692 = vmatpush1.bf16.xpose.msra.mxu0 0
        %1693 = vmatprep.subr.bf16.mxu0 0
        %1694 = vmatpush1.bf16.xpose.msra.mxu0 0
        %1695 = vmatprep.subr.bf16.mxu0 0
        %1696 = vmatpush1.bf16.xpose.msra.mxu0 0
        %1697 = vmatprep.subr.bf16.mxu0 0
        %1698 = vmatpush1.bf16.xpose.msra.mxu0 0
        %1699 = vmatprep.subr.bf16.mxu0 0
        %1700 = vmatpush1.bf16.xpose.msra.mxu0 0
        %1701 = vmatprep.subr.bf16.mxu0 0
        %1702 = vmatpush1.bf16.xpose.msra.mxu0 0
        %1703 = vmatprep.subr.bf16.mxu0 0
        %1704 = vmatpush1.bf16.xpose.msra.mxu0 0
        %1705 = vmatprep.subr.bf16.mxu0 0
        %1706 = vmatpush1.bf16.xpose.msra.mxu0 0
        %1707 = vmatprep.subr.bf16.mxu0 0
        %1708 = vmatpush1.bf16.xpose.msra.mxu0 0
        %1709 = vmatprep.subr.bf16.mxu0 0
        %1710 = vmatpush1.bf16.xpose.msra.mxu0 0
        %1711 = vmatprep.subr.bf16.mxu0 0
        %1712 = vmatpush1.bf16.xpose.msra.mxu0 0
        %1713 = vmatprep.subr.bf16.mxu0 0
        %1714 = vmatpush1.bf16.xpose.msra.mxu0 0
        %1715 = vmatprep.subr.bf16.mxu0 0
        %1716 = vmatpush1.bf16.xpose.msra.mxu0 0
        %1717 = vmatprep.subr.bf16.mxu0 0
        %1718 = vmatpush1.bf16.xpose.msra.mxu0 0
        %1719 = vmatprep.subr.bf16.mxu0 0
        %1720 = vmatpush1.bf16.xpose.msra.mxu0 0
        %1721 = vmatprep.mubr.bf16.mxu0 0
        %1722 = vmatmul.mubr.bf16.gmra.mrb[0].mxu0 %v1684
        %v1723 = vpop.f32.mrb[0].mxu0
        %v1724 = vadd.f32 0.0, %v1723
        %v1725 = vpop.f32.mrb[0].mxu0
        %v1726 = vpop.f32.mrb[0].mxu0
        %v1727 = vpop.f32.mrb[0].mxu0
        %1728 = vdwg.mxu0
        %v1729 = vsub.f32 %v1586, %v858
        %v1730 = vsub.f32 %v1632, %v858
        %v1731 = vsub.f32 %v1678, %v858
        %v1732 = vsub.f32 %v1724, %v858
        %v1733 = vsel %vm1544, %v1729, -inf
        %1734 = vmax.xlane.f32.xlu0 %v1733
        %v1735 = vpop.xlane.xlu0 %1734
        %v1736 = vsel %vm1544, %v1730, -inf
        %1737 = vmax.xlane.f32.xlu0 %v1736
        %v1738 = vpop.xlane.xlu0 %1737
        %v1739 = vsel %vm1544, %v1731, -inf
        %1740 = vmax.xlane.f32.xlu0 %v1739
        %v1741 = vpop.xlane.xlu0 %1740
        %v1742 = vsel %vm1544, %v1732, -inf
        %1743 = vmax.xlane.f32.xlu0 %v1742
        %v1744 = vpop.xlane.xlu0 %1743
        %v1745 = vsub.f32 %v1729, %v1735
        %v1746 = vsub.f32 %v1730, %v1738
        %v1747 = vsub.f32 %v1731, %v1741
        %v1748 = vsub.f32 %v1732, %v1744
        %v1749 = vmul.f32 %v1745, 1.442695
        %v1750 = vpow.pop %v1749
        %v1751 = vmul.f32 %v1746, 1.442695
        %v1752 = vpow.pop %v1751
        %v1753 = vmul.f32 %v1747, 1.442695
        %v1754 = vpow.pop %v1753
        %v1755 = vmul.f32 %v1748, 1.442695
        %v1756 = vpow.pop %v1755
        %v1757 = vsel %vm1544, %v1750, 0.0
        %1758 = vadd.xlane.f32.xlu0 %v1757
        %v1759 = vpop.xlane.xlu0 %1758
        %v1760 = vsel %vm1544, %v1752, 0.0
        %1761 = vadd.xlane.f32.xlu0 %v1760
        %v1762 = vpop.xlane.xlu0 %1761
        %v1763 = vsel %vm1544, %v1754, 0.0
        %1764 = vadd.xlane.f32.xlu0 %v1763
        %v1765 = vpop.xlane.xlu0 %1764
        %v1766 = vsel %vm1544, %v1756, 0.0
        %1767 = vadd.xlane.f32.xlu0 %v1766
        %v1768 = vpop.xlane.xlu0 %1767
        %v1769 = vrcp.pop %v1759
        %v1770 = vrcp.pop %v1762
        %v1771 = vrcp.pop %v1765
        %v1772 = vrcp.pop %v1768
        %v1773 = vmul.f32 %v1750, %v1769
        %v1774 = vmul.f32 %v1752, %v1770
        %v1775 = vmul.f32 %v1754, %v1771
        %v1776 = vmul.f32 %v1756, %v1772
        %v1777 = vpack.c.bf16 %v1773, %v1773
        %v1778 = vpack.c.bf16 %v1774, %v1774
        %v1779 = vpack.c.bf16 %v1775, %v1775
        %v1780 = vpack.c.bf16 %v1776, %v1776
        %v1781 = vpack.c.bf16 %v1375, %v1375
        %v1782 = vpack.c.bf16 %v1427, %v1427
        %v1783 = vpack.c.bf16 %v1479, %v1479
        %v1784 = vpack.c.bf16 %v1531, %v1531
        %v1786 = vsel %vm1544, %v1777, 0
        %vm1788 = vcmask 1043456
        %v1790 = vsel %vm1788, %v1781, 0
        %1792 = vmatprep.subr.bf16.mxu0 0
        %1793 = vmatpush1.bf16.msra.mxu0 %v1790
        %1794 = vmatprep.subr.bf16.mxu0 0
        %1795 = vmatpush1.bf16.msra.mxu0 0
        %1796 = vmatprep.subr.bf16.mxu0 0
        %1797 = vmatpush1.bf16.msra.mxu0 0
        %1798 = vmatprep.subr.bf16.mxu0 0
        %1799 = vmatpush1.bf16.msra.mxu0 0
        %1800 = vmatprep.subr.bf16.mxu0 0
        %1801 = vmatpush1.bf16.msra.mxu0 0
        %1802 = vmatprep.subr.bf16.mxu0 0
        %1803 = vmatpush1.bf16.msra.mxu0 0
        %1804 = vmatprep.subr.bf16.mxu0 0
        %1805 = vmatpush1.bf16.msra.mxu0 0
        %1806 = vmatprep.subr.bf16.mxu0 0
        %1807 = vmatpush1.bf16.msra.mxu0 0
        %1808 = vmatprep.subr.bf16.mxu0 0
        %1809 = vmatpush1.bf16.msra.mxu0 0
        %1810 = vmatprep.subr.bf16.mxu0 0
        %1811 = vmatpush1.bf16.msra.mxu0 0
        %1812 = vmatprep.subr.bf16.mxu0 0
        %1813 = vmatpush1.bf16.msra.mxu0 0
        %1814 = vmatprep.subr.bf16.mxu0 0
        %1815 = vmatpush1.bf16.msra.mxu0 0
        %1816 = vmatprep.subr.bf16.mxu0 0
        %1817 = vmatpush1.bf16.msra.mxu0 0
        %1818 = vmatprep.subr.bf16.mxu0 0
        %1819 = vmatpush1.bf16.msra.mxu0 0
        %1820 = vmatprep.subr.bf16.mxu0 0
        %1821 = vmatpush1.bf16.msra.mxu0 0
        %1822 = vmatprep.subr.bf16.mxu0 0
        %1823 = vmatpush1.bf16.msra.mxu0 0
        %1824 = vmatprep.mubr.bf16.mxu0 0
        %1825 = vmatmul.mubr.bf16.gmra.mrb[0].mxu0 %v1786
        %v1826 = vpop.f32.mrb[0].mxu0
        %v1827 = vadd.f32 0.0, %v1826
        %v1828 = vpop.f32.mrb[0].mxu0
        %v1829 = vpop.f32.mrb[0].mxu0
        %v1830 = vpop.f32.mrb[0].mxu0
        %1831 = vdwg.mxu0
        %v1833 = vsel %vm1544, %v1778, 0
        %v1836 = vsel %vm1788, %v1782, 0
        %1838 = vmatprep.subr.bf16.mxu0 0
        %1839 = vmatpush1.bf16.msra.mxu0 %v1836
        %1840 = vmatprep.subr.bf16.mxu0 0
        %1841 = vmatpush1.bf16.msra.mxu0 0
        %1842 = vmatprep.subr.bf16.mxu0 0
        %1843 = vmatpush1.bf16.msra.mxu0 0
        %1844 = vmatprep.subr.bf16.mxu0 0
        %1845 = vmatpush1.bf16.msra.mxu0 0
        %1846 = vmatprep.subr.bf16.mxu0 0
        %1847 = vmatpush1.bf16.msra.mxu0 0
        %1848 = vmatprep.subr.bf16.mxu0 0
        %1849 = vmatpush1.bf16.msra.mxu0 0
        %1850 = vmatprep.subr.bf16.mxu0 0
        %1851 = vmatpush1.bf16.msra.mxu0 0
        %1852 = vmatprep.subr.bf16.mxu0 0
        %1853 = vmatpush1.bf16.msra.mxu0 0
        %1854 = vmatprep.subr.bf16.mxu0 0
        %1855 = vmatpush1.bf16.msra.mxu0 0
        %1856 = vmatprep.subr.bf16.mxu0 0
        %1857 = vmatpush1.bf16.msra.mxu0 0
        %1858 = vmatprep.subr.bf16.mxu0 0
        %1859 = vmatpush1.bf16.msra.mxu0 0
        %1860 = vmatprep.subr.bf16.mxu0 0
        %1861 = vmatpush1.bf16.msra.mxu0 0
        %1862 = vmatprep.subr.bf16.mxu0 0
        %1863 = vmatpush1.bf16.msra.mxu0 0
        %1864 = vmatprep.subr.bf16.mxu0 0
        %1865 = vmatpush1.bf16.msra.mxu0 0
        %1866 = vmatprep.subr.bf16.mxu0 0
        %1867 = vmatpush1.bf16.msra.mxu0 0
        %1868 = vmatprep.subr.bf16.mxu0 0
        %1869 = vmatpush1.bf16.msra.mxu0 0
        %1870 = vmatprep.mubr.bf16.mxu0 0
        %1871 = vmatmul.mubr.bf16.gmra.mrb[0].mxu0 %v1833
        %v1872 = vpop.f32.mrb[0].mxu0
        %v1873 = vadd.f32 0.0, %v1872
        %v1874 = vpop.f32.mrb[0].mxu0
        %v1875 = vpop.f32.mrb[0].mxu0
        %v1876 = vpop.f32.mrb[0].mxu0
        %1877 = vdwg.mxu0
        %v1879 = vsel %vm1544, %v1779, 0
        %v1882 = vsel %vm1788, %v1783, 0
        %1884 = vmatprep.subr.bf16.mxu0 0
        %1885 = vmatpush1.bf16.msra.mxu0 %v1882
        %1886 = vmatprep.subr.bf16.mxu0 0
        %1887 = vmatpush1.bf16.msra.mxu0 0
        %1888 = vmatprep.subr.bf16.mxu0 0
        %1889 = vmatpush1.bf16.msra.mxu0 0
        %1890 = vmatprep.subr.bf16.mxu0 0
        %1891 = vmatpush1.bf16.msra.mxu0 0
        %1892 = vmatprep.subr.bf16.mxu0 0
        %1893 = vmatpush1.bf16.msra.mxu0 0
        %1894 = vmatprep.subr.bf16.mxu0 0
        %1895 = vmatpush1.bf16.msra.mxu0 0
        %1896 = vmatprep.subr.bf16.mxu0 0
        %1897 = vmatpush1.bf16.msra.mxu0 0
        %1898 = vmatprep.subr.bf16.mxu0 0
        %1899 = vmatpush1.bf16.msra.mxu0 0
        %1900 = vmatprep.subr.bf16.mxu0 0
        %1901 = vmatpush1.bf16.msra.mxu0 0
        %1902 = vmatprep.subr.bf16.mxu0 0
        %1903 = vmatpush1.bf16.msra.mxu0 0
        %1904 = vmatprep.subr.bf16.mxu0 0
        %1905 = vmatpush1.bf16.msra.mxu0 0
        %1906 = vmatprep.subr.bf16.mxu0 0
        %1907 = vmatpush1.bf16.msra.mxu0 0
        %1908 = vmatprep.subr.bf16.mxu0 0
        %1909 = vmatpush1.bf16.msra.mxu0 0
        %1910 = vmatprep.subr.bf16.mxu0 0
        %1911 = vmatpush1.bf16.msra.mxu0 0
        %1912 = vmatprep.subr.bf16.mxu0 0
        %1913 = vmatpush1.bf16.msra.mxu0 0
        %1914 = vmatprep.subr.bf16.mxu0 0
        %1915 = vmatpush1.bf16.msra.mxu0 0
        %1916 = vmatprep.mubr.bf16.mxu0 0
        %1917 = vmatmul.mubr.bf16.gmra.mrb[0].mxu0 %v1879
        %v1918 = vpop.f32.mrb[0].mxu0
        %v1919 = vadd.f32 0.0, %v1918
        %v1920 = vpop.f32.mrb[0].mxu0
        %v1921 = vpop.f32.mrb[0].mxu0
        %v1922 = vpop.f32.mrb[0].mxu0
        %1923 = vdwg.mxu0
        %v1925 = vsel %vm1544, %v1780, 0
        %v1928 = vsel %vm1788, %v1784, 0
        %1930 = vmatprep.subr.bf16.mxu0 0
        %1931 = vmatpush1.bf16.msra.mxu0 %v1928
        %1932 = vmatprep.subr.bf16.mxu0 0
        %1933 = vmatpush1.bf16.msra.mxu0 0
        %1934 = vmatprep.subr.bf16.mxu0 0
        %1935 = vmatpush1.bf16.msra.mxu0 0
        %1936 = vmatprep.subr.bf16.mxu0 0
        %1937 = vmatpush1.bf16.msra.mxu0 0
        %1938 = vmatprep.subr.bf16.mxu0 0
        %1939 = vmatpush1.bf16.msra.mxu0 0
        %1940 = vmatprep.subr.bf16.mxu0 0
        %1941 = vmatpush1.bf16.msra.mxu0 0
        %1942 = vmatprep.subr.bf16.mxu0 0
        %1943 = vmatpush1.bf16.msra.mxu0 0
        %1944 = vmatprep.subr.bf16.mxu0 0
        %1945 = vmatpush1.bf16.msra.mxu0 0
        %1946 = vmatprep.subr.bf16.mxu0 0
        %1947 = vmatpush1.bf16.msra.mxu0 0
        %1948 = vmatprep.subr.bf16.mxu0 0
        %1949 = vmatpush1.bf16.msra.mxu0 0
        %1950 = vmatprep.subr.bf16.mxu0 0
        %1951 = vmatpush1.bf16.msra.mxu0 0
        %1952 = vmatprep.subr.bf16.mxu0 0
        %1953 = vmatpush1.bf16.msra.mxu0 0
        %1954 = vmatprep.subr.bf16.mxu0 0
        %1955 = vmatpush1.bf16.msra.mxu0 0
        %1956 = vmatprep.subr.bf16.mxu0 0
        %1957 = vmatpush1.bf16.msra.mxu0 0
        %1958 = vmatprep.subr.bf16.mxu0 0
        %1959 = vmatpush1.bf16.msra.mxu0 0
        %1960 = vmatprep.subr.bf16.mxu0 0
        %1961 = vmatpush1.bf16.msra.mxu0 0
        %1962 = vmatprep.mubr.bf16.mxu0 0
        %1963 = vmatmul.mubr.bf16.gmra.mrb[0].mxu0 %v1925
        %v1964 = vpop.f32.mrb[0].mxu0
        %v1965 = vadd.f32 0.0, %v1964
        %v1966 = vpop.f32.mrb[0].mxu0
        %v1967 = vpop.f32.mrb[0].mxu0
        %v1968 = vpop.f32.mrb[0].mxu0
        %1969 = vdwg.mxu0
        %v1970 = vld [vmem:[%s792] sm:$0xf]
        %v1971 = vld [vmem:[%s792 + $0x4] sm:$0xf]
        %v1972 = vld [vmem:[%s792 + $0x8] sm:$0xf]
        %v1973 = vld [vmem:[%s792 + $0xc] sm:$0xf]
        %v1974 = vpack.c.bf16 %v1827, %v1827
        %v1975 = vpack.c.bf16 %v1873, %v1873
        %v1976 = vpack.c.bf16 %v1919, %v1919
        %v1977 = vpack.c.bf16 %v1965, %v1965
        %v1979 = vsel %vm1544, %v1974, 0
        %v1982 = vsel %vm1788, %v1970, 0
        %1984 = vmatprep.subr.bf16.mxu0 0
        %1985 = vmatpush1.bf16.msra.mxu0 %v1982
        %1986 = vmatprep.subr.bf16.mxu0 0
        %1987 = vmatpush1.bf16.msra.mxu0 0
        %1988 = vmatprep.subr.bf16.mxu0 0
        %1989 = vmatpush1.bf16.msra.mxu0 0
        %1990 = vmatprep.subr.bf16.mxu0 0
        %1991 = vmatpush1.bf16.msra.mxu0 0
        %1992 = vmatprep.subr.bf16.mxu0 0
        %1993 = vmatpush1.bf16.msra.mxu0 0
        %1994 = vmatprep.subr.bf16.mxu0 0
        %1995 = vmatpush1.bf16.msra.mxu0 0
        %1996 = vmatprep.subr.bf16.mxu0 0
        %1997 = vmatpush1.bf16.msra.mxu0 0
        %1998 = vmatprep.subr.bf16.mxu0 0
        %1999 = vmatpush1.bf16.msra.mxu0 0
        %2000 = vmatprep.subr.bf16.mxu0 0
        %2001 = vmatpush1.bf16.msra.mxu0 0
        %2002 = vmatprep.subr.bf16.mxu0 0
        %2003 = vmatpush1.bf16.msra.mxu0 0
        %2004 = vmatprep.subr.bf16.mxu0 0
        %2005 = vmatpush1.bf16.msra.mxu0 0
        %2006 = vmatprep.subr.bf16.mxu0 0
        %2007 = vmatpush1.bf16.msra.mxu0 0
        %2008 = vmatprep.subr.bf16.mxu0 0
        %2009 = vmatpush1.bf16.msra.mxu0 0
        %2010 = vmatprep.subr.bf16.mxu0 0
        %2011 = vmatpush1.bf16.msra.mxu0 0
        %2012 = vmatprep.subr.bf16.mxu0 0
        %2013 = vmatpush1.bf16.msra.mxu0 0
        %2014 = vmatprep.subr.bf16.mxu0 0
        %2015 = vmatpush1.bf16.msra.mxu0 0
        %2016 = vmatprep.mubr.bf16.mxu0 0
        %2017 = vmatmul.mubr.bf16.gmra.mrb[0].mxu0 %v1979
        %v2018 = vpop.f32.mrb[0].mxu0
        %v2019 = vadd.f32 0.0, %v2018
        %v2020 = vpop.f32.mrb[0].mxu0
        %v2021 = vpop.f32.mrb[0].mxu0
        %v2022 = vpop.f32.mrb[0].mxu0
        %2023 = vdwg.mxu0
        %v2025 = vsel %vm1544, %v1975, 0
        %v2028 = vsel %vm1788, %v1971, 0
        %2030 = vmatprep.subr.bf16.mxu0 0
        %2031 = vmatpush1.bf16.msra.mxu0 %v2028
        %2032 = vmatprep.subr.bf16.mxu0 0
        %2033 = vmatpush1.bf16.msra.mxu0 0
        %2034 = vmatprep.subr.bf16.mxu0 0
        %2035 = vmatpush1.bf16.msra.mxu0 0
        %2036 = vmatprep.subr.bf16.mxu0 0
        %2037 = vmatpush1.bf16.msra.mxu0 0
        %2038 = vmatprep.subr.bf16.mxu0 0
        %2039 = vmatpush1.bf16.msra.mxu0 0
        %2040 = vmatprep.subr.bf16.mxu0 0
        %2041 = vmatpush1.bf16.msra.mxu0 0
        %2042 = vmatprep.subr.bf16.mxu0 0
        %2043 = vmatpush1.bf16.msra.mxu0 0
        %2044 = vmatprep.subr.bf16.mxu0 0
        %2045 = vmatpush1.bf16.msra.mxu0 0
        %2046 = vmatprep.subr.bf16.mxu0 0
        %2047 = vmatpush1.bf16.msra.mxu0 0
        %2048 = vmatprep.subr.bf16.mxu0 0
        %2049 = vmatpush1.bf16.msra.mxu0 0
        %2050 = vmatprep.subr.bf16.mxu0 0
        %2051 = vmatpush1.bf16.msra.mxu0 0
        %2052 = vmatprep.subr.bf16.mxu0 0
        %2053 = vmatpush1.bf16.msra.mxu0 0
        %2054 = vmatprep.subr.bf16.mxu0 0
        %2055 = vmatpush1.bf16.msra.mxu0 0
        %2056 = vmatprep.subr.bf16.mxu0 0
        %2057 = vmatpush1.bf16.msra.mxu0 0
        %2058 = vmatprep.subr.bf16.mxu0 0
        %2059 = vmatpush1.bf16.msra.mxu0 0
        %2060 = vmatprep.subr.bf16.mxu0 0
        %2061 = vmatpush1.bf16.msra.mxu0 0
        %2062 = vmatprep.mubr.bf16.mxu0 0
        %2063 = vmatmul.mubr.bf16.gmra.mrb[0].mxu0 %v2025
        %v2064 = vpop.f32.mrb[0].mxu0
        %v2065 = vadd.f32 0.0, %v2064
        %v2066 = vpop.f32.mrb[0].mxu0
        %v2067 = vpop.f32.mrb[0].mxu0
        %v2068 = vpop.f32.mrb[0].mxu0
        %2069 = vdwg.mxu0
        %v2071 = vsel %vm1544, %v1976, 0
        %v2074 = vsel %vm1788, %v1972, 0
        %2076 = vmatprep.subr.bf16.mxu0 0
        %2077 = vmatpush1.bf16.msra.mxu0 %v2074
        %2078 = vmatprep.subr.bf16.mxu0 0
        %2079 = vmatpush1.bf16.msra.mxu0 0
        %2080 = vmatprep.subr.bf16.mxu0 0
        %2081 = vmatpush1.bf16.msra.mxu0 0
        %2082 = vmatprep.subr.bf16.mxu0 0
        %2083 = vmatpush1.bf16.msra.mxu0 0
        %2084 = vmatprep.subr.bf16.mxu0 0
        %2085 = vmatpush1.bf16.msra.mxu0 0
        %2086 = vmatprep.subr.bf16.mxu0 0
        %2087 = vmatpush1.bf16.msra.mxu0 0
        %2088 = vmatprep.subr.bf16.mxu0 0
        %2089 = vmatpush1.bf16.msra.mxu0 0
        %2090 = vmatprep.subr.bf16.mxu0 0
        %2091 = vmatpush1.bf16.msra.mxu0 0
        %2092 = vmatprep.subr.bf16.mxu0 0
        %2093 = vmatpush1.bf16.msra.mxu0 0
        %2094 = vmatprep.subr.bf16.mxu0 0
        %2095 = vmatpush1.bf16.msra.mxu0 0
        %2096 = vmatprep.subr.bf16.mxu0 0
        %2097 = vmatpush1.bf16.msra.mxu0 0
        %2098 = vmatprep.subr.bf16.mxu0 0
        %2099 = vmatpush1.bf16.msra.mxu0 0
        %2100 = vmatprep.subr.bf16.mxu0 0
        %2101 = vmatpush1.bf16.msra.mxu0 0
        %2102 = vmatprep.subr.bf16.mxu0 0
        %2103 = vmatpush1.bf16.msra.mxu0 0
        %2104 = vmatprep.subr.bf16.mxu0 0
        %2105 = vmatpush1.bf16.msra.mxu0 0
        %2106 = vmatprep.subr.bf16.mxu0 0
        %2107 = vmatpush1.bf16.msra.mxu0 0
        %2108 = vmatprep.mubr.bf16.mxu0 0
        %2109 = vmatmul.mubr.bf16.gmra.mrb[0].mxu0 %v2071
        %v2110 = vpop.f32.mrb[0].mxu0
        %v2111 = vadd.f32 0.0, %v2110
        %v2112 = vpop.f32.mrb[0].mxu0
        %v2113 = vpop.f32.mrb[0].mxu0
        %v2114 = vpop.f32.mrb[0].mxu0
        %2115 = vdwg.mxu0
        %v2117 = vsel %vm1544, %v1977, 0
        %v2120 = vsel %vm1788, %v1973, 0
        %2122 = vmatprep.subr.bf16.mxu0 0
        %2123 = vmatpush1.bf16.msra.mxu0 %v2120
        %2124 = vmatprep.subr.bf16.mxu0 0
        %2125 = vmatpush1.bf16.msra.mxu0 0
        %2126 = vmatprep.subr.bf16.mxu0 0
        %2127 = vmatpush1.bf16.msra.mxu0 0
        %2128 = vmatprep.subr.bf16.mxu0 0
        %2129 = vmatpush1.bf16.msra.mxu0 0
        %2130 = vmatprep.subr.bf16.mxu0 0
        %2131 = vmatpush1.bf16.msra.mxu0 0
        %2132 = vmatprep.subr.bf16.mxu0 0
        %2133 = vmatpush1.bf16.msra.mxu0 0
        %2134 = vmatprep.subr.bf16.mxu0 0
        %2135 = vmatpush1.bf16.msra.mxu0 0
        %2136 = vmatprep.subr.bf16.mxu0 0
        %2137 = vmatpush1.bf16.msra.mxu0 0
        %2138 = vmatprep.subr.bf16.mxu0 0
        %2139 = vmatpush1.bf16.msra.mxu0 0
        %2140 = vmatprep.subr.bf16.mxu0 0
        %2141 = vmatpush1.bf16.msra.mxu0 0
        %2142 = vmatprep.subr.bf16.mxu0 0
        %2143 = vmatpush1.bf16.msra.mxu0 0
        %2144 = vmatprep.subr.bf16.mxu0 0
        %2145 = vmatpush1.bf16.msra.mxu0 0
        %2146 = vmatprep.subr.bf16.mxu0 0
        %2147 = vmatpush1.bf16.msra.mxu0 0
        %2148 = vmatprep.subr.bf16.mxu0 0
        %2149 = vmatpush1.bf16.msra.mxu0 0
        %2150 = vmatprep.subr.bf16.mxu0 0
        %2151 = vmatpush1.bf16.msra.mxu0 0
        %2152 = vmatprep.subr.bf16.mxu0 0
        %2153 = vmatpush1.bf16.msra.mxu0 0
        %2154 = vmatprep.mubr.bf16.mxu0 0
        %2155 = vmatmul.mubr.bf16.gmra.mrb[0].mxu0 %v2117
        %v2156 = vpop.f32.mrb[0].mxu0
        %v2157 = vadd.f32 0.0, %v2156
        %v2158 = vpop.f32.mrb[0].mxu0
        %v2159 = vpop.f32.mrb[0].mxu0
        %v2160 = vpop.f32.mrb[0].mxu0
        %2161 = vdwg.mxu0
        %v2162 = vsel %vm920, %v2019, 0.0
        %v2163 = vsel %vm920, %v2065, 0.0
        %v2164 = vadd.f32 %v2162, %v2163
        %v2165 = vsel %vm920, %v2111, 0.0
        %v2166 = vadd.f32 %v2164, %v2165
        %v2167 = vsel %vm920, %v2157, 0.0
        %v2168 = vadd.f32 %v2166, %v2167
        %v2169 = vadd.f32 %v850, %v2168
        %v2170 = vld [vmem:[%s795] sm:$0x1]
        %v2171 = vld [vmem:[%s798] sm:$0x1]
        %v2172 = vsel %vm920, %v2169, 0.0
        %2173 = vadd.xlane.f32.xlu0 %v2172
        %v2174 = vpop.xlane.xlu0 %2173
        %v2175 = vrcp.pop 32.0
        %v2176 = vmul.f32 %v2174, %v2175
        %v2177 = vsub.f32 %v2169, %v2176
        %v2178 = vmul.f32 %v2177, %v2177
        %v2179 = vsel %vm920, %v2178, 0.0
        %2180 = vadd.xlane.f32.xlu0 %v2179
        %v2181 = vpop.xlane.xlu0 %2180
        %v2182 = vmul.f32 %v2181, 0.032258064
        %v2183 = vrsqrt.pop %v2182
        %v2184 = vmul.f32 %v2182, %v2183
        %vm2185 = vcmp.eq.f32.partialorder %v2182, inf
        %v2186 = vsel %vm2185, %v2182, %v2184
        %vm2187 = vcmp.eq.f32.partialorder %v2182, 0.0
        %v2188 = vand.u32 %v2182, 2147483648
        %v2189 = vsel %vm2187, %v2188, %v2186
        %v2190 = vadd.f32 %v2189, 1e-06
        %v2191 = vrcp.pop %v2190
        %v2193 = vlaneseq
        %v2194 = vshrl.u32 %v2193, 7
        %v2195 = vsub.s32 0, %v2194
        %v2196 = vrot.slane %v2170, %v2195
        %v2198 = vmul.f32 %v2196, %v2177
        %v2199 = vmul.f32 %v2198, %v2191
        %v2201 = vlaneseq
        %v2202 = vshrl.u32 %v2201, 7
        %v2203 = vsub.s32 0, %v2202
        %v2204 = vrot.slane %v2171, %v2203
        %v2206 = vadd.f32 %v2199, %v2204
        %v2207 = vld [vmem:[%s803] sm:$0xf]
        %v2208 = vld [vmem:[%s803 + $0x4] sm:$0xf]
        %v2209 = vld [vmem:[%s803 + $0x8] sm:$0xf]
        %v2210 = vld [vmem:[%s803 + $0xc] sm:$0xf]
        %v2211 = vld [vmem:[%s803 + $0x10] sm:$0xf]
        %v2212 = vld [vmem:[%s803 + $0x14] sm:$0xf]
        %v2213 = vld [vmem:[%s803 + $0x18] sm:$0xf]
        %v2214 = vld [vmem:[%s803 + $0x1c] sm:$0xf]
        %v2215 = vld [vmem:[%s803 + $0x20] sm:$0xf]
        %v2216 = vld [vmem:[%s803 + $0x24] sm:$0xf]
        %v2217 = vld [vmem:[%s803 + $0x28] sm:$0xf]
        %v2218 = vld [vmem:[%s803 + $0x2c] sm:$0xf]
        %v2219 = vld [vmem:[%s803 + $0x30] sm:$0xf]
        %v2220 = vld [vmem:[%s803 + $0x34] sm:$0xf]
        %v2221 = vld [vmem:[%s803 + $0x38] sm:$0xf]
        %v2222 = vld [vmem:[%s803 + $0x3c] sm:$0xf]
        %v2223 = vpack.c.bf16 %v2206, %v2206
        %v2228 = vunpack.c.l.b16 %v2207
        %v2229 = vunpack.c.l.b16 %v2208
        %v2230 = vunpack.c.l.b16 %v2209
        %v2231 = vunpack.c.l.b16 %v2210
        %v2232 = vpack.c.b16 %v2229, %v2228
        %v2233 = vpack.c.b16 %v2231, %v2230
        %v2237 = vsel %vm920, %v2223, 0
        %2239 = vmatprep.subr.bf16.mxu0 0
        %2240 = vmatpush1.bf16.msra.mxu0 %v2232
        %2241 = vmatprep.subr.bf16.mxu0 0
        %2242 = vmatpush1.bf16.msra.mxu0 %v2233
        %2243 = vmatprep.subr.bf16.mxu0 0
        %2244 = vmatpush1.bf16.msra.mxu0 0
        %2245 = vmatprep.subr.bf16.mxu0 0
        %2246 = vmatpush1.bf16.msra.mxu0 0
        %2247 = vmatprep.subr.bf16.mxu0 0
        %2248 = vmatpush1.bf16.msra.mxu0 0
        %2249 = vmatprep.subr.bf16.mxu0 0
        %2250 = vmatpush1.bf16.msra.mxu0 0
        %2251 = vmatprep.subr.bf16.mxu0 0
        %2252 = vmatpush1.bf16.msra.mxu0 0
        %2253 = vmatprep.subr.bf16.mxu0 0
        %2254 = vmatpush1.bf16.msra.mxu0 0
        %2255 = vmatprep.subr.bf16.mxu0 0
        %2256 = vmatpush1.bf16.msra.mxu0 0
        %2257 = vmatprep.subr.bf16.mxu0 0
        %2258 = vmatpush1.bf16.msra.mxu0 0
        %2259 = vmatprep.subr.bf16.mxu0 0
        %2260 = vmatpush1.bf16.msra.mxu0 0
        %2261 = vmatprep.subr.bf16.mxu0 0
        %2262 = vmatpush1.bf16.msra.mxu0 0
        %2263 = vmatprep.subr.bf16.mxu0 0
        %2264 = vmatpush1.bf16.msra.mxu0 0
        %2265 = vmatprep.subr.bf16.mxu0 0
        %2266 = vmatpush1.bf16.msra.mxu0 0
        %2267 = vmatprep.subr.bf16.mxu0 0
        %2268 = vmatpush1.bf16.msra.mxu0 0
        %2269 = vmatprep.subr.bf16.mxu0 0
        %2270 = vmatpush1.bf16.msra.mxu0 0
        %2271 = vmatprep.mubr.bf16.mxu0 0
        %2272 = vmatmul.mubr.bf16.gmra.mrb[0].mxu0 %v2237
        %v2273 = vpop.f32.mrb[0].mxu0
        %v2274 = vadd.f32 0.0, %v2273
        %v2275 = vpop.f32.mrb[0].mxu0
        %v2276 = vpop.f32.mrb[0].mxu0
        %v2277 = vpop.f32.mrb[0].mxu0
        %2278 = vdwg.mxu0
        %v2283 = vunpack.c.l.b16 %v2211
        %v2284 = vunpack.c.l.b16 %v2212
        %v2285 = vunpack.c.l.b16 %v2213
        %v2286 = vunpack.c.l.b16 %v2214
        %v2287 = vpack.c.b16 %v2284, %v2283
        %v2288 = vpack.c.b16 %v2286, %v2285
        %2291 = vmatprep.subr.bf16.mxu0 0
        %2292 = vmatpush1.bf16.msra.mxu0 %v2287
        %2293 = vmatprep.subr.bf16.mxu0 0
        %2294 = vmatpush1.bf16.msra.mxu0 %v2288
        %2295 = vmatprep.subr.bf16.mxu0 0
        %2296 = vmatpush1.bf16.msra.mxu0 0
        %2297 = vmatprep.subr.bf16.mxu0 0
        %2298 = vmatpush1.bf16.msra.mxu0 0
        %2299 = vmatprep.subr.bf16.mxu0 0
        %2300 = vmatpush1.bf16.msra.mxu0 0
        %2301 = vmatprep.subr.bf16.mxu0 0
        %2302 = vmatpush1.bf16.msra.mxu0 0
        %2303 = vmatprep.subr.bf16.mxu0 0
        %2304 = vmatpush1.bf16.msra.mxu0 0
        %2305 = vmatprep.subr.bf16.mxu0 0
        %2306 = vmatpush1.bf16.msra.mxu0 0
        %2307 = vmatprep.subr.bf16.mxu0 0
        %2308 = vmatpush1.bf16.msra.mxu0 0
        %2309 = vmatprep.subr.bf16.mxu0 0
        %2310 = vmatpush1.bf16.msra.mxu0 0
        %2311 = vmatprep.subr.bf16.mxu0 0
        %2312 = vmatpush1.bf16.msra.mxu0 0
        %2313 = vmatprep.subr.bf16.mxu0 0
        %2314 = vmatpush1.bf16.msra.mxu0 0
        %2315 = vmatprep.subr.bf16.mxu0 0
        %2316 = vmatpush1.bf16.msra.mxu0 0
        %2317 = vmatprep.subr.bf16.mxu0 0
        %2318 = vmatpush1.bf16.msra.mxu0 0
        %2319 = vmatprep.subr.bf16.mxu0 0
        %2320 = vmatpush1.bf16.msra.mxu0 0
        %2321 = vmatprep.subr.bf16.mxu0 0
        %2322 = vmatpush1.bf16.msra.mxu0 0
        %2323 = vmatprep.mubr.bf16.mxu0 0
        %2324 = vmatmul.mubr.bf16.gmra.mrb[0].mxu0 %v2237
        %v2325 = vpop.f32.mrb[0].mxu0
        %v2326 = vadd.f32 0.0, %v2325
        %v2327 = vpop.f32.mrb[0].mxu0
        %v2328 = vpop.f32.mrb[0].mxu0
        %v2329 = vpop.f32.mrb[0].mxu0
        %2330 = vdwg.mxu0
        %v2335 = vunpack.c.l.b16 %v2215
        %v2336 = vunpack.c.l.b16 %v2216
        %v2337 = vunpack.c.l.b16 %v2217
        %v2338 = vunpack.c.l.b16 %v2218
        %v2339 = vpack.c.b16 %v2336, %v2335
        %v2340 = vpack.c.b16 %v2338, %v2337
        %2343 = vmatprep.subr.bf16.mxu0 0
        %2344 = vmatpush1.bf16.msra.mxu0 %v2339
        %2345 = vmatprep.subr.bf16.mxu0 0
        %2346 = vmatpush1.bf16.msra.mxu0 %v2340
        %2347 = vmatprep.subr.bf16.mxu0 0
        %2348 = vmatpush1.bf16.msra.mxu0 0
        %2349 = vmatprep.subr.bf16.mxu0 0
        %2350 = vmatpush1.bf16.msra.mxu0 0
        %2351 = vmatprep.subr.bf16.mxu0 0
        %2352 = vmatpush1.bf16.msra.mxu0 0
        %2353 = vmatprep.subr.bf16.mxu0 0
        %2354 = vmatpush1.bf16.msra.mxu0 0
        %2355 = vmatprep.subr.bf16.mxu0 0
        %2356 = vmatpush1.bf16.msra.mxu0 0
        %2357 = vmatprep.subr.bf16.mxu0 0
        %2358 = vmatpush1.bf16.msra.mxu0 0
        %2359 = vmatprep.subr.bf16.mxu0 0
        %2360 = vmatpush1.bf16.msra.mxu0 0
        %2361 = vmatprep.subr.bf16.mxu0 0
        %2362 = vmatpush1.bf16.msra.mxu0 0
        %2363 = vmatprep.subr.bf16.mxu0 0
        %2364 = vmatpush1.bf16.msra.mxu0 0
        %2365 = vmatprep.subr.bf16.mxu0 0
        %2366 = vmatpush1.bf16.msra.mxu0 0
        %2367 = vmatprep.subr.bf16.mxu0 0
        %2368 = vmatpush1.bf16.msra.mxu0 0
        %2369 = vmatprep.subr.bf16.mxu0 0
        %2370 = vmatpush1.bf16.msra.mxu0 0
        %2371 = vmatprep.subr.bf16.mxu0 0
        %2372 = vmatpush1.bf16.msra.mxu0 0
        %2373 = vmatprep.subr.bf16.mxu0 0
        %2374 = vmatpush1.bf16.msra.mxu0 0
        %2375 = vmatprep.mubr.bf16.mxu0 0
        %2376 = vmatmul.mubr.bf16.gmra.mrb[0].mxu0 %v2237
        %v2377 = vpop.f32.mrb[0].mxu0
        %v2378 = vadd.f32 0.0, %v2377
        %v2379 = vpop.f32.mrb[0].mxu0
        %v2380 = vpop.f32.mrb[0].mxu0
        %v2381 = vpop.f32.mrb[0].mxu0
        %2382 = vdwg.mxu0
        %v2387 = vunpack.c.l.b16 %v2219
        %v2388 = vunpack.c.l.b16 %v2220
        %v2389 = vunpack.c.l.b16 %v2221
        %v2390 = vunpack.c.l.b16 %v2222
        %v2391 = vpack.c.b16 %v2388, %v2387
        %v2392 = vpack.c.b16 %v2390, %v2389
        %2395 = vmatprep.subr.bf16.mxu0 0
        %2396 = vmatpush1.bf16.msra.mxu0 %v2391
        %2397 = vmatprep.subr.bf16.mxu0 0
        %2398 = vmatpush1.bf16.msra.mxu0 %v2392
        %2399 = vmatprep.subr.bf16.mxu0 0
        %2400 = vmatpush1.bf16.msra.mxu0 0
        %2401 = vmatprep.subr.bf16.mxu0 0
        %2402 = vmatpush1.bf16.msra.mxu0 0
        %2403 = vmatprep.subr.bf16.mxu0 0
        %2404 = vmatpush1.bf16.msra.mxu0 0
        %2405 = vmatprep.subr.bf16.mxu0 0
        %2406 = vmatpush1.bf16.msra.mxu0 0
        %2407 = vmatprep.subr.bf16.mxu0 0
        %2408 = vmatpush1.bf16.msra.mxu0 0
        %2409 = vmatprep.subr.bf16.mxu0 0
        %2410 = vmatpush1.bf16.msra.mxu0 0
        %2411 = vmatprep.subr.bf16.mxu0 0
        %2412 = vmatpush1.bf16.msra.mxu0 0
        %2413 = vmatprep.subr.bf16.mxu0 0
        %2414 = vmatpush1.bf16.msra.mxu0 0
        %2415 = vmatprep.subr.bf16.mxu0 0
        %2416 = vmatpush1.bf16.msra.mxu0 0
        %2417 = vmatprep.subr.bf16.mxu0 0
        %2418 = vmatpush1.bf16.msra.mxu0 0
        %2419 = vmatprep.subr.bf16.mxu0 0
        %2420 = vmatpush1.bf16.msra.mxu0 0
        %2421 = vmatprep.subr.bf16.mxu0 0
        %2422 = vmatpush1.bf16.msra.mxu0 0
        %2423 = vmatprep.subr.bf16.mxu0 0
        %2424 = vmatpush1.bf16.msra.mxu0 0
        %2425 = vmatprep.subr.bf16.mxu0 0
        %2426 = vmatpush1.bf16.msra.mxu0 0
        %2427 = vmatprep.mubr.bf16.mxu0 0
        %2428 = vmatmul.mubr.bf16.gmra.mrb[0].mxu0 %v2237
        %v2429 = vpop.f32.mrb[0].mxu0
        %v2430 = vadd.f32 0.0, %v2429
        %v2431 = vpop.f32.mrb[0].mxu0
        %v2432 = vpop.f32.mrb[0].mxu0
        %v2433 = vpop.f32.mrb[0].mxu0
        %2434 = vdwg.mxu0
        %v2435 = vld [vmem:[%s808] sm:$0xf]
        %v2436 = vld [vmem:[%s808 + $0x4] sm:$0xf]
        %v2437 = vld [vmem:[%s808 + $0x8] sm:$0xf]
        %v2438 = vld [vmem:[%s808 + $0xc] sm:$0xf]
        %v2439 = vld [vmem:[%s808 + $0x10] sm:$0xf]
        %v2440 = vld [vmem:[%s808 + $0x14] sm:$0xf]
        %v2441 = vld [vmem:[%s808 + $0x18] sm:$0xf]
        %v2442 = vld [vmem:[%s808 + $0x1c] sm:$0xf]
        %v2443 = vld [vmem:[%s808 + $0x20] sm:$0xf]
        %v2444 = vld [vmem:[%s808 + $0x24] sm:$0xf]
        %v2445 = vld [vmem:[%s808 + $0x28] sm:$0xf]
        %v2446 = vld [vmem:[%s808 + $0x2c] sm:$0xf]
        %v2447 = vld [vmem:[%s808 + $0x30] sm:$0xf]
        %v2448 = vld [vmem:[%s808 + $0x34] sm:$0xf]
        %v2449 = vld [vmem:[%s808 + $0x38] sm:$0xf]
        %v2450 = vld [vmem:[%s808 + $0x3c] sm:$0xf]
        %v2451 = vld [vmem:[%s808 + $0x40] sm:$0xf]
        %v2452 = vld [vmem:[%s808 + $0x44] sm:$0xf]
        %v2453 = vld [vmem:[%s808 + $0x48] sm:$0xf]
        %v2454 = vld [vmem:[%s808 + $0x4c] sm:$0xf]
        %v2455 = vld [vmem:[%s808 + $0x50] sm:$0xf]
        %v2456 = vld [vmem:[%s808 + $0x54] sm:$0xf]
        %v2457 = vld [vmem:[%s808 + $0x58] sm:$0xf]
        %v2458 = vld [vmem:[%s808 + $0x5c] sm:$0xf]
        %v2459 = vld [vmem:[%s808 + $0x60] sm:$0xf]
        %v2460 = vld [vmem:[%s808 + $0x64] sm:$0xf]
        %v2461 = vld [vmem:[%s808 + $0x68] sm:$0xf]
        %v2462 = vld [vmem:[%s808 + $0x6c] sm:$0xf]
        %v2463 = vld [vmem:[%s808 + $0x70] sm:$0xf]
        %v2464 = vld [vmem:[%s808 + $0x74] sm:$0xf]
        %v2465 = vld [vmem:[%s808 + $0x78] sm:$0xf]
        %v2466 = vld [vmem:[%s808 + $0x7c] sm:$0xf]
        %v2467 = vpack.c.bf16 %v852, %v851
        %v2472 = vunpack.c.l.b16 %v2435
        %v2473 = vunpack.c.l.b16 %v2436
        %v2474 = vunpack.c.l.b16 %v2437
        %v2475 = vunpack.c.l.b16 %v2438
        %v2476 = vpack.c.b16 %v2473, %v2472
        %v2477 = vpack.c.b16 %v2475, %v2474
        %v2481 = vsel %vm920, %v2467, 0
        %2483 = vmatprep.subr.bf16.mxu0 0
        %2484 = vmatpush1.bf16.msra.mxu0 %v2476
        %2485 = vmatprep.subr.bf16.mxu0 0
        %2486 = vmatpush1.bf16.msra.mxu0 %v2477
        %2487 = vmatprep.subr.bf16.mxu0 0
        %2488 = vmatpush1.bf16.msra.mxu0 0
        %2489 = vmatprep.subr.bf16.mxu0 0
        %2490 = vmatpush1.bf16.msra.mxu0 0
        %2491 = vmatprep.subr.bf16.mxu0 0
        %2492 = vmatpush1.bf16.msra.mxu0 0
        %2493 = vmatprep.subr.bf16.mxu0 0
        %2494 = vmatpush1.bf16.msra.mxu0 0
        %2495 = vmatprep.subr.bf16.mxu0 0
        %2496 = vmatpush1.bf16.msra.mxu0 0
        %2497 = vmatprep.subr.bf16.mxu0 0
        %2498 = vmatpush1.bf16.msra.mxu0 0
        %2499 = vmatprep.subr.bf16.mxu0 0
        %2500 = vmatpush1.bf16.msra.mxu0 0
        %2501 = vmatprep.subr.bf16.mxu0 0
        %2502 = vmatpush1.bf16.msra.mxu0 0
        %2503 = vmatprep.subr.bf16.mxu0 0
        %2504 = vmatpush1.bf16.msra.mxu0 0
        %2505 = vmatprep.subr.bf16.mxu0 0
        %2506 = vmatpush1.bf16.msra.mxu0 0
        %2507 = vmatprep.subr.bf16.mxu0 0
        %2508 = vmatpush1.bf16.msra.mxu0 0
        %2509 = vmatprep.subr.bf16.mxu0 0
        %2510 = vmatpush1.bf16.msra.mxu0 0
        %2511 = vmatprep.subr.bf16.mxu0 0
        %2512 = vmatpush1.bf16.msra.mxu0 0
        %2513 = vmatprep.subr.bf16.mxu0 0
        %2514 = vmatpush1.bf16.msra.mxu0 0
        %2515 = vmatprep.mubr.bf16.mxu0 0
        %2516 = vmatmul.mubr.bf16.gmra.mrb[0].mxu0 %v2481
        %v2517 = vpop.f32.mrb[0].mxu0
        %v2518 = vadd.f32 0.0, %v2517
        %v2519 = vpop.f32.mrb[0].mxu0
        %v2520 = vpop.f32.mrb[0].mxu0
        %v2521 = vadd.f32 0.0, %v2520
        %v2522 = vpop.f32.mrb[0].mxu0
        %2523 = vdwg.mxu0
        %v2528 = vunpack.c.l.b16 %v2439
        %v2529 = vunpack.c.l.b16 %v2440
        %v2530 = vunpack.c.l.b16 %v2441
        %v2531 = vunpack.c.l.b16 %v2442
        %v2532 = vpack.c.b16 %v2529, %v2528
        %v2533 = vpack.c.b16 %v2531, %v2530
        %2536 = vmatprep.subr.bf16.mxu0 0
        %2537 = vmatpush1.bf16.msra.mxu0 %v2532
        %2538 = vmatprep.subr.bf16.mxu0 0
        %2539 = vmatpush1.bf16.msra.mxu0 %v2533
        %2540 = vmatprep.subr.bf16.mxu0 0
        %2541 = vmatpush1.bf16.msra.mxu0 0
        %2542 = vmatprep.subr.bf16.mxu0 0
        %2543 = vmatpush1.bf16.msra.mxu0 0
        %2544 = vmatprep.subr.bf16.mxu0 0
        %2545 = vmatpush1.bf16.msra.mxu0 0
        %2546 = vmatprep.subr.bf16.mxu0 0
        %2547 = vmatpush1.bf16.msra.mxu0 0
        %2548 = vmatprep.subr.bf16.mxu0 0
        %2549 = vmatpush1.bf16.msra.mxu0 0
        %2550 = vmatprep.subr.bf16.mxu0 0
        %2551 = vmatpush1.bf16.msra.mxu0 0
        %2552 = vmatprep.subr.bf16.mxu0 0
        %2553 = vmatpush1.bf16.msra.mxu0 0
        %2554 = vmatprep.subr.bf16.mxu0 0
        %2555 = vmatpush1.bf16.msra.mxu0 0
        %2556 = vmatprep.subr.bf16.mxu0 0
        %2557 = vmatpush1.bf16.msra.mxu0 0
        %2558 = vmatprep.subr.bf16.mxu0 0
        %2559 = vmatpush1.bf16.msra.mxu0 0
        %2560 = vmatprep.subr.bf16.mxu0 0
        %2561 = vmatpush1.bf16.msra.mxu0 0
        %2562 = vmatprep.subr.bf16.mxu0 0
        %2563 = vmatpush1.bf16.msra.mxu0 0
        %2564 = vmatprep.subr.bf16.mxu0 0
        %2565 = vmatpush1.bf16.msra.mxu0 0
        %2566 = vmatprep.subr.bf16.mxu0 0
        %2567 = vmatpush1.bf16.msra.mxu0 0
        %2568 = vmatprep.mubr.bf16.mxu0 0
        %2569 = vmatmul.mubr.bf16.gmra.mrb[0].mxu0 %v2481
        %v2570 = vpop.f32.mrb[0].mxu0
        %v2571 = vadd.f32 0.0, %v2570
        %v2572 = vpop.f32.mrb[0].mxu0
        %v2573 = vpop.f32.mrb[0].mxu0
        %v2574 = vadd.f32 0.0, %v2573
        %v2575 = vpop.f32.mrb[0].mxu0
        %2576 = vdwg.mxu0
        %v2581 = vunpack.c.l.b16 %v2443
        %v2582 = vunpack.c.l.b16 %v2444
        %v2583 = vunpack.c.l.b16 %v2445
        %v2584 = vunpack.c.l.b16 %v2446
        %v2585 = vpack.c.b16 %v2582, %v2581
        %v2586 = vpack.c.b16 %v2584, %v2583
        %2589 = vmatprep.subr.bf16.mxu0 0
        %2590 = vmatpush1.bf16.msra.mxu0 %v2585
        %2591 = vmatprep.subr.bf16.mxu0 0
        %2592 = vmatpush1.bf16.msra.mxu0 %v2586
        %2593 = vmatprep.subr.bf16.mxu0 0
        %2594 = vmatpush1.bf16.msra.mxu0 0
        %2595 = vmatprep.subr.bf16.mxu0 0
        %2596 = vmatpush1.bf16.msra.mxu0 0
        %2597 = vmatprep.subr.bf16.mxu0 0
        %2598 = vmatpush1.bf16.msra.mxu0 0
        %2599 = vmatprep.subr.bf16.mxu0 0
        %2600 = vmatpush1.bf16.msra.mxu0 0
        %2601 = vmatprep.subr.bf16.mxu0 0
        %2602 = vmatpush1.bf16.msra.mxu0 0
        %2603 = vmatprep.subr.bf16.mxu0 0
        %2604 = vmatpush1.bf16.msra.mxu0 0
        %2605 = vmatprep.subr.bf16.mxu0 0
        %2606 = vmatpush1.bf16.msra.mxu0 0
        %2607 = vmatprep.subr.bf16.mxu0 0
        %2608 = vmatpush1.bf16.msra.mxu0 0
        %2609 = vmatprep.subr.bf16.mxu0 0
        %2610 = vmatpush1.bf16.msra.mxu0 0
        %2611 = vmatprep.subr.bf16.mxu0 0
        %2612 = vmatpush1.bf16.msra.mxu0 0
        %2613 = vmatprep.subr.bf16.mxu0 0
        %2614 = vmatpush1.bf16.msra.mxu0 0
        %2615 = vmatprep.subr.bf16.mxu0 0
        %2616 = vmatpush1.bf16.msra.mxu0 0
        %2617 = vmatprep.subr.bf16.mxu0 0
        %2618 = vmatpush1.bf16.msra.mxu0 0
        %2619 = vmatprep.subr.bf16.mxu0 0
        %2620 = vmatpush1.bf16.msra.mxu0 0
        %2621 = vmatprep.mubr.bf16.mxu0 0
        %2622 = vmatmul.mubr.bf16.gmra.mrb[0].mxu0 %v2481
        %v2623 = vpop.f32.mrb[0].mxu0
        %v2624 = vadd.f32 0.0, %v2623
        %v2625 = vpop.f32.mrb[0].mxu0
        %v2626 = vpop.f32.mrb[0].mxu0
        %v2627 = vadd.f32 0.0, %v2626
        %v2628 = vpop.f32.mrb[0].mxu0
        %2629 = vdwg.mxu0
        %v2634 = vunpack.c.l.b16 %v2447
        %v2635 = vunpack.c.l.b16 %v2448
        %v2636 = vunpack.c.l.b16 %v2449
        %v2637 = vunpack.c.l.b16 %v2450
        %v2638 = vpack.c.b16 %v2635, %v2634
        %v2639 = vpack.c.b16 %v2637, %v2636
        %2642 = vmatprep.subr.bf16.mxu0 0
        %2643 = vmatpush1.bf16.msra.mxu0 %v2638
        %2644 = vmatprep.subr.bf16.mxu0 0
        %2645 = vmatpush1.bf16.msra.mxu0 %v2639
        %2646 = vmatprep.subr.bf16.mxu0 0
        %2647 = vmatpush1.bf16.msra.mxu0 0
        %2648 = vmatprep.subr.bf16.mxu0 0
        %2649 = vmatpush1.bf16.msra.mxu0 0
        %2650 = vmatprep.subr.bf16.mxu0 0
        %2651 = vmatpush1.bf16.msra.mxu0 0
        %2652 = vmatprep.subr.bf16.mxu0 0
        %2653 = vmatpush1.bf16.msra.mxu0 0
        %2654 = vmatprep.subr.bf16.mxu0 0
        %2655 = vmatpush1.bf16.msra.mxu0 0
        %2656 = vmatprep.subr.bf16.mxu0 0
        %2657 = vmatpush1.bf16.msra.mxu0 0
        %2658 = vmatprep.subr.bf16.mxu0 0
        %2659 = vmatpush1.bf16.msra.mxu0 0
        %2660 = vmatprep.subr.bf16.mxu0 0
        %2661 = vmatpush1.bf16.msra.mxu0 0
        %2662 = vmatprep.subr.bf16.mxu0 0
        %2663 = vmatpush1.bf16.msra.mxu0 0
        %2664 = vmatprep.subr.bf16.mxu0 0
        %2665 = vmatpush1.bf16.msra.mxu0 0
        %2666 = vmatprep.subr.bf16.mxu0 0
        %2667 = vmatpush1.bf16.msra.mxu0 0
        %2668 = vmatprep.subr.bf16.mxu0 0
        %2669 = vmatpush1.bf16.msra.mxu0 0
        %2670 = vmatprep.subr.bf16.mxu0 0
        %2671 = vmatpush1.bf16.msra.mxu0 0
        %2672 = vmatprep.subr.bf16.mxu0 0
        %2673 = vmatpush1.bf16.msra.mxu0 0
        %2674 = vmatprep.mubr.bf16.mxu0 0
        %2675 = vmatmul.mubr.bf16.gmra.mrb[0].mxu0 %v2481
        %v2676 = vpop.f32.mrb[0].mxu0
        %v2677 = vadd.f32 0.0, %v2676
        %v2678 = vpop.f32.mrb[0].mxu0
        %v2679 = vpop.f32.mrb[0].mxu0
        %v2680 = vadd.f32 0.0, %v2679
        %v2681 = vpop.f32.mrb[0].mxu0
        %2682 = vdwg.mxu0
        %v2687 = vunpack.c.l.b16 %v2451
        %v2688 = vunpack.c.l.b16 %v2452
        %v2689 = vunpack.c.l.b16 %v2453
        %v2690 = vunpack.c.l.b16 %v2454
        %v2691 = vpack.c.b16 %v2688, %v2687
        %v2692 = vpack.c.b16 %v2690, %v2689
        %2695 = vmatprep.subr.bf16.mxu0 0
        %2696 = vmatpush1.bf16.msra.mxu0 %v2691
        %2697 = vmatprep.subr.bf16.mxu0 0
        %2698 = vmatpush1.bf16.msra.mxu0 %v2692
        %2699 = vmatprep.subr.bf16.mxu0 0
        %2700 = vmatpush1.bf16.msra.mxu0 0
        %2701 = vmatprep.subr.bf16.mxu0 0
        %2702 = vmatpush1.bf16.msra.mxu0 0
        %2703 = vmatprep.subr.bf16.mxu0 0
        %2704 = vmatpush1.bf16.msra.mxu0 0
        %2705 = vmatprep.subr.bf16.mxu0 0
        %2706 = vmatpush1.bf16.msra.mxu0 0
        %2707 = vmatprep.subr.bf16.mxu0 0
        %2708 = vmatpush1.bf16.msra.mxu0 0
        %2709 = vmatprep.subr.bf16.mxu0 0
        %2710 = vmatpush1.bf16.msra.mxu0 0
        %2711 = vmatprep.subr.bf16.mxu0 0
        %2712 = vmatpush1.bf16.msra.mxu0 0
        %2713 = vmatprep.subr.bf16.mxu0 0
        %2714 = vmatpush1.bf16.msra.mxu0 0
        %2715 = vmatprep.subr.bf16.mxu0 0
        %2716 = vmatpush1.bf16.msra.mxu0 0
        %2717 = vmatprep.subr.bf16.mxu0 0
        %2718 = vmatpush1.bf16.msra.mxu0 0
        %2719 = vmatprep.subr.bf16.mxu0 0
        %2720 = vmatpush1.bf16.msra.mxu0 0
        %2721 = vmatprep.subr.bf16.mxu0 0
        %2722 = vmatpush1.bf16.msra.mxu0 0
        %2723 = vmatprep.subr.bf16.mxu0 0
        %2724 = vmatpush1.bf16.msra.mxu0 0
        %2725 = vmatprep.subr.bf16.mxu0 0
        %2726 = vmatpush1.bf16.msra.mxu0 0
        %2727 = vmatprep.mubr.bf16.mxu0 0
        %2728 = vmatmul.mubr.bf16.gmra.mrb[0].mxu0 %v2481
        %v2729 = vpop.f32.mrb[0].mxu0
        %v2730 = vadd.f32 0.0, %v2729
        %v2731 = vpop.f32.mrb[0].mxu0
        %v2732 = vpop.f32.mrb[0].mxu0
        %v2733 = vadd.f32 0.0, %v2732
        %v2734 = vpop.f32.mrb[0].mxu0
        %2735 = vdwg.mxu0
        %v2740 = vunpack.c.l.b16 %v2455
        %v2741 = vunpack.c.l.b16 %v2456
        %v2742 = vunpack.c.l.b16 %v2457
        %v2743 = vunpack.c.l.b16 %v2458
        %v2744 = vpack.c.b16 %v2741, %v2740
        %v2745 = vpack.c.b16 %v2743, %v2742
        %2748 = vmatprep.subr.bf16.mxu0 0
        %2749 = vmatpush1.bf16.msra.mxu0 %v2744
        %2750 = vmatprep.subr.bf16.mxu0 0
        %2751 = vmatpush1.bf16.msra.mxu0 %v2745
        %2752 = vmatprep.subr.bf16.mxu0 0
        %2753 = vmatpush1.bf16.msra.mxu0 0
        %2754 = vmatprep.subr.bf16.mxu0 0
        %2755 = vmatpush1.bf16.msra.mxu0 0
        %2756 = vmatprep.subr.bf16.mxu0 0
        %2757 = vmatpush1.bf16.msra.mxu0 0
        %2758 = vmatprep.subr.bf16.mxu0 0
        %2759 = vmatpush1.bf16.msra.mxu0 0
        %2760 = vmatprep.subr.bf16.mxu0 0
        %2761 = vmatpush1.bf16.msra.mxu0 0
        %2762 = vmatprep.subr.bf16.mxu0 0
        %2763 = vmatpush1.bf16.msra.mxu0 0
        %2764 = vmatprep.subr.bf16.mxu0 0
        %2765 = vmatpush1.bf16.msra.mxu0 0
        %2766 = vmatprep.subr.bf16.mxu0 0
        %2767 = vmatpush1.bf16.msra.mxu0 0
        %2768 = vmatprep.subr.bf16.mxu0 0
        %2769 = vmatpush1.bf16.msra.mxu0 0
        %2770 = vmatprep.subr.bf16.mxu0 0
        %2771 = vmatpush1.bf16.msra.mxu0 0
        %2772 = vmatprep.subr.bf16.mxu0 0
        %2773 = vmatpush1.bf16.msra.mxu0 0
        %2774 = vmatprep.subr.bf16.mxu0 0
        %2775 = vmatpush1.bf16.msra.mxu0 0
        %2776 = vmatprep.subr.bf16.mxu0 0
        %2777 = vmatpush1.bf16.msra.mxu0 0
        %2778 = vmatprep.subr.bf16.mxu0 0
        %2779 = vmatpush1.bf16.msra.mxu0 0
        %2780 = vmatprep.mubr.bf16.mxu0 0
        %2781 = vmatmul.mubr.bf16.gmra.mrb[0].mxu0 %v2481
        %v2782 = vpop.f32.mrb[0].mxu0
        %v2783 = vadd.f32 0.0, %v2782
        %v2784 = vpop.f32.mrb[0].mxu0
        %v2785 = vpop.f32.mrb[0].mxu0
        %v2786 = vadd.f32 0.0, %v2785
        %v2787 = vpop.f32.mrb[0].mxu0
        %2788 = vdwg.mxu0
        %v2793 = vunpack.c.l.b16 %v2459
        %v2794 = vunpack.c.l.b16 %v2460
        %v2795 = vunpack.c.l.b16 %v2461
        %v2796 = vunpack.c.l.b16 %v2462
        %v2797 = vpack.c.b16 %v2794, %v2793
        %v2798 = vpack.c.b16 %v2796, %v2795
        %2801 = vmatprep.subr.bf16.mxu0 0
        %2802 = vmatpush1.bf16.msra.mxu0 %v2797
        %2803 = vmatprep.subr.bf16.mxu0 0
        %2804 = vmatpush1.bf16.msra.mxu0 %v2798
        %2805 = vmatprep.subr.bf16.mxu0 0
        %2806 = vmatpush1.bf16.msra.mxu0 0
        %2807 = vmatprep.subr.bf16.mxu0 0
        %2808 = vmatpush1.bf16.msra.mxu0 0
        %2809 = vmatprep.subr.bf16.mxu0 0
        %2810 = vmatpush1.bf16.msra.mxu0 0
        %2811 = vmatprep.subr.bf16.mxu0 0
        %2812 = vmatpush1.bf16.msra.mxu0 0
        %2813 = vmatprep.subr.bf16.mxu0 0
        %2814 = vmatpush1.bf16.msra.mxu0 0
        %2815 = vmatprep.subr.bf16.mxu0 0
        %2816 = vmatpush1.bf16.msra.mxu0 0
        %2817 = vmatprep.subr.bf16.mxu0 0
        %2818 = vmatpush1.bf16.msra.mxu0 0
        %2819 = vmatprep.subr.bf16.mxu0 0
        %2820 = vmatpush1.bf16.msra.mxu0 0
        %2821 = vmatprep.subr.bf16.mxu0 0
        %2822 = vmatpush1.bf16.msra.mxu0 0
        %2823 = vmatprep.subr.bf16.mxu0 0
        %2824 = vmatpush1.bf16.msra.mxu0 0
        %2825 = vmatprep.subr.bf16.mxu0 0
        %2826 = vmatpush1.bf16.msra.mxu0 0
        %2827 = vmatprep.subr.bf16.mxu0 0
        %2828 = vmatpush1.bf16.msra.mxu0 0
        %2829 = vmatprep.subr.bf16.mxu0 0
        %2830 = vmatpush1.bf16.msra.mxu0 0
        %2831 = vmatprep.subr.bf16.mxu0 0
        %2832 = vmatpush1.bf16.msra.mxu0 0
        %2833 = vmatprep.mubr.bf16.mxu0 0
        %2834 = vmatmul.mubr.bf16.gmra.mrb[0].mxu0 %v2481
        %v2835 = vpop.f32.mrb[0].mxu0
        %v2836 = vadd.f32 0.0, %v2835
        %v2837 = vpop.f32.mrb[0].mxu0
        %v2838 = vpop.f32.mrb[0].mxu0
        %v2839 = vadd.f32 0.0, %v2838
        %v2840 = vpop.f32.mrb[0].mxu0
        %2841 = vdwg.mxu0
        %v2846 = vunpack.c.l.b16 %v2463
        %v2847 = vunpack.c.l.b16 %v2464
        %v2848 = vunpack.c.l.b16 %v2465
        %v2849 = vunpack.c.l.b16 %v2466
        %v2850 = vpack.c.b16 %v2847, %v2846
        %v2851 = vpack.c.b16 %v2849, %v2848
        %2854 = vmatprep.subr.bf16.mxu0 0
        %2855 = vmatpush1.bf16.msra.mxu0 %v2850
        %2856 = vmatprep.subr.bf16.mxu0 0
        %2857 = vmatpush1.bf16.msra.mxu0 %v2851
        %2858 = vmatprep.subr.bf16.mxu0 0
        %2859 = vmatpush1.bf16.msra.mxu0 0
        %2860 = vmatprep.subr.bf16.mxu0 0
        %2861 = vmatpush1.bf16.msra.mxu0 0
        %2862 = vmatprep.subr.bf16.mxu0 0
        %2863 = vmatpush1.bf16.msra.mxu0 0
        %2864 = vmatprep.subr.bf16.mxu0 0
        %2865 = vmatpush1.bf16.msra.mxu0 0
        %2866 = vmatprep.subr.bf16.mxu0 0
        %2867 = vmatpush1.bf16.msra.mxu0 0
        %2868 = vmatprep.subr.bf16.mxu0 0
        %2869 = vmatpush1.bf16.msra.mxu0 0
        %2870 = vmatprep.subr.bf16.mxu0 0
        %2871 = vmatpush1.bf16.msra.mxu0 0
        %2872 = vmatprep.subr.bf16.mxu0 0
        %2873 = vmatpush1.bf16.msra.mxu0 0
        %2874 = vmatprep.subr.bf16.mxu0 0
        %2875 = vmatpush1.bf16.msra.mxu0 0
        %2876 = vmatprep.subr.bf16.mxu0 0
        %2877 = vmatpush1.bf16.msra.mxu0 0
        %2878 = vmatprep.subr.bf16.mxu0 0
        %2879 = vmatpush1.bf16.msra.mxu0 0
        %2880 = vmatprep.subr.bf16.mxu0 0
        %2881 = vmatpush1.bf16.msra.mxu0 0
        %2882 = vmatprep.subr.bf16.mxu0 0
        %2883 = vmatpush1.bf16.msra.mxu0 0
        %2884 = vmatprep.subr.bf16.mxu0 0
        %2885 = vmatpush1.bf16.msra.mxu0 0
        %2886 = vmatprep.mubr.bf16.mxu0 0
        %2887 = vmatmul.mubr.bf16.gmra.mrb[0].mxu0 %v2481
        %v2888 = vpop.f32.mrb[0].mxu0
        %v2889 = vadd.f32 0.0, %v2888
        %v2890 = vpop.f32.mrb[0].mxu0
        %v2891 = vpop.f32.mrb[0].mxu0
        %v2892 = vadd.f32 0.0, %v2891
        %v2893 = vpop.f32.mrb[0].mxu0
        %2894 = vdwg.mxu0
        %v2895 = vpack.c.bf16 %v2274, %v2274
        %v2896 = vpack.c.bf16 %v2326, %v2326
        %v2897 = vpack.c.bf16 %v2378, %v2378
        %v2898 = vpack.c.bf16 %v2430, %v2430
        %v2899 = vpack.c.bf16 %v2521, %v2518
        %v2900 = vpack.c.bf16 %v2574, %v2571
        %v2901 = vpack.c.bf16 %v2627, %v2624
        %v2902 = vpack.c.bf16 %v2680, %v2677
        %v2904 = vsel %vm1544, %v2895, 0
        %v2907 = vsel %vm1544, %v2899, 0
        %2909 = vmatprep.subr.bf16.mxu0 0
        %2910 = vmatpush1.bf16.xpose.msra.mxu0 %v2907
        %2911 = vmatprep.subr.bf16.mxu0 0
        %2912 = vmatpush1.bf16.xpose.msra.mxu0 0
        %2913 = vmatprep.subr.bf16.mxu0 0
        %2914 = vmatpush1.bf16.xpose.msra.mxu0 0
        %2915 = vmatprep.subr.bf16.mxu0 0
        %2916 = vmatpush1.bf16.xpose.msra.mxu0 0
        %2917 = vmatprep.subr.bf16.mxu0 0
        %2918 = vmatpush1.bf16.xpose.msra.mxu0 0
        %2919 = vmatprep.subr.bf16.mxu0 0
        %2920 = vmatpush1.bf16.xpose.msra.mxu0 0
        %2921 = vmatprep.subr.bf16.mxu0 0
        %2922 = vmatpush1.bf16.xpose.msra.mxu0 0
        %2923 = vmatprep.subr.bf16.mxu0 0
        %2924 = vmatpush1.bf16.xpose.msra.mxu0 0
        %2925 = vmatprep.subr.bf16.mxu0 0
        %2926 = vmatpush1.bf16.xpose.msra.mxu0 0
        %2927 = vmatprep.subr.bf16.mxu0 0
        %2928 = vmatpush1.bf16.xpose.msra.mxu0 0
        %2929 = vmatprep.subr.bf16.mxu0 0
        %2930 = vmatpush1.bf16.xpose.msra.mxu0 0
        %2931 = vmatprep.subr.bf16.mxu0 0
        %2932 = vmatpush1.bf16.xpose.msra.mxu0 0
        %2933 = vmatprep.subr.bf16.mxu0 0
        %2934 = vmatpush1.bf16.xpose.msra.mxu0 0
        %2935 = vmatprep.subr.bf16.mxu0 0
        %2936 = vmatpush1.bf16.xpose.msra.mxu0 0
        %2937 = vmatprep.subr.bf16.mxu0 0
        %2938 = vmatpush1.bf16.xpose.msra.mxu0 0
        %2939 = vmatprep.subr.bf16.mxu0 0
        %2940 = vmatpush1.bf16.xpose.msra.mxu0 0
        %2941 = vmatprep.mubr.bf16.mxu0 0
        %2942 = vmatmul.mubr.bf16.gmra.mrb[0].mxu0 %v2904
        %v2943 = vpop.f32.mrb[0].mxu0
        %v2944 = vadd.f32 0.0, %v2943
        %v2945 = vpop.f32.mrb[0].mxu0
        %v2946 = vpop.f32.mrb[0].mxu0
        %v2947 = vpop.f32.mrb[0].mxu0
        %2948 = vdwg.mxu0
        %v2950 = vsel %vm1544, %v2896, 0
        %v2953 = vsel %vm1544, %v2900, 0
        %2955 = vmatprep.subr.bf16.mxu0 0
        %2956 = vmatpush1.bf16.xpose.msra.mxu0 %v2953
        %2957 = vmatprep.subr.bf16.mxu0 0
        %2958 = vmatpush1.bf16.xpose.msra.mxu0 0
        %2959 = vmatprep.subr.bf16.mxu0 0
        %2960 = vmatpush1.bf16.xpose.msra.mxu0 0
        %2961 = vmatprep.subr.bf16.mxu0 0
        %2962 = vmatpush1.bf16.xpose.msra.mxu0 0
        %2963 = vmatprep.subr.bf16.mxu0 0
        %2964 = vmatpush1.bf16.xpose.msra.mxu0 0
        %2965 = vmatprep.subr.bf16.mxu0 0
        %2966 = vmatpush1.bf16.xpose.msra.mxu0 0
        %2967 = vmatprep.subr.bf16.mxu0 0
        %2968 = vmatpush1.bf16.xpose.msra.mxu0 0
        %2969 = vmatprep.subr.bf16.mxu0 0
        %2970 = vmatpush1.bf16.xpose.msra.mxu0 0
        %2971 = vmatprep.subr.bf16.mxu0 0
        %2972 = vmatpush1.bf16.xpose.msra.mxu0 0
        %2973 = vmatprep.subr.bf16.mxu0 0
        %2974 = vmatpush1.bf16.xpose.msra.mxu0 0
        %2975 = vmatprep.subr.bf16.mxu0 0
        %2976 = vmatpush1.bf16.xpose.msra.mxu0 0
        %2977 = vmatprep.subr.bf16.mxu0 0
        %2978 = vmatpush1.bf16.xpose.msra.mxu0 0
        %2979 = vmatprep.subr.bf16.mxu0 0
        %2980 = vmatpush1.bf16.xpose.msra.mxu0 0
        %2981 = vmatprep.subr.bf16.mxu0 0
        %2982 = vmatpush1.bf16.xpose.msra.mxu0 0
        %2983 = vmatprep.subr.bf16.mxu0 0
        %2984 = vmatpush1.bf16.xpose.msra.mxu0 0
        %2985 = vmatprep.subr.bf16.mxu0 0
        %2986 = vmatpush1.bf16.xpose.msra.mxu0 0
        %2987 = vmatprep.mubr.bf16.mxu0 0
        %2988 = vmatmul.mubr.bf16.gmra.mrb[0].mxu0 %v2950
        %v2989 = vpop.f32.mrb[0].mxu0
        %v2990 = vadd.f32 0.0, %v2989
        %v2991 = vpop.f32.mrb[0].mxu0
        %v2992 = vpop.f32.mrb[0].mxu0
        %v2993 = vpop.f32.mrb[0].mxu0
        %2994 = vdwg.mxu0
        %v2996 = vsel %vm1544, %v2897, 0
        %v2999 = vsel %vm1544, %v2901, 0
        %3001 = vmatprep.subr.bf16.mxu0 0
        %3002 = vmatpush1.bf16.xpose.msra.mxu0 %v2999
        %3003 = vmatprep.subr.bf16.mxu0 0
        %3004 = vmatpush1.bf16.xpose.msra.mxu0 0
        %3005 = vmatprep.subr.bf16.mxu0 0
        %3006 = vmatpush1.bf16.xpose.msra.mxu0 0
        %3007 = vmatprep.subr.bf16.mxu0 0
        %3008 = vmatpush1.bf16.xpose.msra.mxu0 0
        %3009 = vmatprep.subr.bf16.mxu0 0
        %3010 = vmatpush1.bf16.xpose.msra.mxu0 0
        %3011 = vmatprep.subr.bf16.mxu0 0
        %3012 = vmatpush1.bf16.xpose.msra.mxu0 0
        %3013 = vmatprep.subr.bf16.mxu0 0
        %3014 = vmatpush1.bf16.xpose.msra.mxu0 0
        %3015 = vmatprep.subr.bf16.mxu0 0
        %3016 = vmatpush1.bf16.xpose.msra.mxu0 0
        %3017 = vmatprep.subr.bf16.mxu0 0
        %3018 = vmatpush1.bf16.xpose.msra.mxu0 0
        %3019 = vmatprep.subr.bf16.mxu0 0
        %3020 = vmatpush1.bf16.xpose.msra.mxu0 0
        %3021 = vmatprep.subr.bf16.mxu0 0
        %3022 = vmatpush1.bf16.xpose.msra.mxu0 0
        %3023 = vmatprep.subr.bf16.mxu0 0
        %3024 = vmatpush1.bf16.xpose.msra.mxu0 0
        %3025 = vmatprep.subr.bf16.mxu0 0
        %3026 = vmatpush1.bf16.xpose.msra.mxu0 0
        %3027 = vmatprep.subr.bf16.mxu0 0
        %3028 = vmatpush1.bf16.xpose.msra.mxu0 0
        %3029 = vmatprep.subr.bf16.mxu0 0
        %3030 = vmatpush1.bf16.xpose.msra.mxu0 0
        %3031 = vmatprep.subr.bf16.mxu0 0
        %3032 = vmatpush1.bf16.xpose.msra.mxu0 0
        %3033 = vmatprep.mubr.bf16.mxu0 0
        %3034 = vmatmul.mubr.bf16.gmra.mrb[0].mxu0 %v2996
        %v3035 = vpop.f32.mrb[0].mxu0
        %v3036 = vadd.f32 0.0, %v3035
        %v3037 = vpop.f32.mrb[0].mxu0
        %v3038 = vpop.f32.mrb[0].mxu0
        %v3039 = vpop.f32.mrb[0].mxu0
        %3040 = vdwg.mxu0
        %v3042 = vsel %vm1544, %v2898, 0
        %v3045 = vsel %vm1544, %v2902, 0
        %3047 = vmatprep.subr.bf16.mxu0 0
        %3048 = vmatpush1.bf16.xpose.msra.mxu0 %v3045
        %3049 = vmatprep.subr.bf16.mxu0 0
        %3050 = vmatpush1.bf16.xpose.msra.mxu0 0
        %3051 = vmatprep.subr.bf16.mxu0 0
        %3052 = vmatpush1.bf16.xpose.msra.mxu0 0
        %3053 = vmatprep.subr.bf16.mxu0 0
        %3054 = vmatpush1.bf16.xpose.msra.mxu0 0
        %3055 = vmatprep.subr.bf16.mxu0 0
        %3056 = vmatpush1.bf16.xpose.msra.mxu0 0
        %3057 = vmatprep.subr.bf16.mxu0 0
        %3058 = vmatpush1.bf16.xpose.msra.mxu0 0
        %3059 = vmatprep.subr.bf16.mxu0 0
        %3060 = vmatpush1.bf16.xpose.msra.mxu0 0
        %3061 = vmatprep.subr.bf16.mxu0 0
        %3062 = vmatpush1.bf16.xpose.msra.mxu0 0
        %3063 = vmatprep.subr.bf16.mxu0 0
        %3064 = vmatpush1.bf16.xpose.msra.mxu0 0
        %3065 = vmatprep.subr.bf16.mxu0 0
        %3066 = vmatpush1.bf16.xpose.msra.mxu0 0
        %3067 = vmatprep.subr.bf16.mxu0 0
        %3068 = vmatpush1.bf16.xpose.msra.mxu0 0
        %3069 = vmatprep.subr.bf16.mxu0 0
        %3070 = vmatpush1.bf16.xpose.msra.mxu0 0
        %3071 = vmatprep.subr.bf16.mxu0 0
        %3072 = vmatpush1.bf16.xpose.msra.mxu0 0
        %3073 = vmatprep.subr.bf16.mxu0 0
        %3074 = vmatpush1.bf16.xpose.msra.mxu0 0
        %3075 = vmatprep.subr.bf16.mxu0 0
        %3076 = vmatpush1.bf16.xpose.msra.mxu0 0
        %3077 = vmatprep.subr.bf16.mxu0 0
        %3078 = vmatpush1.bf16.xpose.msra.mxu0 0
        %3079 = vmatprep.mubr.bf16.mxu0 0
        %3080 = vmatmul.mubr.bf16.gmra.mrb[0].mxu0 %v3042
        %v3081 = vpop.f32.mrb[0].mxu0
        %v3082 = vadd.f32 0.0, %v3081
        %v3083 = vpop.f32.mrb[0].mxu0
        %v3084 = vpop.f32.mrb[0].mxu0
        %v3085 = vpop.f32.mrb[0].mxu0
        %3086 = vdwg.mxu0
        %vm3087 = vcmask 97280
        %v3088 = vsel %vm3087, %v2944, -inf
        %3089 = vmax.xlane.f32.xlu0 %v3088
        %v3090 = vpop.xlane.xlu0 %3089
        %v3091 = vsel %vm3087, %v2990, -inf
        %3092 = vmax.xlane.f32.xlu0 %v3091
        %v3093 = vpop.xlane.xlu0 %3092
        %v3094 = vsel %vm3087, %v3036, -inf
        %3095 = vmax.xlane.f32.xlu0 %v3094
        %v3096 = vpop.xlane.xlu0 %3095
        %v3097 = vsel %vm3087, %v3082, -inf
        %3098 = vmax.xlane.f32.xlu0 %v3097
        %v3099 = vpop.xlane.xlu0 %3098
        %v3100 = vsub.f32 %v2944, %v3090
        %v3101 = vsub.f32 %v2990, %v3093
        %v3102 = vsub.f32 %v3036, %v3096
        %v3103 = vsub.f32 %v3082, %v3099
        %v3104 = vmul.f32 %v3100, 1.442695
        %v3105 = vpow.pop %v3104
        %v3106 = vmul.f32 %v3101, 1.442695
        %v3107 = vpow.pop %v3106
        %v3108 = vmul.f32 %v3102, 1.442695
        %v3109 = vpow.pop %v3108
        %v3110 = vmul.f32 %v3103, 1.442695
        %v3111 = vpow.pop %v3110
        %v3112 = vsel %vm3087, %v3105, 0.0
        %3113 = vadd.xlane.f32.xlu0 %v3112
        %v3114 = vpop.xlane.xlu0 %3113
        %v3115 = vsel %vm3087, %v3107, 0.0
        %3116 = vadd.xlane.f32.xlu0 %v3115
        %v3117 = vpop.xlane.xlu0 %3116
        %v3118 = vsel %vm3087, %v3109, 0.0
        %3119 = vadd.xlane.f32.xlu0 %v3118
        %v3120 = vpop.xlane.xlu0 %3119
        %v3121 = vsel %vm3087, %v3111, 0.0
        %3122 = vadd.xlane.f32.xlu0 %v3121
        %v3123 = vpop.xlane.xlu0 %3122
        %v3124 = vrcp.pop %v3114
        %v3125 = vrcp.pop %v3117
        %v3126 = vrcp.pop %v3120
        %v3127 = vrcp.pop %v3123
        %v3128 = vmul.f32 %v3105, %v3124
        %v3129 = vmul.f32 %v3107, %v3125
        %v3130 = vmul.f32 %v3109, %v3126
        %v3131 = vmul.f32 %v3111, %v3127
        %v3132 = vpack.c.bf16 %v3128, %v3128
        %v3133 = vpack.c.bf16 %v3129, %v3129
        %v3134 = vpack.c.bf16 %v3130, %v3130
        %v3135 = vpack.c.bf16 %v3131, %v3131
        %v3136 = vpack.c.bf16 %v2733, %v2730
        %v3137 = vpack.c.bf16 %v2786, %v2783
        %v3138 = vpack.c.bf16 %v2839, %v2836
        %v3139 = vpack.c.bf16 %v2892, %v2889
        %v3141 = vsel %vm3087, %v3132, 0
        %vm3143 = vcmask 1045504
        %v3145 = vsel %vm3143, %v3136, 0
        %3147 = vmatprep.subr.bf16.mxu0 0
        %3148 = vmatpush1.bf16.msra.mxu0 %v3145
        %3149 = vmatprep.subr.bf16.mxu0 0
        %3150 = vmatpush1.bf16.msra.mxu0 0
        %3151 = vmatprep.subr.bf16.mxu0 0
        %3152 = vmatpush1.bf16.msra.mxu0 0
        %3153 = vmatprep.subr.bf16.mxu0 0
        %3154 = vmatpush1.bf16.msra.mxu0 0
        %3155 = vmatprep.subr.bf16.mxu0 0
        %3156 = vmatpush1.bf16.msra.mxu0 0
        %3157 = vmatprep.subr.bf16.mxu0 0
        %3158 = vmatpush1.bf16.msra.mxu0 0
        %3159 = vmatprep.subr.bf16.mxu0 0
        %3160 = vmatpush1.bf16.msra.mxu0 0
        %3161 = vmatprep.subr.bf16.mxu0 0
        %3162 = vmatpush1.bf16.msra.mxu0 0
        %3163 = vmatprep.subr.bf16.mxu0 0
        %3164 = vmatpush1.bf16.msra.mxu0 0
        %3165 = vmatprep.subr.bf16.mxu0 0
        %3166 = vmatpush1.bf16.msra.mxu0 0
        %3167 = vmatprep.subr.bf16.mxu0 0
        %3168 = vmatpush1.bf16.msra.mxu0 0
        %3169 = vmatprep.subr.bf16.mxu0 0
        %3170 = vmatpush1.bf16.msra.mxu0 0
        %3171 = vmatprep.subr.bf16.mxu0 0
        %3172 = vmatpush1.bf16.msra.mxu0 0
        %3173 = vmatprep.subr.bf16.mxu0 0
        %3174 = vmatpush1.bf16.msra.mxu0 0
        %3175 = vmatprep.subr.bf16.mxu0 0
        %3176 = vmatpush1.bf16.msra.mxu0 0
        %3177 = vmatprep.subr.bf16.mxu0 0
        %3178 = vmatpush1.bf16.msra.mxu0 0
        %3179 = vmatprep.mubr.bf16.mxu0 0
        %3180 = vmatmul.mubr.bf16.gmra.mrb[0].mxu0 %v3141
        %v3181 = vpop.f32.mrb[0].mxu0
        %v3182 = vadd.f32 0.0, %v3181
        %v3183 = vpop.f32.mrb[0].mxu0
        %v3184 = vpop.f32.mrb[0].mxu0
        %v3185 = vpop.f32.mrb[0].mxu0
        %3186 = vdwg.mxu0
        %v3188 = vsel %vm3087, %v3133, 0
        %v3191 = vsel %vm3143, %v3137, 0
        %3193 = vmatprep.subr.bf16.mxu0 0
        %3194 = vmatpush1.bf16.msra.mxu0 %v3191
        %3195 = vmatprep.subr.bf16.mxu0 0
        %3196 = vmatpush1.bf16.msra.mxu0 0
        %3197 = vmatprep.subr.bf16.mxu0 0
        %3198 = vmatpush1.bf16.msra.mxu0 0
        %3199 = vmatprep.subr.bf16.mxu0 0
        %3200 = vmatpush1.bf16.msra.mxu0 0
        %3201 = vmatprep.subr.bf16.mxu0 0
        %3202 = vmatpush1.bf16.msra.mxu0 0
        %3203 = vmatprep.subr.bf16.mxu0 0
        %3204 = vmatpush1.bf16.msra.mxu0 0
        %3205 = vmatprep.subr.bf16.mxu0 0
        %3206 = vmatpush1.bf16.msra.mxu0 0
        %3207 = vmatprep.subr.bf16.mxu0 0
        %3208 = vmatpush1.bf16.msra.mxu0 0
        %3209 = vmatprep.subr.bf16.mxu0 0
        %3210 = vmatpush1.bf16.msra.mxu0 0
        %3211 = vmatprep.subr.bf16.mxu0 0
        %3212 = vmatpush1.bf16.msra.mxu0 0
        %3213 = vmatprep.subr.bf16.mxu0 0
        %3214 = vmatpush1.bf16.msra.mxu0 0
        %3215 = vmatprep.subr.bf16.mxu0 0
        %3216 = vmatpush1.bf16.msra.mxu0 0
        %3217 = vmatprep.subr.bf16.mxu0 0
        %3218 = vmatpush1.bf16.msra.mxu0 0
        %3219 = vmatprep.subr.bf16.mxu0 0
        %3220 = vmatpush1.bf16.msra.mxu0 0
        %3221 = vmatprep.subr.bf16.mxu0 0
        %3222 = vmatpush1.bf16.msra.mxu0 0
        %3223 = vmatprep.subr.bf16.mxu0 0
        %3224 = vmatpush1.bf16.msra.mxu0 0
        %3225 = vmatprep.mubr.bf16.mxu0 0
        %3226 = vmatmul.mubr.bf16.gmra.mrb[0].mxu0 %v3188
        %v3227 = vpop.f32.mrb[0].mxu0
        %v3228 = vadd.f32 0.0, %v3227
        %v3229 = vpop.f32.mrb[0].mxu0
        %v3230 = vpop.f32.mrb[0].mxu0
        %v3231 = vpop.f32.mrb[0].mxu0
        %3232 = vdwg.mxu0
        %v3234 = vsel %vm3087, %v3134, 0
        %v3237 = vsel %vm3143, %v3138, 0
        %3239 = vmatprep.subr.bf16.mxu0 0
        %3240 = vmatpush1.bf16.msra.mxu0 %v3237
        %3241 = vmatprep.subr.bf16.mxu0 0
        %3242 = vmatpush1.bf16.msra.mxu0 0
        %3243 = vmatprep.subr.bf16.mxu0 0
        %3244 = vmatpush1.bf16.msra.mxu0 0
        %3245 = vmatprep.subr.bf16.mxu0 0
        %3246 = vmatpush1.bf16.msra.mxu0 0
        %3247 = vmatprep.subr.bf16.mxu0 0
        %3248 = vmatpush1.bf16.msra.mxu0 0
        %3249 = vmatprep.subr.bf16.mxu0 0
        %3250 = vmatpush1.bf16.msra.mxu0 0
        %3251 = vmatprep.subr.bf16.mxu0 0
        %3252 = vmatpush1.bf16.msra.mxu0 0
        %3253 = vmatprep.subr.bf16.mxu0 0
        %3254 = vmatpush1.bf16.msra.mxu0 0
        %3255 = vmatprep.subr.bf16.mxu0 0
        %3256 = vmatpush1.bf16.msra.mxu0 0
        %3257 = vmatprep.subr.bf16.mxu0 0
        %3258 = vmatpush1.bf16.msra.mxu0 0
        %3259 = vmatprep.subr.bf16.mxu0 0
        %3260 = vmatpush1.bf16.msra.mxu0 0
        %3261 = vmatprep.subr.bf16.mxu0 0
        %3262 = vmatpush1.bf16.msra.mxu0 0
        %3263 = vmatprep.subr.bf16.mxu0 0
        %3264 = vmatpush1.bf16.msra.mxu0 0
        %3265 = vmatprep.subr.bf16.mxu0 0
        %3266 = vmatpush1.bf16.msra.mxu0 0
        %3267 = vmatprep.subr.bf16.mxu0 0
        %3268 = vmatpush1.bf16.msra.mxu0 0
        %3269 = vmatprep.subr.bf16.mxu0 0
        %3270 = vmatpush1.bf16.msra.mxu0 0
        %3271 = vmatprep.mubr.bf16.mxu0 0
        %3272 = vmatmul.mubr.bf16.gmra.mrb[0].mxu0 %v3234
        %v3273 = vpop.f32.mrb[0].mxu0
        %v3274 = vadd.f32 0.0, %v3273
        %v3275 = vpop.f32.mrb[0].mxu0
        %v3276 = vpop.f32.mrb[0].mxu0
        %v3277 = vpop.f32.mrb[0].mxu0
        %3278 = vdwg.mxu0
        %v3280 = vsel %vm3087, %v3135, 0
        %v3283 = vsel %vm3143, %v3139, 0
        %3285 = vmatprep.subr.bf16.mxu0 0
        %3286 = vmatpush1.bf16.msra.mxu0 %v3283
        %3287 = vmatprep.subr.bf16.mxu0 0
        %3288 = vmatpush1.bf16.msra.mxu0 0
        %3289 = vmatprep.subr.bf16.mxu0 0
        %3290 = vmatpush1.bf16.msra.mxu0 0
        %3291 = vmatprep.subr.bf16.mxu0 0
        %3292 = vmatpush1.bf16.msra.mxu0 0
        %3293 = vmatprep.subr.bf16.mxu0 0
        %3294 = vmatpush1.bf16.msra.mxu0 0
        %3295 = vmatprep.subr.bf16.mxu0 0
        %3296 = vmatpush1.bf16.msra.mxu0 0
        %3297 = vmatprep.subr.bf16.mxu0 0
        %3298 = vmatpush1.bf16.msra.mxu0 0
        %3299 = vmatprep.subr.bf16.mxu0 0
        %3300 = vmatpush1.bf16.msra.mxu0 0
        %3301 = vmatprep.subr.bf16.mxu0 0
        %3302 = vmatpush1.bf16.msra.mxu0 0
        %3303 = vmatprep.subr.bf16.mxu0 0
        %3304 = vmatpush1.bf16.msra.mxu0 0
        %3305 = vmatprep.subr.bf16.mxu0 0
        %3306 = vmatpush1.bf16.msra.mxu0 0
        %3307 = vmatprep.subr.bf16.mxu0 0
        %3308 = vmatpush1.bf16.msra.mxu0 0
        %3309 = vmatprep.subr.bf16.mxu0 0
        %3310 = vmatpush1.bf16.msra.mxu0 0
        %3311 = vmatprep.subr.bf16.mxu0 0
        %3312 = vmatpush1.bf16.msra.mxu0 0
        %3313 = vmatprep.subr.bf16.mxu0 0
        %3314 = vmatpush1.bf16.msra.mxu0 0
        %3315 = vmatprep.subr.bf16.mxu0 0
        %3316 = vmatpush1.bf16.msra.mxu0 0
        %3317 = vmatprep.mubr.bf16.mxu0 0
        %3318 = vmatmul.mubr.bf16.gmra.mrb[0].mxu0 %v3280
        %v3319 = vpop.f32.mrb[0].mxu0
        %v3320 = vadd.f32 0.0, %v3319
        %v3321 = vpop.f32.mrb[0].mxu0
        %v3322 = vpop.f32.mrb[0].mxu0
        %v3323 = vpop.f32.mrb[0].mxu0
        %3324 = vdwg.mxu0
        %v3325 = vld [vmem:[%s813] sm:$0xf]
        %v3326 = vld [vmem:[%s813 + $0x4] sm:$0xf]
        %v3327 = vld [vmem:[%s813 + $0x8] sm:$0xf]
        %v3328 = vld [vmem:[%s813 + $0xc] sm:$0xf]
        %v3329 = vpack.c.bf16 %v3182, %v3182
        %v3330 = vpack.c.bf16 %v3228, %v3228
        %v3331 = vpack.c.bf16 %v3274, %v3274
        %v3332 = vpack.c.bf16 %v3320, %v3320
        %v3334 = vsel %vm1544, %v3329, 0
        %v3337 = vsel %vm1788, %v3325, 0
        %3339 = vmatprep.subr.bf16.mxu0 0
        %3340 = vmatpush1.bf16.msra.mxu0 %v3337
        %3341 = vmatprep.subr.bf16.mxu0 0
        %3342 = vmatpush1.bf16.msra.mxu0 0
        %3343 = vmatprep.subr.bf16.mxu0 0
        %3344 = vmatpush1.bf16.msra.mxu0 0
        %3345 = vmatprep.subr.bf16.mxu0 0
        %3346 = vmatpush1.bf16.msra.mxu0 0
        %3347 = vmatprep.subr.bf16.mxu0 0
        %3348 = vmatpush1.bf16.msra.mxu0 0
        %3349 = vmatprep.subr.bf16.mxu0 0
        %3350 = vmatpush1.bf16.msra.mxu0 0
        %3351 = vmatprep.subr.bf16.mxu0 0
        %3352 = vmatpush1.bf16.msra.mxu0 0
        %3353 = vmatprep.subr.bf16.mxu0 0
        %3354 = vmatpush1.bf16.msra.mxu0 0
        %3355 = vmatprep.subr.bf16.mxu0 0
        %3356 = vmatpush1.bf16.msra.mxu0 0
        %3357 = vmatprep.subr.bf16.mxu0 0
        %3358 = vmatpush1.bf16.msra.mxu0 0
        %3359 = vmatprep.subr.bf16.mxu0 0
        %3360 = vmatpush1.bf16.msra.mxu0 0
        %3361 = vmatprep.subr.bf16.mxu0 0
        %3362 = vmatpush1.bf16.msra.mxu0 0
        %3363 = vmatprep.subr.bf16.mxu0 0
        %3364 = vmatpush1.bf16.msra.mxu0 0
        %3365 = vmatprep.subr.bf16.mxu0 0
        %3366 = vmatpush1.bf16.msra.mxu0 0
        %3367 = vmatprep.subr.bf16.mxu0 0
        %3368 = vmatpush1.bf16.msra.mxu0 0
        %3369 = vmatprep.subr.bf16.mxu0 0
        %3370 = vmatpush1.bf16.msra.mxu0 0
        %3371 = vmatprep.mubr.bf16.mxu0 0
        %3372 = vmatmul.mubr.bf16.gmra.mrb[0].mxu0 %v3334
        %v3373 = vpop.f32.mrb[0].mxu0
        %v3374 = vadd.f32 0.0, %v3373
        %v3375 = vpop.f32.mrb[0].mxu0
        %v3376 = vpop.f32.mrb[0].mxu0
        %v3377 = vpop.f32.mrb[0].mxu0
        %3378 = vdwg.mxu0
        %v3380 = vsel %vm1544, %v3330, 0
        %v3383 = vsel %vm1788, %v3326, 0
        %3385 = vmatprep.subr.bf16.mxu0 0
        %3386 = vmatpush1.bf16.msra.mxu0 %v3383
        %3387 = vmatprep.subr.bf16.mxu0 0
        %3388 = vmatpush1.bf16.msra.mxu0 0
        %3389 = vmatprep.subr.bf16.mxu0 0
        %3390 = vmatpush1.bf16.msra.mxu0 0
        %3391 = vmatprep.subr.bf16.mxu0 0
        %3392 = vmatpush1.bf16.msra.mxu0 0
        %3393 = vmatprep.subr.bf16.mxu0 0
        %3394 = vmatpush1.bf16.msra.mxu0 0
        %3395 = vmatprep.subr.bf16.mxu0 0
        %3396 = vmatpush1.bf16.msra.mxu0 0
        %3397 = vmatprep.subr.bf16.mxu0 0
        %3398 = vmatpush1.bf16.msra.mxu0 0
        %3399 = vmatprep.subr.bf16.mxu0 0
        %3400 = vmatpush1.bf16.msra.mxu0 0
        %3401 = vmatprep.subr.bf16.mxu0 0
        %3402 = vmatpush1.bf16.msra.mxu0 0
        %3403 = vmatprep.subr.bf16.mxu0 0
        %3404 = vmatpush1.bf16.msra.mxu0 0
        %3405 = vmatprep.subr.bf16.mxu0 0
        %3406 = vmatpush1.bf16.msra.mxu0 0
        %3407 = vmatprep.subr.bf16.mxu0 0
        %3408 = vmatpush1.bf16.msra.mxu0 0
        %3409 = vmatprep.subr.bf16.mxu0 0
        %3410 = vmatpush1.bf16.msra.mxu0 0
        %3411 = vmatprep.subr.bf16.mxu0 0
        %3412 = vmatpush1.bf16.msra.mxu0 0
        %3413 = vmatprep.subr.bf16.mxu0 0
        %3414 = vmatpush1.bf16.msra.mxu0 0
        %3415 = vmatprep.subr.bf16.mxu0 0
        %3416 = vmatpush1.bf16.msra.mxu0 0
        %3417 = vmatprep.mubr.bf16.mxu0 0
        %3418 = vmatmul.mubr.bf16.gmra.mrb[0].mxu0 %v3380
        %v3419 = vpop.f32.mrb[0].mxu0
        %v3420 = vadd.f32 0.0, %v3419
        %v3421 = vpop.f32.mrb[0].mxu0
        %v3422 = vpop.f32.mrb[0].mxu0
        %v3423 = vpop.f32.mrb[0].mxu0
        %3424 = vdwg.mxu0
        %v3426 = vsel %vm1544, %v3331, 0
        %v3429 = vsel %vm1788, %v3327, 0
        %3431 = vmatprep.subr.bf16.mxu0 0
        %3432 = vmatpush1.bf16.msra.mxu0 %v3429
        %3433 = vmatprep.subr.bf16.mxu0 0
        %3434 = vmatpush1.bf16.msra.mxu0 0
        %3435 = vmatprep.subr.bf16.mxu0 0
        %3436 = vmatpush1.bf16.msra.mxu0 0
        %3437 = vmatprep.subr.bf16.mxu0 0
        %3438 = vmatpush1.bf16.msra.mxu0 0
        %3439 = vmatprep.subr.bf16.mxu0 0
        %3440 = vmatpush1.bf16.msra.mxu0 0
        %3441 = vmatprep.subr.bf16.mxu0 0
        %3442 = vmatpush1.bf16.msra.mxu0 0
        %3443 = vmatprep.subr.bf16.mxu0 0
        %3444 = vmatpush1.bf16.msra.mxu0 0
        %3445 = vmatprep.subr.bf16.mxu0 0
        %3446 = vmatpush1.bf16.msra.mxu0 0
        %3447 = vmatprep.subr.bf16.mxu0 0
        %3448 = vmatpush1.bf16.msra.mxu0 0
        %3449 = vmatprep.subr.bf16.mxu0 0
        %3450 = vmatpush1.bf16.msra.mxu0 0
        %3451 = vmatprep.subr.bf16.mxu0 0
        %3452 = vmatpush1.bf16.msra.mxu0 0
        %3453 = vmatprep.subr.bf16.mxu0 0
        %3454 = vmatpush1.bf16.msra.mxu0 0
        %3455 = vmatprep.subr.bf16.mxu0 0
        %3456 = vmatpush1.bf16.msra.mxu0 0
        %3457 = vmatprep.subr.bf16.mxu0 0
        %3458 = vmatpush1.bf16.msra.mxu0 0
        %3459 = vmatprep.subr.bf16.mxu0 0
        %3460 = vmatpush1.bf16.msra.mxu0 0
        %3461 = vmatprep.subr.bf16.mxu0 0
        %3462 = vmatpush1.bf16.msra.mxu0 0
        %3463 = vmatprep.mubr.bf16.mxu0 0
        %3464 = vmatmul.mubr.bf16.gmra.mrb[0].mxu0 %v3426
        %v3465 = vpop.f32.mrb[0].mxu0
        %v3466 = vadd.f32 0.0, %v3465
        %v3467 = vpop.f32.mrb[0].mxu0
        %v3468 = vpop.f32.mrb[0].mxu0
        %v3469 = vpop.f32.mrb[0].mxu0
        %3470 = vdwg.mxu0
        %v3472 = vsel %vm1544, %v3332, 0
        %v3475 = vsel %vm1788, %v3328, 0
        %3477 = vmatprep.subr.bf16.mxu0 0
        %3478 = vmatpush1.bf16.msra.mxu0 %v3475
        %3479 = vmatprep.subr.bf16.mxu0 0
        %3480 = vmatpush1.bf16.msra.mxu0 0
        %3481 = vmatprep.subr.bf16.mxu0 0
        %3482 = vmatpush1.bf16.msra.mxu0 0
        %3483 = vmatprep.subr.bf16.mxu0 0
        %3484 = vmatpush1.bf16.msra.mxu0 0
        %3485 = vmatprep.subr.bf16.mxu0 0
        %3486 = vmatpush1.bf16.msra.mxu0 0
        %3487 = vmatprep.subr.bf16.mxu0 0
        %3488 = vmatpush1.bf16.msra.mxu0 0
        %3489 = vmatprep.subr.bf16.mxu0 0
        %3490 = vmatpush1.bf16.msra.mxu0 0
        %3491 = vmatprep.subr.bf16.mxu0 0
        %3492 = vmatpush1.bf16.msra.mxu0 0
        %3493 = vmatprep.subr.bf16.mxu0 0
        %3494 = vmatpush1.bf16.msra.mxu0 0
        %3495 = vmatprep.subr.bf16.mxu0 0
        %3496 = vmatpush1.bf16.msra.mxu0 0
        %3497 = vmatprep.subr.bf16.mxu0 0
        %3498 = vmatpush1.bf16.msra.mxu0 0
        %3499 = vmatprep.subr.bf16.mxu0 0
        %3500 = vmatpush1.bf16.msra.mxu0 0
        %3501 = vmatprep.subr.bf16.mxu0 0
        %3502 = vmatpush1.bf16.msra.mxu0 0
        %3503 = vmatprep.subr.bf16.mxu0 0
        %3504 = vmatpush1.bf16.msra.mxu0 0
        %3505 = vmatprep.subr.bf16.mxu0 0
        %3506 = vmatpush1.bf16.msra.mxu0 0
        %3507 = vmatprep.subr.bf16.mxu0 0
        %3508 = vmatpush1.bf16.msra.mxu0 0
        %3509 = vmatprep.mubr.bf16.mxu0 0
        %3510 = vmatmul.mubr.bf16.gmra.mrb[0].mxu0 %v3472
        %v3511 = vpop.f32.mrb[0].mxu0
        %v3512 = vadd.f32 0.0, %v3511
        %v3513 = vpop.f32.mrb[0].mxu0
        %v3514 = vpop.f32.mrb[0].mxu0
        %v3515 = vpop.f32.mrb[0].mxu0
        %3516 = vdwg.mxu0
        %v3517 = vsel %vm920, %v3374, 0.0
        %v3518 = vsel %vm920, %v3420, 0.0
        %v3519 = vadd.f32 %v3517, %v3518
        %v3520 = vsel %vm920, %v3466, 0.0
        %v3521 = vadd.f32 %v3519, %v3520
        %v3522 = vsel %vm920, %v3512, 0.0
        %v3523 = vadd.f32 %v3521, %v3522
        %v3524 = vadd.f32 %v2206, %v3523
        %v3525 = vld [vmem:[%s816] sm:$0x1]
        %v3526 = vld [vmem:[%s819] sm:$0x1]
        %v3527 = vsel %vm920, %v3524, 0.0
        %3528 = vadd.xlane.f32.xlu0 %v3527
        %v3529 = vpop.xlane.xlu0 %3528
        %v3530 = vmul.f32 %v3529, %v2175
        %v3531 = vsub.f32 %v3524, %v3530
        %v3532 = vmul.f32 %v3531, %v3531
        %v3533 = vsel %vm920, %v3532, 0.0
        %3534 = vadd.xlane.f32.xlu0 %v3533
        %v3535 = vpop.xlane.xlu0 %3534
        %v3536 = vmul.f32 %v3535, 0.032258064
        %v3537 = vrsqrt.pop %v3536
        %v3538 = vmul.f32 %v3536, %v3537
        %vm3539 = vcmp.eq.f32.partialorder %v3536, inf
        %v3540 = vsel %vm3539, %v3536, %v3538
        %vm3541 = vcmp.eq.f32.partialorder %v3536, 0.0
        %v3542 = vand.u32 %v3536, 2147483648
        %v3543 = vsel %vm3541, %v3542, %v3540
        %v3544 = vadd.f32 %v3543, 1e-06
        %v3545 = vrcp.pop %v3544
        %v3547 = vlaneseq
        %v3548 = vshrl.u32 %v3547, 7
        %v3549 = vsub.s32 0, %v3548
        %v3550 = vrot.slane %v3525, %v3549
        %v3552 = vmul.f32 %v3550, %v3531
        %v3553 = vmul.f32 %v3552, %v3545
        %v3555 = vlaneseq
        %v3556 = vshrl.u32 %v3555, 7
        %v3557 = vsub.s32 0, %v3556
        %v3558 = vrot.slane %v3526, %v3557
        %v3560 = vadd.f32 %v3553, %v3558
        %v3561 = vpack.c.bf16 %v3560, %v3560
        %v3562 = vld [vmem:[%s824] sm:$0xf]
        %v3563 = vld [vmem:[%s824 + $0x4] sm:$0xf]
        %v3564 = vld [vmem:[%s824 + $0x8] sm:$0xf]
        %v3565 = vld [vmem:[%s824 + $0xc] sm:$0xf]
        %v3566 = vld [vmem:[%s827] sm:$0x1]
        %v3568 = vlaneseq
        %v3569 = vshrl.u32 %v3568, 7
        %v3570 = vsub.s32 0, %v3569
        %v3571 = vrot.slane %v3566, %v3570
        %v3577 = vunpack.c.l.b16 %v3562
        %v3578 = vunpack.c.l.b16 %v3563
        %v3579 = vunpack.c.l.b16 %v3564
        %v3580 = vunpack.c.l.b16 %v3565
        %v3581 = vpack.c.b16 %v3578, %v3577
        %v3582 = vpack.c.b16 %v3580, %v3579
        %v3586 = vsel %vm920, %v3561, 0
        %3588 = vmatprep.subr.bf16.mxu0 0
        %3589 = vmatpush1.bf16.msra.mxu0 %v3581
        %3590 = vmatprep.subr.bf16.mxu0 0
        %3591 = vmatpush1.bf16.msra.mxu0 %v3582
        %3592 = vmatprep.subr.bf16.mxu0 0
        %3593 = vmatpush1.bf16.msra.mxu0 0
        %3594 = vmatprep.subr.bf16.mxu0 0
        %3595 = vmatpush1.bf16.msra.mxu0 0
        %3596 = vmatprep.subr.bf16.mxu0 0
        %3597 = vmatpush1.bf16.msra.mxu0 0
        %3598 = vmatprep.subr.bf16.mxu0 0
        %3599 = vmatpush1.bf16.msra.mxu0 0
        %3600 = vmatprep.subr.bf16.mxu0 0
        %3601 = vmatpush1.bf16.msra.mxu0 0
        %3602 = vmatprep.subr.bf16.mxu0 0
        %3603 = vmatpush1.bf16.msra.mxu0 0
        %3604 = vmatprep.subr.bf16.mxu0 0
        %3605 = vmatpush1.bf16.msra.mxu0 0
        %3606 = vmatprep.subr.bf16.mxu0 0
        %3607 = vmatpush1.bf16.msra.mxu0 0
        %3608 = vmatprep.subr.bf16.mxu0 0
        %3609 = vmatpush1.bf16.msra.mxu0 0
        %3610 = vmatprep.subr.bf16.mxu0 0
        %3611 = vmatpush1.bf16.msra.mxu0 0
        %3612 = vmatprep.subr.bf16.mxu0 0
        %3613 = vmatpush1.bf16.msra.mxu0 0
        %3614 = vmatprep.subr.bf16.mxu0 0
        %3615 = vmatpush1.bf16.msra.mxu0 0
        %3616 = vmatprep.subr.bf16.mxu0 0
        %3617 = vmatpush1.bf16.msra.mxu0 0
        %3618 = vmatprep.subr.bf16.mxu0 0
        %3619 = vmatpush1.bf16.msra.mxu0 0
        %3620 = vmatprep.mubr.bf16.mxu0 0
        %3621 = vmatmul.mubr.bf16.gmra.mrb[0].mxu0 %v3586
        %v3622 = vpop.f32.mrb[0].mxu0
        %v3623 = vadd.f32 %v3571, %v3622
        %v3624 = vpop.f32.mrb[0].mxu0
        %v3625 = vpop.f32.mrb[0].mxu0
        %v3626 = vpop.f32.mrb[0].mxu0
        %3627 = vdwg.mxu0
        %v3628 = vmax.f32 %v3623, 0.0
        %v3629 = vpack.c.bf16 %v3628, %v3628
        %v3630 = vld [vmem:[%s832] sm:$0xf]
        %v3631 = vld [vmem:[%s832 + $0x4] sm:$0xf]
        %v3632 = vld [vmem:[%s832 + $0x8] sm:$0xf]
        %v3633 = vld [vmem:[%s832 + $0xc] sm:$0xf]
        %v3634 = vld [vmem:[%s832 + $0x10] sm:$0xf]
        %v3635 = vld [vmem:[%s832 + $0x14] sm:$0xf]
        %v3636 = vld [vmem:[%s832 + $0x18] sm:$0xf]
        %v3637 = vld [vmem:[%s832 + $0x1c] sm:$0xf]
        %v3638 = vld [vmem:[%s835] sm:$0x1]
        %v3640 = vlaneseq
        %v3641 = vshrl.u32 %v3640, 7
        %v3642 = vsub.s32 0, %v3641
        %v3643 = vrot.slane %v3638, %v3642
        %v3653 = vunpack.c.l.b16 %v3630
        %v3654 = vunpack.c.l.b16 %v3631
        %v3655 = vunpack.c.l.b16 %v3632
        %v3656 = vunpack.c.l.b16 %v3633
        %v3657 = vunpack.c.l.b16 %v3634
        %v3658 = vunpack.c.l.b16 %v3635
        %v3659 = vunpack.c.l.b16 %v3636
        %v3660 = vunpack.c.l.b16 %v3637
        %v3661 = vpack.c.b16 %v3654, %v3653
        %v3662 = vpack.c.b16 %v3656, %v3655
        %v3663 = vpack.c.b16 %v3658, %v3657
        %v3664 = vpack.c.b16 %v3660, %v3659
        %vm3669 = vcmask 523264
        %v3671 = vsel %vm3669, %v3629, 0
        %3673 = vmatprep.subr.bf16.mxu0 0
        %3674 = vmatpush1.bf16.msra.mxu0 %v3661
        %3675 = vmatprep.subr.bf16.mxu0 0
        %3676 = vmatpush1.bf16.msra.mxu0 %v3662
        %3677 = vmatprep.subr.bf16.mxu0 0
        %3678 = vmatpush1.bf16.msra.mxu0 %v3663
        %3679 = vmatprep.subr.bf16.mxu0 0
        %3680 = vmatpush1.bf16.msra.mxu0 %v3664
        %3681 = vmatprep.subr.bf16.mxu0 0
        %3682 = vmatpush1.bf16.msra.mxu0 0
        %3683 = vmatprep.subr.bf16.mxu0 0
        %3684 = vmatpush1.bf16.msra.mxu0 0
        %3685 = vmatprep.subr.bf16.mxu0 0
        %3686 = vmatpush1.bf16.msra.mxu0 0
        %3687 = vmatprep.subr.bf16.mxu0 0
        %3688 = vmatpush1.bf16.msra.mxu0 0
        %3689 = vmatprep.subr.bf16.mxu0 0
        %3690 = vmatpush1.bf16.msra.mxu0 0
        %3691 = vmatprep.subr.bf16.mxu0 0
        %3692 = vmatpush1.bf16.msra.mxu0 0
        %3693 = vmatprep.subr.bf16.mxu0 0
        %3694 = vmatpush1.bf16.msra.mxu0 0
        %3695 = vmatprep.subr.bf16.mxu0 0
        %3696 = vmatpush1.bf16.msra.mxu0 0
        %3697 = vmatprep.subr.bf16.mxu0 0
        %3698 = vmatpush1.bf16.msra.mxu0 0
        %3699 = vmatprep.subr.bf16.mxu0 0
        %3700 = vmatpush1.bf16.msra.mxu0 0
        %3701 = vmatprep.subr.bf16.mxu0 0
        %3702 = vmatpush1.bf16.msra.mxu0 0
        %3703 = vmatprep.subr.bf16.mxu0 0
        %3704 = vmatpush1.bf16.msra.mxu0 0
        %3705 = vmatprep.mubr.bf16.mxu0 0
        %3706 = vmatmul.mubr.bf16.gmra.mrb[0].mxu0 %v3671
        %v3707 = vpop.f32.mrb[0].mxu0
        %v3708 = vadd.f32 %v3643, %v3707
        %v3709 = vpop.f32.mrb[0].mxu0
        %v3710 = vpop.f32.mrb[0].mxu0
        %v3711 = vpop.f32.mrb[0].mxu0
        %3712 = vdwg.mxu0
        %v3713 = vadd.f32 %v3560, %v3708
        %v3714 = vld [vmem:[%s838] sm:$0x1]
        %v3715 = vld [vmem:[%s841] sm:$0x1]
        %v3716 = vsel %vm920, %v3713, 0.0
        %3717 = vadd.xlane.f32.xlu0 %v3716
        %v3718 = vpop.xlane.xlu0 %3717
        %v3719 = vmul.f32 %v3718, %v2175
        %v3720 = vsub.f32 %v3713, %v3719
        %v3721 = vmul.f32 %v3720, %v3720
        %v3722 = vsel %vm920, %v3721, 0.0
        %3723 = vadd.xlane.f32.xlu0 %v3722
        %v3724 = vpop.xlane.xlu0 %3723
        %v3725 = vmul.f32 %v3724, 0.032258064
        %v3726 = vrsqrt.pop %v3725
        %v3727 = vmul.f32 %v3725, %v3726
        %vm3728 = vcmp.eq.f32.partialorder %v3725, inf
        %v3729 = vsel %vm3728, %v3725, %v3727
        %vm3730 = vcmp.eq.f32.partialorder %v3725, 0.0
        %v3731 = vand.u32 %v3725, 2147483648
        %v3732 = vsel %vm3730, %v3731, %v3729
        %v3733 = vadd.f32 %v3732, 1e-06
        %v3734 = vrcp.pop %v3733
        %v3736 = vlaneseq
        %v3737 = vshrl.u32 %v3736, 7
        %v3738 = vsub.s32 0, %v3737
        %v3739 = vrot.slane %v3714, %v3738
        %v3741 = vmul.f32 %v3739, %v3720
        %v3742 = vmul.f32 %v3741, %v3734
        %v3744 = vlaneseq
        %v3745 = vshrl.u32 %v3744, 7
        %v3746 = vsub.s32 0, %v3745
        %v3747 = vrot.slane %v3715, %v3746
        %v3749 = vadd.f32 %v3742, %v3747
        %3750 = vst.msk [vmem:[#allocation2] sm:$0xff] %vm920, %v3749
        %p3751 = scmp.eq.s32.totalorder %s36, 1
        // Predicated region
        $region93: #{decoder_forward.1} parent=87 // pred_check
          %p3752 = pneg %p3751
        $region94: #{decoder_forward.1} parent=87 // pred_check_branch
          %3754 = sbr.rel (%p3752) target = $region96
        $region95: #{decoder_forward.1} parent=87 // pred_region
          %3755 = vst.msk [vmem:[%s769] sm:$0xff] %vm920, %v3749
        $region96: #{decoder_forward.1} parent=87 // pred_fallthru
          _
        %s3756 = sand.u32 %s495, 1
        %s3757 = scalar_lea.sflag [#allocation4], %s3756
        %s3758 = sand.u32 %s495, 1
        %s3759 = smul.addr %s3758, 8
        %s3760 = scalar_lea.vmem [#allocation3], %s3759
        // Predicated region
        $region97: #{decoder_forward.1} parent=87 // pred_check
          %p3761 = pneg %p505
        $region98: #{decoder_forward.1} parent=87 // pred_check_branch
          %3763 = sbr.rel (%p3761) target = $region100
        $region99: #{decoder_forward.1} parent=87 // pred_region
          %s3765 = ssub.s32 128, 128
          %3766 = vsyncadd %s3757, %s3765
          %s3767 = smul.addr %s35, 128
          %s3768 = scalar_lea.hbm %s17, %s3767
          %s3770 = sshll.u32 %s3760, 4
          %s3771 = int_to_ptr.vmem [resolvable:$true] %s3770
          %3773 = dma.vmem_to_hbm [thread:$0]  %s3771, 128, %s3768, %s3757
        $region100: #{decoder_forward.1} parent=87 // pred_fallthru
          _
      $region88: #{decoder_forward.1} parent=5 // pred_fallthru
        _
      %p3774 = scmp.le.s32.totalorder 2, %s26
      // Predicated region
      $region101: #{decoder_forward.1} parent=5 // pred_check
        %p3775 = pneg %p3774
      $region102: #{decoder_forward.1} parent=5 // pred_check_branch
        %3777 = sbr.rel (%p3775) target = $region104
      $region103: #{decoder_forward.1} parent=5 // pred_region
        %s3778 = ssub.s32 %s26, 2
        // Predicated region
        $region105: #{decoder_forward.1} parent=103 // pred_check
          %p3779 = pneg %p511
        $region106: #{decoder_forward.1} parent=103 // pred_check_branch
          %3781 = sbr.rel (%p3779) target = $region108
        $region107: #{decoder_forward.1} parent=103 // pred_region
          %s3782 = sand.u32 %s496, 1
          %s3783 = scalar_lea.sflag [#allocation4], %s3782
          %s3784 = sand.u32 %s496, 1
          %s3785 = smul.addr %s3784, 8
          %s3786 = scalar_lea.vmem [#allocation3], %s3785
          %3787 = dma.done %s3783, 128
        $region108: #{decoder_forward.1} parent=103 // pred_fallthru
          _
      $region104: #{decoder_forward.1} parent=5 // pred_fallthru
        _
    $region6: #{decoder_forward.1} parent=1 // loop_footer
      %s30 = sadd.s32 1, %s26
    $region7: #{decoder_forward.1} parent=1 // loop_footer_branch
      %25 = sbr.rel target = $region3
    $region8: #{decoder_forward.1} parent=1 // loop_exit
      _
    %3788 = vsyncpa [#allocation4], 1
    %s3789 = scalar_lea.sflag [#allocation4], 1
    %3790 = vsyncpa %s3789, 1

</llo_original>
